<compile_context>
chip_gen: v5e
topology: v5e:2x2
jax: 0.10.0
libtpu: 0.0.40
codegen_flags: <defaults>
</compile_context>

<pallas_src>
import functools

import jax
import jax.numpy as jnp
from jax import lax
from jax.experimental import pallas as pl
from jax.experimental.pallas import tpu as pltpu

EPS_BN = 1e-5
EPS_LN = 1e-5
NEG_SLOPE = 0.01  # nn.LeakyReLU default

CONV_KS = (7, 5, 3, 1)
CONV_CH = (64, 128, 256, 512)


# --------------------------------------------------------------------------
# Stage 1: features (Conv1d + BN + ReLU stack, AdaptiveAvgPool1d(1))
# --------------------------------------------------------------------------
def _conv_taps(h, w_ref, s_ref, k, l_out, *, ncw):
    """Per-tap accumulated matmuls: acc(f32) += lhs_tap(bf16) @ W_tap(bf16).

    h:     (TB, Cin, L_in) bf16 if ncw else (TB, L_in, Cin) bf16
    w_ref: (K, Cin, Cout)  bf16 (BN scale folded in)
    s_ref: (1, Cout)       f32  (conv bias + BN shift folded)
    """
    acc = None
    for kk in range(k):
        if ncw:
            part = jnp.einsum('bcl,cd->bld', h[:, :, kk:kk + l_out], w_ref[kk],
                              preferred_element_type=jnp.float32)
        else:
            part = jnp.einsum('blc,cd->bld', h[:, kk:kk + l_out, :], w_ref[kk],
                              preferred_element_type=jnp.float32)
        acc = part if acc is None else acc + part
    return jnp.maximum(acc + s_ref[...], 0.0)  # BN shift + ReLU in f32


def features_kernel(x_ref,
                    w1_ref, s1_ref, w2_ref, s2_ref,
                    w3_ref, s3_ref, w4_ref, s4_ref,
                    pooled_ref, *, seq_len):
    x = x_ref[...].astype(jnp.bfloat16)                       # (TB, Cin, L) native NCW
    l1 = seq_len - CONV_KS[0] + 1
    l2 = l1 - CONV_KS[1] + 1
    l3 = l2 - CONV_KS[2] + 1
    l4 = l3 - CONV_KS[3] + 1

    h = _conv_taps(x, w1_ref, s1_ref, CONV_KS[0], l1, ncw=True)     # (TB, l1, 64) f32
    h = h.astype(jnp.bfloat16)
    h = _conv_taps(h, w2_ref, s2_ref, CONV_KS[1], l2, ncw=False)    # (TB, l2, 128)
    h = h.astype(jnp.bfloat16)
    h = _conv_taps(h, w3_ref, s3_ref, CONV_KS[2], l3, ncw=False)    # (TB, l3, 256)
    h = h.astype(jnp.bfloat16)
    h = _conv_taps(h, w4_ref, s4_ref, CONV_KS[3], l4, ncw=False)    # (TB, l4, 512) f32

    # AdaptiveAvgPool1d(1) + Flatten: mean over length -> lane-dense (TB, 512).
    pooled_ref[0] = jnp.mean(h, axis=1)


# --------------------------------------------------------------------------
# Stage 2: classifier (batch-tiled)
# --------------------------------------------------------------------------
def _layernorm(h, gamma, beta):
    mu = jnp.mean(h, axis=-1, keepdims=True)
    var = jnp.mean(jnp.square(h - mu), axis=-1, keepdims=True)
    return (h - mu) * lax.rsqrt(var + EPS_LN) * gamma + beta


def _leaky_relu(h):
    return jnp.where(h > 0, h, NEG_SLOPE * h)


def classifier_kernel(p_ref,
                      wl1_ref, bl1_ref, g1_ref, be1_ref,
                      wl2_ref, bl2_ref, g2_ref, be2_ref,
                      wl3_ref, bl3_ref, out_ref):
    p = p_ref[...].astype(jnp.bfloat16)                        # (MB, 512)
    h = jnp.dot(p, wl1_ref[...], preferred_element_type=jnp.float32) + bl1_ref[...]
    h = _leaky_relu(_layernorm(h, g1_ref[...], be1_ref[...]))
    # Dropout(0.5): identity in eval mode.
    h = jnp.dot(h.astype(jnp.bfloat16), wl2_ref[...],
                preferred_element_type=jnp.float32) + bl2_ref[...]
    h = _leaky_relu(_layernorm(h, g2_ref[...], be2_ref[...]))
    # Dropout(0.3): identity in eval mode.
    out_ref[...] = (jnp.dot(h.astype(jnp.bfloat16), wl3_ref[...],
                            preferred_element_type=jnp.float32)
                    + bl3_ref[...]).astype(out_ref.dtype)


# --------------------------------------------------------------------------
# VMEM-budgeted, MXU-height-aware batch-block selection
# --------------------------------------------------------------------------
def _physical_vmem_bytes():
    try:
        info = pltpu.get_tpu_info()
        v = getattr(info, "vmem_capacity_bytes", None)
        if v:
            return int(v)
    except Exception:
        pass
    return 64 << 20  # conservative default (v7x per-TC VMEM)


def _features_vmem_estimate(tb, cin, L):
    """Rough per-grid-step live bytes for the features kernel."""
    l1 = L - 6
    l2, l3 = l1 - 4, l1 - 6
    l4 = l3
    inp = 2 * tb * cin * L * 4                                   # f32 input, double-buffered
    acts = tb * (l1 * 64 * 6 + l2 * 128 * 6 + l3 * 256 * 6       # bf16 act + f32 acc
                 + l4 * 512 * 8)                                 # f32 act + f32 acc
    w = 2 * 2 * (7 * cin * 64 + 5 * 64 * 128 + 3 * 128 * 256 + 256 * 512)  # bf16, x2 bufs
    out = 2 * tb * 512 * 4
    return inp + acts + w + out


def _pick_tb(batch, cin, L, budget_bytes):
    """Largest TB under the VMEM budget, preferring MXU-height M>=256 and minimal padding."""
    l1 = L - (CONV_KS[0] - 1)
    tb_cap = 1
    for tb in range(2, batch + 1):
        if _features_vmem_estimate(tb, cin, L) > budget_bytes or tb * l1 > 2048:
            break
        tb_cap = tb
    best_tb, best_key = 1, None
    for tb in range(1, tb_cap + 1):
        g = -(-batch // tb)
        pad = g * tb - batch
        m_def = max(0, 256 - tb * l1)        # MXU-height deficit
        key = (m_def, pad, -tb)
        if best_key is None or key < best_key:
            best_key, best_tb = key, tb
    return best_tb


# --------------------------------------------------------------------------
# Wrapper
# --------------------------------------------------------------------------
def deep_omniscale_forward(x_ncl, params):
    """x_ncl: (B, C_in, L) float32, matching PyTorch Conv1d NCW input."""
    B, Cin, L = x_ncl.shape
    assert L >= sum(k - 1 for k in CONV_KS) + 1, "sequence too short for valid convs"
    NC = params["wl3"].shape[1]

    phys = _physical_vmem_bytes()
    budget = phys // 2
    TB = _pick_tb(B, Cin, L, budget)
    G = pl.cdiv(B, TB)
    B_pad = G * TB
    if B_pad != B:
        x_ncl = jnp.pad(x_ncl, ((0, B_pad - B), (0, 0), (0, 0)))

    vmem_limit = int(max(16 << 20,
                         min(phys - (8 << 20),
                             max(2 * _features_vmem_estimate(TB, Cin, L), 32 << 20))))

    # TODO(synk): for very long sequences (TB=1 still over budget), tile the conv
    # along L with a (K-1) halo instead of relying on a larger vmem_limit_bytes.
    # TODO(synk): weights/shifts are grid-invariant; pipeline_mode=pl.Buffered(1)
    # would single-buffer them (~0.7 MB saved) — kept default buffering for portability.

    def full_spec(a):
        nd = a.ndim
        return pl.BlockSpec(a.shape, lambda g, _nd=nd: (0,) * _nd)

    conv_names = ["w1", "s1", "w2", "s2", "w3", "s3", "w4", "s4"]
    pooled = pl.pallas_call(
        functools.partial(features_kernel, seq_len=L),
        out_shape=jax.ShapeDtypeStruct((G, TB, 512), jnp.float32),
        grid=(G,),
        in_specs=[pl.BlockSpec((TB, Cin, L), lambda g: (g, 0, 0))]
                 + [full_spec(params[n]) for n in conv_names],
        out_specs=pl.BlockSpec((1, TB, 512), lambda g: (g, 0, 0)),
        compiler_params=pltpu.CompilerParams(
            dimension_semantics=("parallel",),
            vmem_limit_bytes=vmem_limit),
    )(x_ncl, *[params[n] for n in conv_names])

    pooled = pooled.reshape(B_pad, 512)

    # Classifier: tile over batch so large B bounds VMEM and shares across TCs.
    MB = B_pad if B_pad <= 256 else 256
    G2 = pl.cdiv(B_pad, MB)
    B_pad2 = G2 * MB
    if B_pad2 != B_pad:
        pooled = jnp.pad(pooled, ((0, B_pad2 - B_pad), (0, 0)))

    cls_names = ["wl1", "bl1", "g1", "be1",
                 "wl2", "bl2", "g2", "be2", "wl3", "bl3"]
    out = pl.pallas_call(
        classifier_kernel,
        out_shape=jax.ShapeDtypeStruct((B_pad2, NC), jnp.float32),
        grid=(G2,),
        in_specs=[pl.BlockSpec((MB, 512), lambda m: (m, 0))]
                 + [full_spec(params[n]) for n in cls_names],
        out_specs=pl.BlockSpec((MB, NC), lambda m: (m, 0)),
        compiler_params=pltpu.CompilerParams(dimension_semantics=("parallel",)),
    )(pooled, *[params[n] for n in cls_names])

    return out[:B]


# --------------------------------------------------------------------------
# Synthetic parameters (PyTorch layout) and kernel-side preparation
# --------------------------------------------------------------------------
def init_raw_params(key, input_channels, num_classes):
    keys = iter(jax.random.split(key, 64))

    def nrm(shape, s=0.05):
        return jax.random.normal(next(keys), shape, jnp.float32) * s

    raw = {}
    cin = input_channels
    for i, (cout, k) in enumerate(zip(CONV_CH, CONV_KS), start=1):
        raw[f"conv{i}_w"] = nrm((cout, cin, k))      # PyTorch Conv1d weight layout
        raw[f"conv{i}_b"] = nrm((cout,), 0.02)
        raw[f"bn{i}_gamma"] = 1.0 + nrm((cout,), 0.1)
        raw[f"bn{i}_beta"] = nrm((cout,), 0.1)
        raw[f"bn{i}_mean"] = nrm((cout,), 0.1)
        raw[f"bn{i}_var"] = 1.0 + jnp.abs(nrm((cout,), 0.1))
        cin = cout
    for i, (din, dout) in enumerate([(512, 64), (64, 32), (32, num_classes)], 1):
        raw[f"fc{i}_w"] = nrm((dout, din))           # PyTorch Linear weight layout
        raw[f"fc{i}_b"] = nrm((dout,), 0.02)
    for i, d in enumerate((64, 32), start=1):
        raw[f"ln{i}_gamma"] = 1.0 + nrm((d,), 0.1)
        raw[f"ln{i}_beta"] = nrm((d,), 0.1)
    return raw


def prepare_params(raw):
    """Fold BN (eval) into the conv weights (scale) + an additive shift; keep
    weights per-tap (K, Cin, Cout) bf16 for the accumulated-tap matmuls."""
    p = {}
    for i in range(1, 5):
        w = raw[f"conv{i}_w"]                        # (Cout, Cin, K)
        scale = raw[f"bn{i}_gamma"] / jnp.sqrt(raw[f"bn{i}_var"] + EPS_BN)
        shift = (raw[f"conv{i}_b"] - raw[f"bn{i}_mean"]) * scale + raw[f"bn{i}_beta"]
        w_taps = jnp.transpose(w, (2, 1, 0)) * scale[None, None, :]   # (K, Cin, Cout)
        p[f"w{i}"] = w_taps.astype(jnp.bfloat16)
        p[f"s{i}"] = shift[None, :]                  # (1, Cout) f32
    for i in (1, 2, 3):
        p[f"wl{i}"] = jnp.transpose(raw[f"fc{i}_w"]).astype(jnp.bfloat16)  # (Din, Dout)
        p[f"bl{i}"] = raw[f"fc{i}_b"][None, :]
    for i in (1, 2):
        p[f"g{i}"] = raw[f"ln{i}_gamma"][None, :]
        p[f"be{i}"] = raw[f"ln{i}_beta"][None, :]
    return p


# --------------------------------------------------------------------------
# Pure-JAX f32 reference (for tolerance check)
# --------------------------------------------------------------------------
def _reference_forward(x, raw):
    h = jnp.transpose(x, (0, 2, 1))                  # (B, L, Cin)
    for i, k in enumerate(CONV_KS, start=1):
        w = raw[f"conv{i}_w"]                        # (Cout, Cin, K)
        l_out = h.shape[1] - k + 1
        conv = sum(jnp.einsum('blc,oc->blo', h[:, kk:kk + l_out, :], w[:, :, kk])
                   for kk in range(k)) + raw[f"conv{i}_b"]
        scale = raw[f"bn{i}_gamma"] / jnp.sqrt(raw[f"bn{i}_var"] + EPS_BN)
        h = jnp.maximum((conv - raw[f"bn{i}_mean"]) * scale + raw[f"bn{i}_beta"], 0.0)
    h = jnp.mean(h, axis=1)                          # (B, 512)
    h = h @ raw["fc1_w"].T + raw["fc1_b"]
    h = _leaky_relu(_layernorm(h, raw["ln1_gamma"], raw["ln1_beta"]))
    h = h @ raw["fc2_w"].T + raw["fc2_b"]
    h = _leaky_relu(_layernorm(h, raw["ln2_gamma"], raw["ln2_beta"]))
    return h @ raw["fc3_w"].T + raw["fc3_b"]


if __name__ == "__main__":
    B, Cin, L, NC = 2, 8, 32, 1  # small shapes; module default input_channels=132 also works
    key = jax.random.PRNGKey(0)
    kx, kp = jax.random.split(key)

    x = jax.random.normal(kx, (B, Cin, L), jnp.float32)   # PyTorch-style (B, C, L)
    raw = init_raw_params(kp, Cin, NC)
    params = prepare_params(raw)

    out = deep_omniscale_forward(x, params)
    out = jax.block_until_ready(out)
    assert out.shape == (B, NC), out.shape
    assert bool(jnp.all(jnp.isfinite(out)))

    ref = _reference_forward(x, raw)
    assert bool(jnp.all(jnp.abs(out - ref) <= 0.05 + 0.05 * jnp.abs(ref))), \
        (out, ref)  # bf16-in / f32-accumulate GEMMs vs f32 reference

    print("KERNEL_OK")
</pallas_src>

<mosaic_0001>
module attributes {stable_mosaic.version = 11 : i64} {
  func.func @features_kernel(%arg0: i32, %arg1: memref<2x8x32xf32, #tpu.memory_space<vmem>>, %arg2: memref<7x8x64xbf16, #tpu.memory_space<vmem>>, %arg3: memref<1x64xf32, #tpu.memory_space<vmem>>, %arg4: memref<5x64x128xbf16, #tpu.memory_space<vmem>>, %arg5: memref<1x128xf32, #tpu.memory_space<vmem>>, %arg6: memref<3x128x256xbf16, #tpu.memory_space<vmem>>, %arg7: memref<1x256xf32, #tpu.memory_space<vmem>>, %arg8: memref<1x256x512xbf16, #tpu.memory_space<vmem>>, %arg9: memref<1x512xf32, #tpu.memory_space<vmem>>, %arg10: memref<1x2x512xf32, #tpu.memory_space<vmem>>) attributes {dimension_semantics = [#tpu.dimension_semantics<parallel>], iteration_bounds = array<i64: 1>, scalar_prefetch = 0 : i64, scratch_operands = 0 : i64, tpu.core_type = #tpu.core_type<tc>, window_params = [{transform_indices = @transform_0, window_bounds = array<i64: 2, 8, 32>}, {pipeline_mode = #tpu.pipeline_mode<synchronous>, transform_indices = @transform_1, window_bounds = array<i64: 7, 8, 64>}, {pipeline_mode = #tpu.pipeline_mode<synchronous>, transform_indices = @transform_2, window_bounds = array<i64: 1, 64>}, {pipeline_mode = #tpu.pipeline_mode<synchronous>, transform_indices = @transform_3, window_bounds = array<i64: 5, 64, 128>}, {pipeline_mode = #tpu.pipeline_mode<synchronous>, transform_indices = @transform_4, window_bounds = array<i64: 1, 128>}, {pipeline_mode = #tpu.pipeline_mode<synchronous>, transform_indices = @transform_5, window_bounds = array<i64: 3, 128, 256>}, {pipeline_mode = #tpu.pipeline_mode<synchronous>, transform_indices = @transform_6, window_bounds = array<i64: 1, 256>}, {pipeline_mode = #tpu.pipeline_mode<synchronous>, transform_indices = @transform_7, window_bounds = array<i64: 1, 256, 512>}, {pipeline_mode = #tpu.pipeline_mode<synchronous>, transform_indices = @transform_8, window_bounds = array<i64: 1, 512>}, {transform_indices = @transform_9, window_bounds = array<i64: 1, 2, 512>}]} {
    %c0 = arith.constant 0 : index
    %c0_0 = arith.constant 0 : index
    %c0_1 = arith.constant 0 : index
    %0 = vector.load %arg1[%c0, %c0_0, %c0_1] : memref<2x8x32xf32, #tpu.memory_space<vmem>>, vector<2x8x32xf32>
    %1 = arith.truncf %0 : vector<2x8x32xf32> to vector<2x8x32xbf16>
    %2 = vector.extract_strided_slice %1 {offsets = [0, 0, 0], sizes = [2, 8, 26], strides = [1, 1, 1]} : vector<2x8x32xbf16> to vector<2x8x26xbf16>
    %c0_2 = arith.constant 0 : index
    %c0_3 = arith.constant 0 : index
    %c0_4 = arith.constant 0 : index
    %3 = vector.load %arg2[%c0_2, %c0_3, %c0_4] : memref<7x8x64xbf16, #tpu.memory_space<vmem>>, vector<1x8x64xbf16>
    %4 = vector.shape_cast %3 : vector<1x8x64xbf16> to vector<8x64xbf16>
    "tpu.trace_start"() <{level = 10 : i32, message = "bcl,cd->bld"}> : () -> ()
    %cst = arith.constant dense<0.000000e+00> : vector<2x26x64xf32>
    %5 = tpu.matmul %2, %4, %cst {dimension_numbers = #tpu.dot_dimension_numbers<[1], [0], [0, 2], [1], [0, 0, 0, 2, 1, 1], [], []>} : vector<2x8x26xbf16>, vector<8x64xbf16>, vector<2x26x64xf32> -> vector<2x26x64xf32>
    "tpu.trace_stop"() : () -> ()
    %6 = vector.extract_strided_slice %1 {offsets = [0, 0, 1], sizes = [2, 8, 26], strides = [1, 1, 1]} : vector<2x8x32xbf16> to vector<2x8x26xbf16>
    %c1 = arith.constant 1 : index
    %c0_5 = arith.constant 0 : index
    %c0_6 = arith.constant 0 : index
    %7 = vector.load %arg2[%c1, %c0_5, %c0_6] : memref<7x8x64xbf16, #tpu.memory_space<vmem>>, vector<1x8x64xbf16>
    %8 = vector.shape_cast %7 : vector<1x8x64xbf16> to vector<8x64xbf16>
    "tpu.trace_start"() <{level = 10 : i32, message = "bcl,cd->bld"}> : () -> ()
    %cst_7 = arith.constant dense<0.000000e+00> : vector<2x26x64xf32>
    %9 = tpu.matmul %6, %8, %cst_7 {dimension_numbers = #tpu.dot_dimension_numbers<[1], [0], [0, 2], [1], [0, 0, 0, 2, 1, 1], [], []>} : vector<2x8x26xbf16>, vector<8x64xbf16>, vector<2x26x64xf32> -> vector<2x26x64xf32>
    "tpu.trace_stop"() : () -> ()
    %10 = arith.addf %5, %9 : vector<2x26x64xf32>
    %11 = vector.extract_strided_slice %1 {offsets = [0, 0, 2], sizes = [2, 8, 26], strides = [1, 1, 1]} : vector<2x8x32xbf16> to vector<2x8x26xbf16>
    %c2 = arith.constant 2 : index
    %c0_8 = arith.constant 0 : index
    %c0_9 = arith.constant 0 : index
    %12 = vector.load %arg2[%c2, %c0_8, %c0_9] : memref<7x8x64xbf16, #tpu.memory_space<vmem>>, vector<1x8x64xbf16>
    %13 = vector.shape_cast %12 : vector<1x8x64xbf16> to vector<8x64xbf16>
    "tpu.trace_start"() <{level = 10 : i32, message = "bcl,cd->bld"}> : () -> ()
    %cst_10 = arith.constant dense<0.000000e+00> : vector<2x26x64xf32>
    %14 = tpu.matmul %11, %13, %cst_10 {dimension_numbers = #tpu.dot_dimension_numbers<[1], [0], [0, 2], [1], [0, 0, 0, 2, 1, 1], [], []>} : vector<2x8x26xbf16>, vector<8x64xbf16>, vector<2x26x64xf32> -> vector<2x26x64xf32>
    "tpu.trace_stop"() : () -> ()
    %15 = arith.addf %10, %14 : vector<2x26x64xf32>
    %16 = vector.extract_strided_slice %1 {offsets = [0, 0, 3], sizes = [2, 8, 26], strides = [1, 1, 1]} : vector<2x8x32xbf16> to vector<2x8x26xbf16>
    %c3 = arith.constant 3 : index
    %c0_11 = arith.constant 0 : index
    %c0_12 = arith.constant 0 : index
    %17 = vector.load %arg2[%c3, %c0_11, %c0_12] : memref<7x8x64xbf16, #tpu.memory_space<vmem>>, vector<1x8x64xbf16>
    %18 = vector.shape_cast %17 : vector<1x8x64xbf16> to vector<8x64xbf16>
    "tpu.trace_start"() <{level = 10 : i32, message = "bcl,cd->bld"}> : () -> ()
    %cst_13 = arith.constant dense<0.000000e+00> : vector<2x26x64xf32>
    %19 = tpu.matmul %16, %18, %cst_13 {dimension_numbers = #tpu.dot_dimension_numbers<[1], [0], [0, 2], [1], [0, 0, 0, 2, 1, 1], [], []>} : vector<2x8x26xbf16>, vector<8x64xbf16>, vector<2x26x64xf32> -> vector<2x26x64xf32>
    "tpu.trace_stop"() : () -> ()
    %20 = arith.addf %15, %19 : vector<2x26x64xf32>
    %21 = vector.extract_strided_slice %1 {offsets = [0, 0, 4], sizes = [2, 8, 26], strides = [1, 1, 1]} : vector<2x8x32xbf16> to vector<2x8x26xbf16>
    %c4 = arith.constant 4 : index
    %c0_14 = arith.constant 0 : index
    %c0_15 = arith.constant 0 : index
    %22 = vector.load %arg2[%c4, %c0_14, %c0_15] : memref<7x8x64xbf16, #tpu.memory_space<vmem>>, vector<1x8x64xbf16>
    %23 = vector.shape_cast %22 : vector<1x8x64xbf16> to vector<8x64xbf16>
    "tpu.trace_start"() <{level = 10 : i32, message = "bcl,cd->bld"}> : () -> ()
    %cst_16 = arith.constant dense<0.000000e+00> : vector<2x26x64xf32>
    %24 = tpu.matmul %21, %23, %cst_16 {dimension_numbers = #tpu.dot_dimension_numbers<[1], [0], [0, 2], [1], [0, 0, 0, 2, 1, 1], [], []>} : vector<2x8x26xbf16>, vector<8x64xbf16>, vector<2x26x64xf32> -> vector<2x26x64xf32>
    "tpu.trace_stop"() : () -> ()
    %25 = arith.addf %20, %24 : vector<2x26x64xf32>
    %26 = vector.extract_strided_slice %1 {offsets = [0, 0, 5], sizes = [2, 8, 26], strides = [1, 1, 1]} : vector<2x8x32xbf16> to vector<2x8x26xbf16>
    %c5 = arith.constant 5 : index
    %c0_17 = arith.constant 0 : index
    %c0_18 = arith.constant 0 : index
    %27 = vector.load %arg2[%c5, %c0_17, %c0_18] : memref<7x8x64xbf16, #tpu.memory_space<vmem>>, vector<1x8x64xbf16>
    %28 = vector.shape_cast %27 : vector<1x8x64xbf16> to vector<8x64xbf16>
    "tpu.trace_start"() <{level = 10 : i32, message = "bcl,cd->bld"}> : () -> ()
    %cst_19 = arith.constant dense<0.000000e+00> : vector<2x26x64xf32>
    %29 = tpu.matmul %26, %28, %cst_19 {dimension_numbers = #tpu.dot_dimension_numbers<[1], [0], [0, 2], [1], [0, 0, 0, 2, 1, 1], [], []>} : vector<2x8x26xbf16>, vector<8x64xbf16>, vector<2x26x64xf32> -> vector<2x26x64xf32>
    "tpu.trace_stop"() : () -> ()
    %30 = arith.addf %25, %29 : vector<2x26x64xf32>
    %31 = vector.extract_strided_slice %1 {offsets = [0, 0, 6], sizes = [2, 8, 26], strides = [1, 1, 1]} : vector<2x8x32xbf16> to vector<2x8x26xbf16>
    %c6 = arith.constant 6 : index
    %c0_20 = arith.constant 0 : index
    %c0_21 = arith.constant 0 : index
    %32 = vector.load %arg2[%c6, %c0_20, %c0_21] : memref<7x8x64xbf16, #tpu.memory_space<vmem>>, vector<1x8x64xbf16>
    %33 = vector.shape_cast %32 : vector<1x8x64xbf16> to vector<8x64xbf16>
    "tpu.trace_start"() <{level = 10 : i32, message = "bcl,cd->bld"}> : () -> ()
    %cst_22 = arith.constant dense<0.000000e+00> : vector<2x26x64xf32>
    %34 = tpu.matmul %31, %33, %cst_22 {dimension_numbers = #tpu.dot_dimension_numbers<[1], [0], [0, 2], [1], [0, 0, 0, 2, 1, 1], [], []>} : vector<2x8x26xbf16>, vector<8x64xbf16>, vector<2x26x64xf32> -> vector<2x26x64xf32>
    "tpu.trace_stop"() : () -> ()
    %35 = arith.addf %30, %34 : vector<2x26x64xf32>
    %c0_23 = arith.constant 0 : index
    %c0_24 = arith.constant 0 : index
    %36 = vector.load %arg3[%c0_23, %c0_24] : memref<1x64xf32, #tpu.memory_space<vmem>>, vector<1x64xf32>
    %37 = vector.shape_cast %36 : vector<1x64xf32> to vector<1x1x64xf32>
    %38 = vector.broadcast %37 : vector<1x1x64xf32> to vector<2x26x64xf32>
    %39 = arith.addf %35, %38 : vector<2x26x64xf32>
    %cst_25 = arith.constant 0.000000e+00 : f32
    %40 = vector.broadcast %cst_25 : f32 to vector<2x26x64xf32>
    %41 = arith.maximumf %39, %40 : vector<2x26x64xf32>
    %42 = arith.truncf %41 : vector<2x26x64xf32> to vector<2x26x64xbf16>
    %43 = vector.extract_strided_slice %42 {offsets = [0, 0, 0], sizes = [2, 22, 64], strides = [1, 1, 1]} : vector<2x26x64xbf16> to vector<2x22x64xbf16>
    %c0_26 = arith.constant 0 : index
    %c0_27 = arith.constant 0 : index
    %c0_28 = arith.constant 0 : index
    %44 = vector.load %arg4[%c0_26, %c0_27, %c0_28] : memref<5x64x128xbf16, #tpu.memory_space<vmem>>, vector<1x64x128xbf16>
    %45 = vector.shape_cast %44 : vector<1x64x128xbf16> to vector<64x128xbf16>
    "tpu.trace_start"() <{level = 10 : i32, message = "blc,cd->bld"}> : () -> ()
    %cst_29 = arith.constant dense<0.000000e+00> : vector<2x22x128xf32>
    %46 = tpu.matmul %43, %45, %cst_29 {dimension_numbers = #tpu.dot_dimension_numbers<[2], [0], [0, 1], [1], [0, 0, 0, 1, 1, 1], [], []>} : vector<2x22x64xbf16>, vector<64x128xbf16>, vector<2x22x128xf32> -> vector<2x22x128xf32>
    "tpu.trace_stop"() : () -> ()
    %47 = vector.extract_strided_slice %42 {offsets = [0, 1, 0], sizes = [2, 22, 64], strides = [1, 1, 1]} : vector<2x26x64xbf16> to vector<2x22x64xbf16>
    %c1_30 = arith.constant 1 : index
    %c0_31 = arith.constant 0 : index
    %c0_32 = arith.constant 0 : index
    %48 = vector.load %arg4[%c1_30, %c0_31, %c0_32] : memref<5x64x128xbf16, #tpu.memory_space<vmem>>, vector<1x64x128xbf16>
    %49 = vector.shape_cast %48 : vector<1x64x128xbf16> to vector<64x128xbf16>
    "tpu.trace_start"() <{level = 10 : i32, message = "blc,cd->bld"}> : () -> ()
    %cst_33 = arith.constant dense<0.000000e+00> : vector<2x22x128xf32>
    %50 = tpu.matmul %47, %49, %cst_33 {dimension_numbers = #tpu.dot_dimension_numbers<[2], [0], [0, 1], [1], [0, 0, 0, 1, 1, 1], [], []>} : vector<2x22x64xbf16>, vector<64x128xbf16>, vector<2x22x128xf32> -> vector<2x22x128xf32>
    "tpu.trace_stop"() : () -> ()
    %51 = arith.addf %46, %50 : vector<2x22x128xf32>
    %52 = vector.extract_strided_slice %42 {offsets = [0, 2, 0], sizes = [2, 22, 64], strides = [1, 1, 1]} : vector<2x26x64xbf16> to vector<2x22x64xbf16>
    %c2_34 = arith.constant 2 : index
    %c0_35 = arith.constant 0 : index
    %c0_36 = arith.constant 0 : index
    %53 = vector.load %arg4[%c2_34, %c0_35, %c0_36] : memref<5x64x128xbf16, #tpu.memory_space<vmem>>, vector<1x64x128xbf16>
    %54 = vector.shape_cast %53 : vector<1x64x128xbf16> to vector<64x128xbf16>
    "tpu.trace_start"() <{level = 10 : i32, message = "blc,cd->bld"}> : () -> ()
    %cst_37 = arith.constant dense<0.000000e+00> : vector<2x22x128xf32>
    %55 = tpu.matmul %52, %54, %cst_37 {dimension_numbers = #tpu.dot_dimension_numbers<[2], [0], [0, 1], [1], [0, 0, 0, 1, 1, 1], [], []>} : vector<2x22x64xbf16>, vector<64x128xbf16>, vector<2x22x128xf32> -> vector<2x22x128xf32>
    "tpu.trace_stop"() : () -> ()
    %56 = arith.addf %51, %55 : vector<2x22x128xf32>
    %57 = vector.extract_strided_slice %42 {offsets = [0, 3, 0], sizes = [2, 22, 64], strides = [1, 1, 1]} : vector<2x26x64xbf16> to vector<2x22x64xbf16>
    %c3_38 = arith.constant 3 : index
    %c0_39 = arith.constant 0 : index
    %c0_40 = arith.constant 0 : index
    %58 = vector.load %arg4[%c3_38, %c0_39, %c0_40] : memref<5x64x128xbf16, #tpu.memory_space<vmem>>, vector<1x64x128xbf16>
    %59 = vector.shape_cast %58 : vector<1x64x128xbf16> to vector<64x128xbf16>
    "tpu.trace_start"() <{level = 10 : i32, message = "blc,cd->bld"}> : () -> ()
    %cst_41 = arith.constant dense<0.000000e+00> : vector<2x22x128xf32>
    %60 = tpu.matmul %57, %59, %cst_41 {dimension_numbers = #tpu.dot_dimension_numbers<[2], [0], [0, 1], [1], [0, 0, 0, 1, 1, 1], [], []>} : vector<2x22x64xbf16>, vector<64x128xbf16>, vector<2x22x128xf32> -> vector<2x22x128xf32>
    "tpu.trace_stop"() : () -> ()
    %61 = arith.addf %56, %60 : vector<2x22x128xf32>
    %62 = vector.extract_strided_slice %42 {offsets = [0, 4, 0], sizes = [2, 22, 64], strides = [1, 1, 1]} : vector<2x26x64xbf16> to vector<2x22x64xbf16>
    %c4_42 = arith.constant 4 : index
    %c0_43 = arith.constant 0 : index
    %c0_44 = arith.constant 0 : index
    %63 = vector.load %arg4[%c4_42, %c0_43, %c0_44] : memref<5x64x128xbf16, #tpu.memory_space<vmem>>, vector<1x64x128xbf16>
    %64 = vector.shape_cast %63 : vector<1x64x128xbf16> to vector<64x128xbf16>
    "tpu.trace_start"() <{level = 10 : i32, message = "blc,cd->bld"}> : () -> ()
    %cst_45 = arith.constant dense<0.000000e+00> : vector<2x22x128xf32>
    %65 = tpu.matmul %62, %64, %cst_45 {dimension_numbers = #tpu.dot_dimension_numbers<[2], [0], [0, 1], [1], [0, 0, 0, 1, 1, 1], [], []>} : vector<2x22x64xbf16>, vector<64x128xbf16>, vector<2x22x128xf32> -> vector<2x22x128xf32>
    "tpu.trace_stop"() : () -> ()
    %66 = arith.addf %61, %65 : vector<2x22x128xf32>
    %c0_46 = arith.constant 0 : index
    %c0_47 = arith.constant 0 : index
    %67 = vector.load %arg5[%c0_46, %c0_47] : memref<1x128xf32, #tpu.memory_space<vmem>>, vector<1x128xf32>
    %68 = vector.shape_cast %67 : vector<1x128xf32> to vector<1x1x128xf32>
    %69 = vector.broadcast %68 : vector<1x1x128xf32> to vector<2x22x128xf32>
    %70 = arith.addf %66, %69 : vector<2x22x128xf32>
    %cst_48 = arith.constant 0.000000e+00 : f32
    %71 = vector.broadcast %cst_48 : f32 to vector<2x22x128xf32>
    %72 = arith.maximumf %70, %71 : vector<2x22x128xf32>
    %73 = arith.truncf %72 : vector<2x22x128xf32> to vector<2x22x128xbf16>
    %74 = vector.extract_strided_slice %73 {offsets = [0, 0, 0], sizes = [2, 20, 128], strides = [1, 1, 1]} : vector<2x22x128xbf16> to vector<2x20x128xbf16>
    %c0_49 = arith.constant 0 : index
    %c0_50 = arith.constant 0 : index
    %c0_51 = arith.constant 0 : index
    %75 = vector.load %arg6[%c0_49, %c0_50, %c0_51] : memref<3x128x256xbf16, #tpu.memory_space<vmem>>, vector<1x128x256xbf16>
    %76 = vector.shape_cast %75 : vector<1x128x256xbf16> to vector<128x256xbf16>
    "tpu.trace_start"() <{level = 10 : i32, message = "blc,cd->bld"}> : () -> ()
    %cst_52 = arith.constant dense<0.000000e+00> : vector<2x20x256xf32>
    %77 = tpu.matmul %74, %76, %cst_52 {dimension_numbers = #tpu.dot_dimension_numbers<[2], [0], [0, 1], [1], [0, 0, 0, 1, 1, 1], [], []>} : vector<2x20x128xbf16>, vector<128x256xbf16>, vector<2x20x256xf32> -> vector<2x20x256xf32>
    "tpu.trace_stop"() : () -> ()
    %78 = vector.extract_strided_slice %73 {offsets = [0, 1, 0], sizes = [2, 20, 128], strides = [1, 1, 1]} : vector<2x22x128xbf16> to vector<2x20x128xbf16>
    %c1_53 = arith.constant 1 : index
    %c0_54 = arith.constant 0 : index
    %c0_55 = arith.constant 0 : index
    %79 = vector.load %arg6[%c1_53, %c0_54, %c0_55] : memref<3x128x256xbf16, #tpu.memory_space<vmem>>, vector<1x128x256xbf16>
    %80 = vector.shape_cast %79 : vector<1x128x256xbf16> to vector<128x256xbf16>
    "tpu.trace_start"() <{level = 10 : i32, message = "blc,cd->bld"}> : () -> ()
    %cst_56 = arith.constant dense<0.000000e+00> : vector<2x20x256xf32>
    %81 = tpu.matmul %78, %80, %cst_56 {dimension_numbers = #tpu.dot_dimension_numbers<[2], [0], [0, 1], [1], [0, 0, 0, 1, 1, 1], [], []>} : vector<2x20x128xbf16>, vector<128x256xbf16>, vector<2x20x256xf32> -> vector<2x20x256xf32>
    "tpu.trace_stop"() : () -> ()
    %82 = arith.addf %77, %81 : vector<2x20x256xf32>
    %83 = vector.extract_strided_slice %73 {offsets = [0, 2, 0], sizes = [2, 20, 128], strides = [1, 1, 1]} : vector<2x22x128xbf16> to vector<2x20x128xbf16>
    %c2_57 = arith.constant 2 : index
    %c0_58 = arith.constant 0 : index
    %c0_59 = arith.constant 0 : index
    %84 = vector.load %arg6[%c2_57, %c0_58, %c0_59] : memref<3x128x256xbf16, #tpu.memory_space<vmem>>, vector<1x128x256xbf16>
    %85 = vector.shape_cast %84 : vector<1x128x256xbf16> to vector<128x256xbf16>
    "tpu.trace_start"() <{level = 10 : i32, message = "blc,cd->bld"}> : () -> ()
    %cst_60 = arith.constant dense<0.000000e+00> : vector<2x20x256xf32>
    %86 = tpu.matmul %83, %85, %cst_60 {dimension_numbers = #tpu.dot_dimension_numbers<[2], [0], [0, 1], [1], [0, 0, 0, 1, 1, 1], [], []>} : vector<2x20x128xbf16>, vector<128x256xbf16>, vector<2x20x256xf32> -> vector<2x20x256xf32>
    "tpu.trace_stop"() : () -> ()
    %87 = arith.addf %82, %86 : vector<2x20x256xf32>
    %c0_61 = arith.constant 0 : index
    %c0_62 = arith.constant 0 : index
    %88 = vector.load %arg7[%c0_61, %c0_62] : memref<1x256xf32, #tpu.memory_space<vmem>>, vector<1x256xf32>
    %89 = vector.shape_cast %88 : vector<1x256xf32> to vector<1x1x256xf32>
    %90 = vector.broadcast %89 : vector<1x1x256xf32> to vector<2x20x256xf32>
    %91 = arith.addf %87, %90 : vector<2x20x256xf32>
    %cst_63 = arith.constant 0.000000e+00 : f32
    %92 = vector.broadcast %cst_63 : f32 to vector<2x20x256xf32>
    %93 = arith.maximumf %91, %92 : vector<2x20x256xf32>
    %94 = arith.truncf %93 : vector<2x20x256xf32> to vector<2x20x256xbf16>
    %c0_64 = arith.constant 0 : index
    %c0_65 = arith.constant 0 : index
    %c0_66 = arith.constant 0 : index
    %95 = vector.load %arg8[%c0_64, %c0_65, %c0_66] : memref<1x256x512xbf16, #tpu.memory_space<vmem>>, vector<1x256x512xbf16>
    %96 = vector.shape_cast %95 : vector<1x256x512xbf16> to vector<256x512xbf16>
    "tpu.trace_start"() <{level = 10 : i32, message = "blc,cd->bld"}> : () -> ()
    %cst_67 = arith.constant dense<0.000000e+00> : vector<2x20x512xf32>
    %97 = tpu.matmul %94, %96, %cst_67 {dimension_numbers = #tpu.dot_dimension_numbers<[2], [0], [0, 1], [1], [0, 0, 0, 1, 1, 1], [], []>} : vector<2x20x256xbf16>, vector<256x512xbf16>, vector<2x20x512xf32> -> vector<2x20x512xf32>
    "tpu.trace_stop"() : () -> ()
    %c0_68 = arith.constant 0 : index
    %c0_69 = arith.constant 0 : index
    %98 = vector.load %arg9[%c0_68, %c0_69] : memref<1x512xf32, #tpu.memory_space<vmem>>, vector<1x512xf32>
    %99 = vector.shape_cast %98 : vector<1x512xf32> to vector<1x1x512xf32>
    %100 = vector.broadcast %99 : vector<1x1x512xf32> to vector<2x20x512xf32>
    %101 = arith.addf %97, %100 : vector<2x20x512xf32>
    %cst_70 = arith.constant 0.000000e+00 : f32
    %102 = vector.broadcast %cst_70 : f32 to vector<2x20x512xf32>
    %103 = arith.maximumf %101, %102 : vector<2x20x512xf32>
    %cst_71 = arith.constant dense<0.000000e+00> : vector<2x512xf32>
    %104 = vector.multi_reduction <add>, %103, %cst_71 [1] : vector<2x20x512xf32> to vector<2x512xf32>
    %cst_72 = arith.constant 2.000000e+01 : f32
    %105 = vector.broadcast %cst_72 : f32 to vector<2x512xf32>
    %106 = arith.divf %104, %105 : vector<2x512xf32>
    %c0_73 = arith.constant 0 : index
    %c0_74 = arith.constant 0 : index
    %c0_75 = arith.constant 0 : index
    %107 = vector.load %arg10[%c0_73, %c0_74, %c0_75] : memref<1x2x512xf32, #tpu.memory_space<vmem>>, vector<1x2x512xf32>
    %108 = vector.shape_cast %107 : vector<1x2x512xf32> to vector<2x512xf32>
    %109 = vector.shape_cast %106 : vector<2x512xf32> to vector<1x2x512xf32>
    tpu.vector_store %arg10[%c0_73, %c0_74, %c0_75], %109 {strides = array<i32>} : memref<1x2x512xf32, #tpu.memory_space<vmem>>, vector<1x2x512xf32>,
    return
  }
  func.func @transform_0(%arg0: i32) -> (i32, i32, i32) {
    %c0_i32 = arith.constant 0 : i32
    %c0_i32_0 = arith.constant 0 : i32
    %c0_i32_1 = arith.constant 0 : i32
    return %arg0, %c0_i32, %c0_i32_0 : i32, i32, i32
  }
  func.func @transform_1(%arg0: i32) -> (i32, i32, i32) {
    %c0_i32 = arith.constant 0 : i32
    %c0_i32_0 = arith.constant 0 : i32
    %c0_i32_1 = arith.constant 0 : i32
    %c0_i32_2 = arith.constant 0 : i32
    return %c0_i32, %c0_i32_0, %c0_i32_1 : i32, i32, i32
  }
  func.func @transform_2(%arg0: i32) -> (i32, i32) {
    %c0_i32 = arith.constant 0 : i32
    %c0_i32_0 = arith.constant 0 : i32
    %c0_i32_1 = arith.constant 0 : i32
    return %c0_i32, %c0_i32_0 : i32, i32
  }
  func.func @transform_3(%arg0: i32) -> (i32, i32, i32) {
    %c0_i32 = arith.constant 0 : i32
    %c0_i32_0 = arith.constant 0 : i32
    %c0_i32_1 = arith.constant 0 : i32
    %c0_i32_2 = arith.constant 0 : i32
    return %c0_i32, %c0_i32_0, %c0_i32_1 : i32, i32, i32
  }
  func.func @transform_4(%arg0: i32) -> (i32, i32) {
    %c0_i32 = arith.constant 0 : i32
    %c0_i32_0 = arith.constant 0 : i32
    %c0_i32_1 = arith.constant 0 : i32
    return %c0_i32, %c0_i32_0 : i32, i32
  }
  func.func @transform_5(%arg0: i32) -> (i32, i32, i32) {
    %c0_i32 = arith.constant 0 : i32
    %c0_i32_0 = arith.constant 0 : i32
    %c0_i32_1 = arith.constant 0 : i32
    %c0_i32_2 = arith.constant 0 : i32
    return %c0_i32, %c0_i32_0, %c0_i32_1 : i32, i32, i32
  }
  func.func @transform_6(%arg0: i32) -> (i32, i32) {
    %c0_i32 = arith.constant 0 : i32
    %c0_i32_0 = arith.constant 0 : i32
    %c0_i32_1 = arith.constant 0 : i32
    return %c0_i32, %c0_i32_0 : i32, i32
  }
  func.func @transform_7(%arg0: i32) -> (i32, i32, i32) {
    %c0_i32 = arith.constant 0 : i32
    %c0_i32_0 = arith.constant 0 : i32
    %c0_i32_1 = arith.constant 0 : i32
    %c0_i32_2 = arith.constant 0 : i32
    return %c0_i32, %c0_i32_0, %c0_i32_1 : i32, i32, i32
  }
  func.func @transform_8(%arg0: i32) -> (i32, i32) {
    %c0_i32 = arith.constant 0 : i32
    %c0_i32_0 = arith.constant 0 : i32
    %c0_i32_1 = arith.constant 0 : i32
    return %c0_i32, %c0_i32_0 : i32, i32
  }
  func.func @transform_9(%arg0: i32) -> (i32, i32, i32) {
    %c0_i32 = arith.constant 0 : i32
    %c0_i32_0 = arith.constant 0 : i32
    %c0_i32_1 = arith.constant 0 : i32
    return %arg0, %c0_i32, %c0_i32_0 : i32, i32, i32
  }
}

</mosaic_0001>

<llo_original>
// kernel: tpu_custom_call.1
$region0: #{tpu_custom_call.1}
  #allocation0 [shape = 'u32[]', space=smem, size = 0x4, offset = 0x4, fixed_abs, tag = 'smem constant byte address 0x4 - core index']
  #allocation1 [shape = 'u32[72,128]{1,0:T(1,128)}', space=vmem, size = 0x9000, scoped, tag = 'internal scratch']
  %s0 = inlined_call_operand.hbm [shape: f32[2,8,32], index: 0, kind: input, shape index: {}]
  %s1 = inlined_call_operand.hbm [shape: bf16[7,8,64], index: 1, kind: input, shape index: {}]
  %s2 = inlined_call_operand.vmem [shape: f32[1,64], index: 2, kind: input, shape index: {}]
  %s3 = inlined_call_operand.hbm [shape: bf16[5,64,128], index: 3, kind: input, shape index: {}]
  %s4 = inlined_call_operand.hbm [shape: f32[1,128], index: 4, kind: input, shape index: {}]
  %s5 = inlined_call_operand.hbm [shape: bf16[3,128,256], index: 5, kind: input, shape index: {}]
  %s6 = inlined_call_operand.vmem [shape: f32[1,256], index: 6, kind: input, shape index: {}]
  %s7 = inlined_call_operand.hbm [shape: bf16[1,256,512], index: 7, kind: input, shape index: {}]
  %s8 = inlined_call_operand.vmem [shape: f32[1,512], index: 8, kind: input, shape index: {}]
  %s9 = inlined_call_operand.hbm [shape: f32[1,2,512], index: 9, kind: output, shape index: {}]
  %s10 = sld [smem:[#allocation0]]
  $region70: #{tpu_custom_call.1} parent=0
    _
  %s12 = ssub.s32 1, %s10
  %s13 = scalar_select 0, %s12, %s10
  $region1: #{tpu_custom_call.1} parent=0
    #allocation2 [shape = 'u8[8192]{0}', space=vmem, size = 0x2000, scoped, tag = 'input window, operand 0, single buffered']
    #allocation3 [shape = 's32[1]{0}', space=sflag, size = 0x4, scoped, tag = 'scoped memory for tpu_custom_call.1']
    #allocation4 [shape = 's32[1]{0}', space=sflag, size = 0x4, scoped, tag = 'scoped memory for tpu_custom_call.1']
    #allocation5 [shape = 'u8[14336]{0}', space=vmem, size = 0x3800, scoped, tag = 'input window, operand 1, single buffered']
    #allocation6 [shape = 's32[1]{0}', space=sflag, size = 0x4, scoped, tag = 'scoped memory for tpu_custom_call.1']
    #allocation7 [shape = 'u8[81920]{0}', space=vmem, size = 0x14000, scoped, tag = 'input window, operand 3, single buffered']
    #allocation8 [shape = 'u8[512]{0}', space=vmem, size = 0x400, scoped, tag = 'input window, operand 4, single buffered']
    #allocation9 [shape = 's32[1]{0}', space=sflag, size = 0x4, scoped, tag = 'scoped memory for tpu_custom_call.1']
    #allocation10 [shape = 'u8[196608]{0}', space=vmem, size = 0x30000, scoped, tag = 'input window, operand 5, single buffered']
    #allocation11 [shape = 'u8[262144]{0}', space=vmem, size = 0x40000, scoped, tag = 'input window, operand 7, single buffered']
    #allocation12 [shape = 's32[1]{0}', space=sflag, size = 0x4, scoped, tag = 'scoped memory for tpu_custom_call.1']
    #allocation13 [shape = 'u8[4096]{0}', space=vmem, size = 0x1000, scoped, tag = 'output window, operand 0, single buffered']
    %14 = vsyncpa [#allocation3], 0
    %15 = vsyncpa [#allocation6], 0
    %16 = vsyncpa [#allocation9], 0
    %17 = vsyncpa [#allocation12], 0
    %18 = vsyncpa [#allocation4], 0
    // Predicated region
    $region2: #{tpu_custom_call.1} parent=1 // pred_check
      _
    $region3: #{tpu_custom_call.1} parent=1 // pred_check_branch
      %20 = sbr.rel (0) target = $region5
    $region4: #{tpu_custom_call.1} parent=1 // pred_region
      %22 = vsyncadd [#allocation3], 0
      %s23 = sshll.u32 %s0, 4
      %s24 = int_to_ptr.hbm [resolvable:$true] %s23
      %s25 = sshll.u32 [#allocation2], 4
      %s26 = int_to_ptr.vmem [resolvable:$true] %s25
      %31 = dma.hbm_to_vmem [thread:$0]  %s24, 256, %s26, [#allocation3], 128, 128, 8
    $region5: #{tpu_custom_call.1} parent=1 // pred_fallthru
      _
    // Predicated region
    $region6: #{tpu_custom_call.1} parent=1 // pred_check
      _
    $region7: #{tpu_custom_call.1} parent=1 // pred_check_branch
      %33 = sbr.rel (0) target = $region9
    $region8: #{tpu_custom_call.1} parent=1 // pred_region
      %35 = vsyncadd [#allocation6], 0
      %s36 = sshll.u32 %s1, 4
      %s37 = int_to_ptr.hbm [resolvable:$true] %s36
      %s38 = sshll.u32 [#allocation5], 4
      %s39 = int_to_ptr.vmem [resolvable:$true] %s38
      %44 = dma.hbm_to_vmem [thread:$0]  %s37, 448, %s39, [#allocation6], 64, 64, 4
    $region9: #{tpu_custom_call.1} parent=1 // pred_fallthru
      _
    // Predicated region
    $region10: #{tpu_custom_call.1} parent=1 // pred_check
      _
    $region11: #{tpu_custom_call.1} parent=1 // pred_check_branch
      %46 = sbr.rel (0) target = $region13
    $region12: #{tpu_custom_call.1} parent=1 // pred_region
      _
    $region13: #{tpu_custom_call.1} parent=1 // pred_fallthru
      _
    // Predicated region
    $region14: #{tpu_custom_call.1} parent=1 // pred_check
      _
    $region15: #{tpu_custom_call.1} parent=1 // pred_check_branch
      %48 = sbr.rel (0) target = $region17
    $region16: #{tpu_custom_call.1} parent=1 // pred_region
      %50 = vsyncadd [#allocation6], 0
      %s51 = sshll.u32 %s3, 4
      %s52 = int_to_ptr.hbm [resolvable:$true] %s51
      %s53 = sshll.u32 [#allocation7], 4
      %s54 = int_to_ptr.vmem [resolvable:$true] %s53
      %59 = dma.hbm_to_vmem [thread:$0]  %s52, 2560, %s54, [#allocation6], 64, 64, 4
    $region17: #{tpu_custom_call.1} parent=1 // pred_fallthru
      _
    // Predicated region
    $region18: #{tpu_custom_call.1} parent=1 // pred_check
      _
    $region19: #{tpu_custom_call.1} parent=1 // pred_check_branch
      %61 = sbr.rel (0) target = $region21
    $region20: #{tpu_custom_call.1} parent=1 // pred_region
      %63 = vsyncadd [#allocation9], 0
      %s65 = sshll.u32 %s4, 4
      %s66 = int_to_ptr.hbm [resolvable:$true] %s65
      %s67 = sshll.u32 [#allocation8], 4
      %s68 = int_to_ptr.vmem [resolvable:$true] %s67
      %70 = dma.hbm_to_vmem [thread:$0]  %s66, 16, %s68, [#allocation9]
    $region21: #{tpu_custom_call.1} parent=1 // pred_fallthru
      _
    // Predicated region
    $region22: #{tpu_custom_call.1} parent=1 // pred_check
      _
    $region23: #{tpu_custom_call.1} parent=1 // pred_check_branch
      %72 = sbr.rel (0) target = $region25
    $region24: #{tpu_custom_call.1} parent=1 // pred_region
      %74 = vsyncadd [#allocation9], 0
      %s75 = sshll.u32 %s5, 4
      %s76 = int_to_ptr.hbm [resolvable:$true] %s75
      %s77 = sshll.u32 [#allocation10], 4
      %s78 = int_to_ptr.vmem [resolvable:$true] %s77
      %83 = dma.hbm_to_vmem [thread:$0]  %s76, 6144, %s78, [#allocation9], 128, 128, 8
    $region25: #{tpu_custom_call.1} parent=1 // pred_fallthru
      _
    // Predicated region
    $region26: #{tpu_custom_call.1} parent=1 // pred_check
      _
    $region27: #{tpu_custom_call.1} parent=1 // pred_check_branch
      %85 = sbr.rel (0) target = $region29
    $region28: #{tpu_custom_call.1} parent=1 // pred_region
      _
    $region29: #{tpu_custom_call.1} parent=1 // pred_fallthru
      _
    // Predicated region
    $region30: #{tpu_custom_call.1} parent=1 // pred_check
      _
    $region31: #{tpu_custom_call.1} parent=1 // pred_check_branch
      %87 = sbr.rel (0) target = $region33
    $region32: #{tpu_custom_call.1} parent=1 // pred_region
      %89 = vsyncadd [#allocation12], 0
      %s90 = sshll.u32 %s7, 4
      %s91 = int_to_ptr.hbm [resolvable:$true] %s90
      %s92 = sshll.u32 [#allocation11], 4
      %s93 = int_to_ptr.vmem [resolvable:$true] %s92
      %98 = dma.hbm_to_vmem [thread:$0]  %s91, 8192, %s93, [#allocation12], 256, 256, 16
    $region33: #{tpu_custom_call.1} parent=1 // pred_fallthru
      _
    // Predicated region
    $region34: #{tpu_custom_call.1} parent=1 // pred_check
      _
    $region35: #{tpu_custom_call.1} parent=1 // pred_check_branch
      %100 = sbr.rel (0) target = $region37
    $region36: #{tpu_custom_call.1} parent=1 // pred_region
      _
    $region37: #{tpu_custom_call.1} parent=1 // pred_fallthru
      _
    // Predicated region
    $region38: #{tpu_custom_call.1} parent=1 // pred_check
      _
    $region39: #{tpu_custom_call.1} parent=1 // pred_check_branch
      %102 = sbr.rel (0) target = $region41
    $region40: #{tpu_custom_call.1} parent=1 // pred_region
      %104 = dma.done [#allocation3], 256
    $region41: #{tpu_custom_call.1} parent=1 // pred_fallthru
      _
    // Predicated region
    $region42: #{tpu_custom_call.1} parent=1 // pred_check
      _
    $region43: #{tpu_custom_call.1} parent=1 // pred_check_branch
      %106 = sbr.rel (0) target = $region45
    $region44: #{tpu_custom_call.1} parent=1 // pred_region
      %108 = dma.done [#allocation6], 448
    $region45: #{tpu_custom_call.1} parent=1 // pred_fallthru
      _
    // Predicated region
    $region46: #{tpu_custom_call.1} parent=1 // pred_check
      _
    $region47: #{tpu_custom_call.1} parent=1 // pred_check_branch
      %110 = sbr.rel (0) target = $region49
    $region48: #{tpu_custom_call.1} parent=1 // pred_region
      %112 = dma.done [#allocation6], 2560
    $region49: #{tpu_custom_call.1} parent=1 // pred_fallthru
      _
    // Predicated region
    $region50: #{tpu_custom_call.1} parent=1 // pred_check
      _
    $region51: #{tpu_custom_call.1} parent=1 // pred_check_branch
      %114 = sbr.rel (0) target = $region53
    $region52: #{tpu_custom_call.1} parent=1 // pred_region
      %116 = dma.done [#allocation9], 16
    $region53: #{tpu_custom_call.1} parent=1 // pred_fallthru
      _
    // Predicated region
    $region54: #{tpu_custom_call.1} parent=1 // pred_check
      _
    $region55: #{tpu_custom_call.1} parent=1 // pred_check_branch
      %118 = sbr.rel (0) target = $region57
    $region56: #{tpu_custom_call.1} parent=1 // pred_region
      %120 = dma.done [#allocation9], 6144
    $region57: #{tpu_custom_call.1} parent=1 // pred_fallthru
      _
    // Predicated region
    $region58: #{tpu_custom_call.1} parent=1 // pred_check
      _
    $region59: #{tpu_custom_call.1} parent=1 // pred_check_branch
      %122 = sbr.rel (0) target = $region61
    $region60: #{tpu_custom_call.1} parent=1 // pred_region
      %124 = dma.done [#allocation12], 8192
    $region61: #{tpu_custom_call.1} parent=1 // pred_fallthru
      _
    %v126 = vld [vmem:[#allocation2] sm:$0xff]
    %v127 = vld [vmem:[#allocation2 + $0x8] sm:$0xff]
    %v128 = vpack.c.bf16 %v126, %v126
    %v129 = vpack.c.bf16 %v127, %v127
    %v130 = vld [vmem:[#allocation5] sm:$0xf]
    %s131 = scalar_lea.vmem [#allocation5], 4
    %v132 = vld [vmem:[%s131] sm:$0xf]
    %v135 = vunpack.c.l.b16 %v128
    %v136 = vunpack.c.l.b16 %v129
    %v137 = vpack.c.b16 %v135, %v135
    %v138 = vpack.c.b16 %v136, %v136
    %139 = vrot.lane.b32.xlu0 %v137, 127
    %v140 = vpop.permute.xlu0 %139
    %141 = vrot.lane.b32.xlu0 %v138, 127
    %v142 = vpop.permute.xlu0 %141
    %145 = vxpose.xlu0.c.b16.start [1/8] %v140, 128
    %146 = vxpose.xlu0.c.b16.cont [2/8] 0, 128
    %147 = vxpose.xlu0.c.b16.cont [3/8] 0, 128
    %148 = vxpose.xlu0.c.b16.cont [4/8] 0, 128
    %149 = vxpose.xlu0.c.b16.cont [5/8] 0, 128
    %150 = vxpose.xlu0.c.b16.cont [6/8] 0, 128
    %151 = vxpose.xlu0.c.b16.cont [7/8] 0, 128
    %152 = vxpose.xlu0.c.b16.end [8/8] 0, 128
    %v153 = vpop.trf.xlu0
    %v154 = vpop.trf.xlu0
    %v155 = vpop.trf.xlu0
    %v156 = vpop.trf.xlu0
    %v157 = vpop.trf.xlu0
    %v158 = vpop.trf.xlu0
    %v159 = vpop.trf.xlu0
    %v160 = vpop.trf.xlu0
    %161 = vxpose.xlu0.c.b16.start [1/8] %v142, 128
    %162 = vxpose.xlu0.c.b16.cont [2/8] 0, 128
    %163 = vxpose.xlu0.c.b16.cont [3/8] 0, 128
    %164 = vxpose.xlu0.c.b16.cont [4/8] 0, 128
    %165 = vxpose.xlu0.c.b16.cont [5/8] 0, 128
    %166 = vxpose.xlu0.c.b16.cont [6/8] 0, 128
    %167 = vxpose.xlu0.c.b16.cont [7/8] 0, 128
    %168 = vxpose.xlu0.c.b16.end [8/8] 0, 128
    %v169 = vpop.trf.xlu0
    %v170 = vpop.trf.xlu0
    %v171 = vpop.trf.xlu0
    %v172 = vpop.trf.xlu0
    %v173 = vpop.trf.xlu0
    %v174 = vpop.trf.xlu0
    %v175 = vpop.trf.xlu0
    %v176 = vpop.trf.xlu0
    %v181 = vrot.slane %v153, 1
    %v182 = vrot.slane %v153, 2
    %v183 = vrot.slane %v153, 3
    %v184 = vrot.slane %v153, 4
    %v185 = vrot.slane %v153, 5
    %v186 = vrot.slane %v153, 6
    %v187 = vrot.slane %v153, 7
    %v188 = vrot.slane %v154, 1
    %v189 = vrot.slane %v154, 2
    %v190 = vrot.slane %v154, 3
    %v191 = vrot.slane %v154, 4
    %v192 = vrot.slane %v169, 1
    %v193 = vrot.slane %v169, 2
    %v194 = vrot.slane %v169, 3
    %v195 = vrot.slane %v169, 4
    %v196 = vrot.slane %v169, 5
    %v197 = vrot.slane %v169, 6
    %v198 = vrot.slane %v169, 7
    %v199 = vrot.slane %v170, 1
    %v200 = vrot.slane %v170, 2
    %v201 = vrot.slane %v170, 3
    %v202 = vrot.slane %v170, 4
    %204 = vst [vmem:[#allocation1] ss:$9 sm:$0xff] %v153
    %s206 = scalar_lea.vmem [#allocation1], 1
    %207 = vst [vmem:[%s206] ss:$9 sm:$0xff] %v181
    %s209 = scalar_lea.vmem [#allocation1], 2
    %210 = vst [vmem:[%s209] ss:$9 sm:$0xff] %v182
    %s212 = scalar_lea.vmem [#allocation1], 3
    %213 = vst [vmem:[%s212] ss:$9 sm:$0xff] %v183
    %s215 = scalar_lea.vmem [#allocation1], 4
    %216 = vst [vmem:[%s215] ss:$9 sm:$0xff] %v184
    %s218 = scalar_lea.vmem [#allocation1], 5
    %219 = vst [vmem:[%s218] ss:$9 sm:$0xff] %v185
    %s221 = scalar_lea.vmem [#allocation1], 6
    %222 = vst [vmem:[%s221] ss:$9 sm:$0xff] %v186
    %s224 = scalar_lea.vmem [#allocation1], 7
    %225 = vst [vmem:[%s224] ss:$9 sm:$0xff] %v187
    %v226 = vld [vmem:[#allocation1] sm:$0xff]
    %228 = vst [vmem:[#allocation1] ss:$9 sm:$0xff] %v154
    %230 = vst [vmem:[%s206] ss:$9 sm:$0xff] %v188
    %232 = vst [vmem:[%s209] ss:$9 sm:$0xff] %v189
    %234 = vst [vmem:[%s212] ss:$9 sm:$0xff] %v190
    %236 = vst [vmem:[%s215] ss:$9 sm:$0xff] %v191
    %238 = vst [vmem:[%s218] ss:$9 sm:$0xff] %v169
    %240 = vst [vmem:[%s221] ss:$9 sm:$0xff] %v192
    %242 = vst [vmem:[%s224] ss:$9 sm:$0xff] %v193
    %v243 = vld [vmem:[#allocation1] sm:$0xff]
    %245 = vst [vmem:[#allocation1] ss:$9 sm:$0xff] %v194
    %247 = vst [vmem:[%s206] ss:$9 sm:$0xff] %v195
    %249 = vst [vmem:[%s209] ss:$9 sm:$0xff] %v196
    %251 = vst [vmem:[%s212] ss:$9 sm:$0xff] %v197
    %253 = vst [vmem:[%s215] ss:$9 sm:$0xff] %v198
    %255 = vst [vmem:[%s218] ss:$9 sm:$0xff] %v170
    %257 = vst [vmem:[%s221] ss:$9 sm:$0xff] %v199
    %259 = vst [vmem:[%s224] ss:$9 sm:$0xff] %v200
    %v260 = vld [vmem:[#allocation1] sm:$0xff]
    %262 = vst [vmem:[#allocation1] ss:$9 sm:$0xff] %v201
    %264 = vst [vmem:[%s206] ss:$9 sm:$0xff] %v202
    %v265 = vld [vmem:[#allocation1] sm:$0xff]
    %vm266 = vcmask 64512
    %v267 = vsel %vm266, %v226, 0
    %v269 = vsel %vm266, %v243, 0
    %v271 = vsel %vm266, %v260, 0
    %v273 = vsel %vm266, %v265, 0
    %vm275 = vcmask 1043456
    %v277 = vsel %vm275, %v132, 0
    %279 = vmatpush.bf16.msra.mxu0 0
    %280 = vmatpush.bf16.msra.mxu0 0
    %281 = vmatpush.bf16.msra.mxu0 0
    %282 = vmatpush.bf16.msra.mxu0 0
    %283 = vmatpush.bf16.msra.mxu0 0
    %284 = vmatpush.bf16.msra.mxu0 0
    %285 = vmatpush.bf16.msra.mxu0 0
    %286 = vmatpush.bf16.msra.mxu0 %v277
    %287 = vmatmul.bf16.gmra.mxu0 %v267
    %v288 = vpop.f32.mrf.mxu0
    %v289 = vadd.f32 0.0, %v288
    %v290 = vpop.f32.mrf.mxu0
    %v291 = vadd.f32 0.0, %v290
    %292 = vmatmul.bf16.gmra.mxu0 %v269
    %v293 = vpop.f32.mrf.mxu0
    %v294 = vadd.f32 0.0, %v293
    %v295 = vpop.f32.mrf.mxu0
    %v296 = vadd.f32 0.0, %v295
    %297 = vmatmul.bf16.gmra.mxu0 %v271
    %v298 = vpop.f32.mrf.mxu0
    %v299 = vadd.f32 0.0, %v298
    %v300 = vpop.f32.mrf.mxu0
    %v301 = vadd.f32 0.0, %v300
    %302 = vmatmul.bf16.gmra.mxu0 %v273
    %v303 = vpop.f32.mrf.mxu0
    %v304 = vadd.f32 0.0, %v303
    %v305 = vpop.f32.mrf.mxu0
    %306 = vdwg.mxu0
    %307 = vxpose.xlu0.c.b16.start [1/8] %v128, 128
    %308 = vxpose.xlu0.c.b16.cont [2/8] 0, 128
    %309 = vxpose.xlu0.c.b16.cont [3/8] 0, 128
    %310 = vxpose.xlu0.c.b16.cont [4/8] 0, 128
    %311 = vxpose.xlu0.c.b16.cont [5/8] 0, 128
    %312 = vxpose.xlu0.c.b16.cont [6/8] 0, 128
    %313 = vxpose.xlu0.c.b16.cont [7/8] 0, 128
    %314 = vxpose.xlu0.c.b16.end [8/8] 0, 128
    %v315 = vpop.trf.xlu0
    %v316 = vpop.trf.xlu0
    %v317 = vpop.trf.xlu0
    %v318 = vpop.trf.xlu0
    %v319 = vpop.trf.xlu0
    %v320 = vpop.trf.xlu0
    %v321 = vpop.trf.xlu0
    %v322 = vpop.trf.xlu0
    %323 = vxpose.xlu0.c.b16.start [1/8] %v129, 128
    %324 = vxpose.xlu0.c.b16.cont [2/8] 0, 128
    %325 = vxpose.xlu0.c.b16.cont [3/8] 0, 128
    %326 = vxpose.xlu0.c.b16.cont [4/8] 0, 128
    %327 = vxpose.xlu0.c.b16.cont [5/8] 0, 128
    %328 = vxpose.xlu0.c.b16.cont [6/8] 0, 128
    %329 = vxpose.xlu0.c.b16.cont [7/8] 0, 128
    %330 = vxpose.xlu0.c.b16.end [8/8] 0, 128
    %v331 = vpop.trf.xlu0
    %v332 = vpop.trf.xlu0
    %v333 = vpop.trf.xlu0
    %v334 = vpop.trf.xlu0
    %v335 = vpop.trf.xlu0
    %v336 = vpop.trf.xlu0
    %v337 = vpop.trf.xlu0
    %v338 = vpop.trf.xlu0
    %v343 = vrot.slane %v315, 1
    %v344 = vrot.slane %v315, 2
    %v345 = vrot.slane %v315, 3
    %v346 = vrot.slane %v315, 4
    %v347 = vrot.slane %v315, 5
    %v348 = vrot.slane %v315, 6
    %v349 = vrot.slane %v315, 7
    %v350 = vrot.slane %v316, 1
    %v351 = vrot.slane %v316, 2
    %v352 = vrot.slane %v316, 3
    %v353 = vrot.slane %v316, 4
    %v354 = vrot.slane %v331, 1
    %v355 = vrot.slane %v331, 2
    %v356 = vrot.slane %v331, 3
    %v357 = vrot.slane %v331, 4
    %v358 = vrot.slane %v331, 5
    %v359 = vrot.slane %v331, 6
    %v360 = vrot.slane %v331, 7
    %v361 = vrot.slane %v332, 1
    %v362 = vrot.slane %v332, 2
    %v363 = vrot.slane %v332, 3
    %v364 = vrot.slane %v332, 4
    %366 = vst [vmem:[#allocation1] ss:$9 sm:$0xff] %v315
    %s368 = scalar_lea.vmem [#allocation1], 1
    %369 = vst [vmem:[%s368] ss:$9 sm:$0xff] %v343
    %s371 = scalar_lea.vmem [#allocation1], 2
    %372 = vst [vmem:[%s371] ss:$9 sm:$0xff] %v344
    %s374 = scalar_lea.vmem [#allocation1], 3
    %375 = vst [vmem:[%s374] ss:$9 sm:$0xff] %v345
    %s377 = scalar_lea.vmem [#allocation1], 4
    %378 = vst [vmem:[%s377] ss:$9 sm:$0xff] %v346
    %s380 = scalar_lea.vmem [#allocation1], 5
    %381 = vst [vmem:[%s380] ss:$9 sm:$0xff] %v347
    %s383 = scalar_lea.vmem [#allocation1], 6
    %384 = vst [vmem:[%s383] ss:$9 sm:$0xff] %v348
    %s386 = scalar_lea.vmem [#allocation1], 7
    %387 = vst [vmem:[%s386] ss:$9 sm:$0xff] %v349
    %v388 = vld [vmem:[#allocation1] sm:$0xff]
    %390 = vst [vmem:[#allocation1] ss:$9 sm:$0xff] %v316
    %392 = vst [vmem:[%s368] ss:$9 sm:$0xff] %v350
    %394 = vst [vmem:[%s371] ss:$9 sm:$0xff] %v351
    %396 = vst [vmem:[%s374] ss:$9 sm:$0xff] %v352
    %398 = vst [vmem:[%s377] ss:$9 sm:$0xff] %v353
    %400 = vst [vmem:[%s380] ss:$9 sm:$0xff] %v331
    %402 = vst [vmem:[%s383] ss:$9 sm:$0xff] %v354
    %404 = vst [vmem:[%s386] ss:$9 sm:$0xff] %v355
    %v405 = vld [vmem:[#allocation1] sm:$0xff]
    %407 = vst [vmem:[#allocation1] ss:$9 sm:$0xff] %v356
    %409 = vst [vmem:[%s368] ss:$9 sm:$0xff] %v357
    %411 = vst [vmem:[%s371] ss:$9 sm:$0xff] %v358
    %413 = vst [vmem:[%s374] ss:$9 sm:$0xff] %v359
    %415 = vst [vmem:[%s377] ss:$9 sm:$0xff] %v360
    %417 = vst [vmem:[%s380] ss:$9 sm:$0xff] %v332
    %419 = vst [vmem:[%s383] ss:$9 sm:$0xff] %v361
    %421 = vst [vmem:[%s386] ss:$9 sm:$0xff] %v362
    %v422 = vld [vmem:[#allocation1] sm:$0xff]
    %424 = vst [vmem:[#allocation1] ss:$9 sm:$0xff] %v363
    %426 = vst [vmem:[%s368] ss:$9 sm:$0xff] %v364
    %v427 = vld [vmem:[#allocation1] sm:$0xff]
    %v428 = vsel %vm266, %v388, 0
    %v430 = vsel %vm266, %v405, 0
    %v432 = vsel %vm266, %v422, 0
    %v434 = vsel %vm266, %v427, 0
    %v437 = vsel %vm275, %v130, 0
    %439 = vmatpush.bf16.msra.mxu0 0
    %440 = vmatpush.bf16.msra.mxu0 0
    %441 = vmatpush.bf16.msra.mxu0 0
    %442 = vmatpush.bf16.msra.mxu0 0
    %443 = vmatpush.bf16.msra.mxu0 0
    %444 = vmatpush.bf16.msra.mxu0 0
    %445 = vmatpush.bf16.msra.mxu0 0
    %446 = vmatpush.bf16.msra.mxu0 %v437
    %447 = vmatmul.bf16.gmra.mxu0 %v428
    %v448 = vpop.f32.mrf.mxu0
    %v449 = vadd.f32 %v289, %v448
    %v450 = vpop.f32.mrf.mxu0
    %v451 = vadd.f32 %v291, %v450
    %452 = vmatmul.bf16.gmra.mxu0 %v430
    %v453 = vpop.f32.mrf.mxu0
    %v454 = vadd.f32 %v294, %v453
    %v455 = vpop.f32.mrf.mxu0
    %v456 = vadd.f32 %v296, %v455
    %457 = vmatmul.bf16.gmra.mxu0 %v432
    %v458 = vpop.f32.mrf.mxu0
    %v459 = vadd.f32 %v299, %v458
    %v460 = vpop.f32.mrf.mxu0
    %v461 = vadd.f32 %v301, %v460
    %462 = vmatmul.bf16.gmra.mxu0 %v434
    %v463 = vpop.f32.mrf.mxu0
    %v464 = vadd.f32 %v304, %v463
    %v465 = vpop.f32.mrf.mxu0
    %466 = vdwg.mxu0
    %v474 = vrot.slane %v449, 2
    %v475 = vrot.slane %v449, 4
    %v476 = vrot.slane %v449, 6
    %v477 = vrot.slane %v451, 2
    %v478 = vrot.slane %v451, 4
    %v479 = vrot.slane %v451, 6
    %v480 = vrot.slane %v454, 2
    %v481 = vrot.slane %v454, 4
    %v482 = vrot.slane %v454, 6
    %v483 = vrot.slane %v456, 2
    %v484 = vrot.slane %v456, 4
    %v485 = vrot.slane %v456, 6
    %v486 = vrot.slane %v459, 2
    %v487 = vrot.slane %v459, 4
    %v488 = vrot.slane %v459, 6
    %v489 = vrot.slane %v461, 2
    %v490 = vrot.slane %v461, 4
    %v491 = vrot.slane %v461, 6
    %v492 = vrot.slane %v464, 2
    %s512 = scalar_lea.vmem [#allocation5], 8
    %v513 = vld [vmem:[%s512] sm:$0xf]
    %514 = vrot.lane.b32.xlu0 %v137, 126
    %v515 = vpop.permute.xlu0 %514
    %516 = vrot.lane.b32.xlu0 %v138, 126
    %v517 = vpop.permute.xlu0 %516
    %520 = vxpose.xlu0.c.b16.start [1/8] %v515, 128
    %521 = vxpose.xlu0.c.b16.cont [2/8] 0, 128
    %522 = vxpose.xlu0.c.b16.cont [3/8] 0, 128
    %523 = vxpose.xlu0.c.b16.cont [4/8] 0, 128
    %524 = vxpose.xlu0.c.b16.cont [5/8] 0, 128
    %525 = vxpose.xlu0.c.b16.cont [6/8] 0, 128
    %526 = vxpose.xlu0.c.b16.cont [7/8] 0, 128
    %527 = vxpose.xlu0.c.b16.end [8/8] 0, 128
    %v528 = vpop.trf.xlu0
    %v529 = vpop.trf.xlu0
    %v530 = vpop.trf.xlu0
    %v531 = vpop.trf.xlu0
    %v532 = vpop.trf.xlu0
    %v533 = vpop.trf.xlu0
    %v534 = vpop.trf.xlu0
    %v535 = vpop.trf.xlu0
    %536 = vxpose.xlu0.c.b16.start [1/8] %v517, 128
    %537 = vxpose.xlu0.c.b16.cont [2/8] 0, 128
    %538 = vxpose.xlu0.c.b16.cont [3/8] 0, 128
    %539 = vxpose.xlu0.c.b16.cont [4/8] 0, 128
    %540 = vxpose.xlu0.c.b16.cont [5/8] 0, 128
    %541 = vxpose.xlu0.c.b16.cont [6/8] 0, 128
    %542 = vxpose.xlu0.c.b16.cont [7/8] 0, 128
    %543 = vxpose.xlu0.c.b16.end [8/8] 0, 128
    %v544 = vpop.trf.xlu0
    %v545 = vpop.trf.xlu0
    %v546 = vpop.trf.xlu0
    %v547 = vpop.trf.xlu0
    %v548 = vpop.trf.xlu0
    %v549 = vpop.trf.xlu0
    %v550 = vpop.trf.xlu0
    %v551 = vpop.trf.xlu0
    %v556 = vrot.slane %v528, 1
    %v557 = vrot.slane %v528, 2
    %v558 = vrot.slane %v528, 3
    %v559 = vrot.slane %v528, 4
    %v560 = vrot.slane %v528, 5
    %v561 = vrot.slane %v528, 6
    %v562 = vrot.slane %v528, 7
    %v563 = vrot.slane %v529, 1
    %v564 = vrot.slane %v529, 2
    %v565 = vrot.slane %v529, 3
    %v566 = vrot.slane %v529, 4
    %v567 = vrot.slane %v544, 1
    %v568 = vrot.slane %v544, 2
    %v569 = vrot.slane %v544, 3
    %v570 = vrot.slane %v544, 4
    %v571 = vrot.slane %v544, 5
    %v572 = vrot.slane %v544, 6
    %v573 = vrot.slane %v544, 7
    %v574 = vrot.slane %v545, 1
    %v575 = vrot.slane %v545, 2
    %v576 = vrot.slane %v545, 3
    %v577 = vrot.slane %v545, 4
    %579 = vst [vmem:[#allocation1] ss:$9 sm:$0xff] %v528
    %s581 = scalar_lea.vmem [#allocation1], 1
    %582 = vst [vmem:[%s581] ss:$9 sm:$0xff] %v556
    %s584 = scalar_lea.vmem [#allocation1], 2
    %585 = vst [vmem:[%s584] ss:$9 sm:$0xff] %v557
    %s587 = scalar_lea.vmem [#allocation1], 3
    %588 = vst [vmem:[%s587] ss:$9 sm:$0xff] %v558
    %s590 = scalar_lea.vmem [#allocation1], 4
    %591 = vst [vmem:[%s590] ss:$9 sm:$0xff] %v559
    %s593 = scalar_lea.vmem [#allocation1], 5
    %594 = vst [vmem:[%s593] ss:$9 sm:$0xff] %v560
    %s596 = scalar_lea.vmem [#allocation1], 6
    %597 = vst [vmem:[%s596] ss:$9 sm:$0xff] %v561
    %s599 = scalar_lea.vmem [#allocation1], 7
    %600 = vst [vmem:[%s599] ss:$9 sm:$0xff] %v562
    %v601 = vld [vmem:[#allocation1] sm:$0xff]
    %603 = vst [vmem:[#allocation1] ss:$9 sm:$0xff] %v529
    %605 = vst [vmem:[%s581] ss:$9 sm:$0xff] %v563
    %607 = vst [vmem:[%s584] ss:$9 sm:$0xff] %v564
    %609 = vst [vmem:[%s587] ss:$9 sm:$0xff] %v565
    %611 = vst [vmem:[%s590] ss:$9 sm:$0xff] %v566
    %613 = vst [vmem:[%s593] ss:$9 sm:$0xff] %v544
    %615 = vst [vmem:[%s596] ss:$9 sm:$0xff] %v567
    %617 = vst [vmem:[%s599] ss:$9 sm:$0xff] %v568
    %v618 = vld [vmem:[#allocation1] sm:$0xff]
    %620 = vst [vmem:[#allocation1] ss:$9 sm:$0xff] %v569
    %622 = vst [vmem:[%s581] ss:$9 sm:$0xff] %v570
    %624 = vst [vmem:[%s584] ss:$9 sm:$0xff] %v571
    %626 = vst [vmem:[%s587] ss:$9 sm:$0xff] %v572
    %628 = vst [vmem:[%s590] ss:$9 sm:$0xff] %v573
    %630 = vst [vmem:[%s593] ss:$9 sm:$0xff] %v545
    %632 = vst [vmem:[%s596] ss:$9 sm:$0xff] %v574
    %634 = vst [vmem:[%s599] ss:$9 sm:$0xff] %v575
    %v635 = vld [vmem:[#allocation1] sm:$0xff]
    %637 = vst [vmem:[#allocation1] ss:$9 sm:$0xff] %v576
    %639 = vst [vmem:[%s581] ss:$9 sm:$0xff] %v577
    %v640 = vld [vmem:[#allocation1] sm:$0xff]
    %v641 = vsel %vm266, %v601, 0
    %v643 = vsel %vm266, %v618, 0
    %v645 = vsel %vm266, %v635, 0
    %v647 = vsel %vm266, %v640, 0
    %v650 = vsel %vm275, %v513, 0
    %652 = vmatpush.bf16.msra.mxu0 0
    %653 = vmatpush.bf16.msra.mxu0 0
    %654 = vmatpush.bf16.msra.mxu0 0
    %655 = vmatpush.bf16.msra.mxu0 0
    %656 = vmatpush.bf16.msra.mxu0 0
    %657 = vmatpush.bf16.msra.mxu0 0
    %658 = vmatpush.bf16.msra.mxu0 0
    %659 = vmatpush.bf16.msra.mxu0 %v650
    %660 = vmatmul.bf16.gmra.mxu0 %v641
    %v661 = vpop.f32.mrf.mxu0
    %v662 = vadd.f32 0.0, %v661
    %v663 = vpop.f32.mrf.mxu0
    %v664 = vadd.f32 0.0, %v663
    %665 = vmatmul.bf16.gmra.mxu0 %v643
    %v666 = vpop.f32.mrf.mxu0
    %v667 = vadd.f32 0.0, %v666
    %v668 = vpop.f32.mrf.mxu0
    %v669 = vadd.f32 0.0, %v668
    %670 = vmatmul.bf16.gmra.mxu0 %v645
    %v671 = vpop.f32.mrf.mxu0
    %v672 = vadd.f32 0.0, %v671
    %v673 = vpop.f32.mrf.mxu0
    %v674 = vadd.f32 0.0, %v673
    %675 = vmatmul.bf16.gmra.mxu0 %v647
    %v676 = vpop.f32.mrf.mxu0
    %v677 = vadd.f32 0.0, %v676
    %v678 = vpop.f32.mrf.mxu0
    %679 = vdwg.mxu0
    %v687 = vrot.slane %v662, 2
    %v688 = vrot.slane %v662, 4
    %v689 = vrot.slane %v662, 6
    %v690 = vrot.slane %v664, 2
    %v691 = vrot.slane %v664, 4
    %v692 = vrot.slane %v664, 6
    %v693 = vrot.slane %v667, 2
    %v694 = vrot.slane %v667, 4
    %v695 = vrot.slane %v667, 6
    %v696 = vrot.slane %v669, 2
    %v697 = vrot.slane %v669, 4
    %v698 = vrot.slane %v669, 6
    %v699 = vrot.slane %v672, 2
    %v700 = vrot.slane %v672, 4
    %v701 = vrot.slane %v672, 6
    %v702 = vrot.slane %v674, 2
    %v703 = vrot.slane %v674, 4
    %v704 = vrot.slane %v674, 6
    %v705 = vrot.slane %v677, 2
    %v725 = vadd.f32 %v449, %v662
    %v726 = vadd.f32 %v474, %v687
    %v727 = vadd.f32 %v475, %v688
    %v728 = vadd.f32 %v476, %v689
    %v729 = vadd.f32 %v451, %v664
    %v730 = vadd.f32 %v477, %v690
    %v731 = vadd.f32 %v478, %v691
    %v732 = vadd.f32 %v479, %v692
    %v733 = vadd.f32 %v454, %v667
    %v734 = vadd.f32 %v480, %v693
    %v735 = vadd.f32 %v481, %v694
    %v736 = vadd.f32 %v482, %v695
    %v737 = vadd.f32 %v456, %v669
    %v738 = vadd.f32 %v483, %v696
    %v739 = vadd.f32 %v484, %v697
    %v740 = vadd.f32 %v485, %v698
    %v741 = vadd.f32 %v459, %v672
    %v742 = vadd.f32 %v486, %v699
    %v743 = vadd.f32 %v487, %v700
    %v744 = vadd.f32 %v488, %v701
    %v745 = vadd.f32 %v461, %v674
    %v746 = vadd.f32 %v489, %v702
    %v747 = vadd.f32 %v490, %v703
    %v748 = vadd.f32 %v491, %v704
    %v749 = vadd.f32 %v464, %v677
    %v750 = vadd.f32 %v492, %v705
    %s751 = scalar_lea.vmem [#allocation5], 12
    %v752 = vld [vmem:[%s751] sm:$0xf]
    %753 = vrot.lane.b32.xlu0 %v137, 125
    %v754 = vpop.permute.xlu0 %753
    %755 = vrot.lane.b32.xlu0 %v138, 125
    %v756 = vpop.permute.xlu0 %755
    %759 = vxpose.xlu0.c.b16.start [1/8] %v754, 128
    %760 = vxpose.xlu0.c.b16.cont [2/8] 0, 128
    %761 = vxpose.xlu0.c.b16.cont [3/8] 0, 128
    %762 = vxpose.xlu0.c.b16.cont [4/8] 0, 128
    %763 = vxpose.xlu0.c.b16.cont [5/8] 0, 128
    %764 = vxpose.xlu0.c.b16.cont [6/8] 0, 128
    %765 = vxpose.xlu0.c.b16.cont [7/8] 0, 128
    %766 = vxpose.xlu0.c.b16.end [8/8] 0, 128
    %v767 = vpop.trf.xlu0
    %v768 = vpop.trf.xlu0
    %v769 = vpop.trf.xlu0
    %v770 = vpop.trf.xlu0
    %v771 = vpop.trf.xlu0
    %v772 = vpop.trf.xlu0
    %v773 = vpop.trf.xlu0
    %v774 = vpop.trf.xlu0
    %775 = vxpose.xlu0.c.b16.start [1/8] %v756, 128
    %776 = vxpose.xlu0.c.b16.cont [2/8] 0, 128
    %777 = vxpose.xlu0.c.b16.cont [3/8] 0, 128
    %778 = vxpose.xlu0.c.b16.cont [4/8] 0, 128
    %779 = vxpose.xlu0.c.b16.cont [5/8] 0, 128
    %780 = vxpose.xlu0.c.b16.cont [6/8] 0, 128
    %781 = vxpose.xlu0.c.b16.cont [7/8] 0, 128
    %782 = vxpose.xlu0.c.b16.end [8/8] 0, 128
    %v783 = vpop.trf.xlu0
    %v784 = vpop.trf.xlu0
    %v785 = vpop.trf.xlu0
    %v786 = vpop.trf.xlu0
    %v787 = vpop.trf.xlu0
    %v788 = vpop.trf.xlu0
    %v789 = vpop.trf.xlu0
    %v790 = vpop.trf.xlu0
    %v795 = vrot.slane %v767, 1
    %v796 = vrot.slane %v767, 2
    %v797 = vrot.slane %v767, 3
    %v798 = vrot.slane %v767, 4
    %v799 = vrot.slane %v767, 5
    %v800 = vrot.slane %v767, 6
    %v801 = vrot.slane %v767, 7
    %v802 = vrot.slane %v768, 1
    %v803 = vrot.slane %v768, 2
    %v804 = vrot.slane %v768, 3
    %v805 = vrot.slane %v768, 4
    %v806 = vrot.slane %v783, 1
    %v807 = vrot.slane %v783, 2
    %v808 = vrot.slane %v783, 3
    %v809 = vrot.slane %v783, 4
    %v810 = vrot.slane %v783, 5
    %v811 = vrot.slane %v783, 6
    %v812 = vrot.slane %v783, 7
    %v813 = vrot.slane %v784, 1
    %v814 = vrot.slane %v784, 2
    %v815 = vrot.slane %v784, 3
    %v816 = vrot.slane %v784, 4
    %818 = vst [vmem:[#allocation1] ss:$9 sm:$0xff] %v767
    %s820 = scalar_lea.vmem [#allocation1], 1
    %821 = vst [vmem:[%s820] ss:$9 sm:$0xff] %v795
    %s823 = scalar_lea.vmem [#allocation1], 2
    %824 = vst [vmem:[%s823] ss:$9 sm:$0xff] %v796
    %s826 = scalar_lea.vmem [#allocation1], 3
    %827 = vst [vmem:[%s826] ss:$9 sm:$0xff] %v797
    %s829 = scalar_lea.vmem [#allocation1], 4
    %830 = vst [vmem:[%s829] ss:$9 sm:$0xff] %v798
    %s832 = scalar_lea.vmem [#allocation1], 5
    %833 = vst [vmem:[%s832] ss:$9 sm:$0xff] %v799
    %s835 = scalar_lea.vmem [#allocation1], 6
    %836 = vst [vmem:[%s835] ss:$9 sm:$0xff] %v800
    %s838 = scalar_lea.vmem [#allocation1], 7
    %839 = vst [vmem:[%s838] ss:$9 sm:$0xff] %v801
    %v840 = vld [vmem:[#allocation1] sm:$0xff]
    %842 = vst [vmem:[#allocation1] ss:$9 sm:$0xff] %v768
    %844 = vst [vmem:[%s820] ss:$9 sm:$0xff] %v802
    %846 = vst [vmem:[%s823] ss:$9 sm:$0xff] %v803
    %848 = vst [vmem:[%s826] ss:$9 sm:$0xff] %v804
    %850 = vst [vmem:[%s829] ss:$9 sm:$0xff] %v805
    %852 = vst [vmem:[%s832] ss:$9 sm:$0xff] %v783
    %854 = vst [vmem:[%s835] ss:$9 sm:$0xff] %v806
    %856 = vst [vmem:[%s838] ss:$9 sm:$0xff] %v807
    %v857 = vld [vmem:[#allocation1] sm:$0xff]
    %859 = vst [vmem:[#allocation1] ss:$9 sm:$0xff] %v808
    %861 = vst [vmem:[%s820] ss:$9 sm:$0xff] %v809
    %863 = vst [vmem:[%s823] ss:$9 sm:$0xff] %v810
    %865 = vst [vmem:[%s826] ss:$9 sm:$0xff] %v811
    %867 = vst [vmem:[%s829] ss:$9 sm:$0xff] %v812
    %869 = vst [vmem:[%s832] ss:$9 sm:$0xff] %v784
    %871 = vst [vmem:[%s835] ss:$9 sm:$0xff] %v813
    %873 = vst [vmem:[%s838] ss:$9 sm:$0xff] %v814
    %v874 = vld [vmem:[#allocation1] sm:$0xff]
    %876 = vst [vmem:[#allocation1] ss:$9 sm:$0xff] %v815
    %878 = vst [vmem:[%s820] ss:$9 sm:$0xff] %v816
    %v879 = vld [vmem:[#allocation1] sm:$0xff]
    %v880 = vsel %vm266, %v840, 0
    %v882 = vsel %vm266, %v857, 0
    %v884 = vsel %vm266, %v874, 0
    %v886 = vsel %vm266, %v879, 0
    %v889 = vsel %vm275, %v752, 0
    %891 = vmatpush.bf16.msra.mxu0 0
    %892 = vmatpush.bf16.msra.mxu0 0
    %893 = vmatpush.bf16.msra.mxu0 0
    %894 = vmatpush.bf16.msra.mxu0 0
    %895 = vmatpush.bf16.msra.mxu0 0
    %896 = vmatpush.bf16.msra.mxu0 0
    %897 = vmatpush.bf16.msra.mxu0 0
    %898 = vmatpush.bf16.msra.mxu0 %v889
    %899 = vmatmul.bf16.gmra.mxu0 %v880
    %v900 = vpop.f32.mrf.mxu0
    %v901 = vadd.f32 0.0, %v900
    %v902 = vpop.f32.mrf.mxu0
    %v903 = vadd.f32 0.0, %v902
    %904 = vmatmul.bf16.gmra.mxu0 %v882
    %v905 = vpop.f32.mrf.mxu0
    %v906 = vadd.f32 0.0, %v905
    %v907 = vpop.f32.mrf.mxu0
    %v908 = vadd.f32 0.0, %v907
    %909 = vmatmul.bf16.gmra.mxu0 %v884
    %v910 = vpop.f32.mrf.mxu0
    %v911 = vadd.f32 0.0, %v910
    %v912 = vpop.f32.mrf.mxu0
    %v913 = vadd.f32 0.0, %v912
    %914 = vmatmul.bf16.gmra.mxu0 %v886
    %v915 = vpop.f32.mrf.mxu0
    %v916 = vadd.f32 0.0, %v915
    %v917 = vpop.f32.mrf.mxu0
    %918 = vdwg.mxu0
    %v926 = vrot.slane %v901, 2
    %v927 = vrot.slane %v901, 4
    %v928 = vrot.slane %v901, 6
    %v929 = vrot.slane %v903, 2
    %v930 = vrot.slane %v903, 4
    %v931 = vrot.slane %v903, 6
    %v932 = vrot.slane %v906, 2
    %v933 = vrot.slane %v906, 4
    %v934 = vrot.slane %v906, 6
    %v935 = vrot.slane %v908, 2
    %v936 = vrot.slane %v908, 4
    %v937 = vrot.slane %v908, 6
    %v938 = vrot.slane %v911, 2
    %v939 = vrot.slane %v911, 4
    %v940 = vrot.slane %v911, 6
    %v941 = vrot.slane %v913, 2
    %v942 = vrot.slane %v913, 4
    %v943 = vrot.slane %v913, 6
    %v944 = vrot.slane %v916, 2
    %v964 = vadd.f32 %v725, %v901
    %v965 = vadd.f32 %v726, %v926
    %v966 = vadd.f32 %v727, %v927
    %v967 = vadd.f32 %v728, %v928
    %v968 = vadd.f32 %v729, %v903
    %v969 = vadd.f32 %v730, %v929
    %v970 = vadd.f32 %v731, %v930
    %v971 = vadd.f32 %v732, %v931
    %v972 = vadd.f32 %v733, %v906
    %v973 = vadd.f32 %v734, %v932
    %v974 = vadd.f32 %v735, %v933
    %v975 = vadd.f32 %v736, %v934
    %v976 = vadd.f32 %v737, %v908
    %v977 = vadd.f32 %v738, %v935
    %v978 = vadd.f32 %v739, %v936
    %v979 = vadd.f32 %v740, %v937
    %v980 = vadd.f32 %v741, %v911
    %v981 = vadd.f32 %v742, %v938
    %v982 = vadd.f32 %v743, %v939
    %v983 = vadd.f32 %v744, %v940
    %v984 = vadd.f32 %v745, %v913
    %v985 = vadd.f32 %v746, %v941
    %v986 = vadd.f32 %v747, %v942
    %v987 = vadd.f32 %v748, %v943
    %v988 = vadd.f32 %v749, %v916
    %v989 = vadd.f32 %v750, %v944
    %s990 = scalar_lea.vmem [#allocation5], 16
    %v991 = vld [vmem:[%s990] sm:$0xf]
    %992 = vrot.lane.b32.xlu0 %v137, 124
    %v993 = vpop.permute.xlu0 %992
    %994 = vrot.lane.b32.xlu0 %v138, 124
    %v995 = vpop.permute.xlu0 %994
    %998 = vxpose.xlu0.c.b16.start [1/8] %v993, 128
    %999 = vxpose.xlu0.c.b16.cont [2/8] 0, 128
    %1000 = vxpose.xlu0.c.b16.cont [3/8] 0, 128
    %1001 = vxpose.xlu0.c.b16.cont [4/8] 0, 128
    %1002 = vxpose.xlu0.c.b16.cont [5/8] 0, 128
    %1003 = vxpose.xlu0.c.b16.cont [6/8] 0, 128
    %1004 = vxpose.xlu0.c.b16.cont [7/8] 0, 128
    %1005 = vxpose.xlu0.c.b16.end [8/8] 0, 128
    %v1006 = vpop.trf.xlu0
    %v1007 = vpop.trf.xlu0
    %v1008 = vpop.trf.xlu0
    %v1009 = vpop.trf.xlu0
    %v1010 = vpop.trf.xlu0
    %v1011 = vpop.trf.xlu0
    %v1012 = vpop.trf.xlu0
    %v1013 = vpop.trf.xlu0
    %1014 = vxpose.xlu0.c.b16.start [1/8] %v995, 128
    %1015 = vxpose.xlu0.c.b16.cont [2/8] 0, 128
    %1016 = vxpose.xlu0.c.b16.cont [3/8] 0, 128
    %1017 = vxpose.xlu0.c.b16.cont [4/8] 0, 128
    %1018 = vxpose.xlu0.c.b16.cont [5/8] 0, 128
    %1019 = vxpose.xlu0.c.b16.cont [6/8] 0, 128
    %1020 = vxpose.xlu0.c.b16.cont [7/8] 0, 128
    %1021 = vxpose.xlu0.c.b16.end [8/8] 0, 128
    %v1022 = vpop.trf.xlu0
    %v1023 = vpop.trf.xlu0
    %v1024 = vpop.trf.xlu0
    %v1025 = vpop.trf.xlu0
    %v1026 = vpop.trf.xlu0
    %v1027 = vpop.trf.xlu0
    %v1028 = vpop.trf.xlu0
    %v1029 = vpop.trf.xlu0
    %v1034 = vrot.slane %v1006, 1
    %v1035 = vrot.slane %v1006, 2
    %v1036 = vrot.slane %v1006, 3
    %v1037 = vrot.slane %v1006, 4
    %v1038 = vrot.slane %v1006, 5
    %v1039 = vrot.slane %v1006, 6
    %v1040 = vrot.slane %v1006, 7
    %v1041 = vrot.slane %v1007, 1
    %v1042 = vrot.slane %v1007, 2
    %v1043 = vrot.slane %v1007, 3
    %v1044 = vrot.slane %v1007, 4
    %v1045 = vrot.slane %v1022, 1
    %v1046 = vrot.slane %v1022, 2
    %v1047 = vrot.slane %v1022, 3
    %v1048 = vrot.slane %v1022, 4
    %v1049 = vrot.slane %v1022, 5
    %v1050 = vrot.slane %v1022, 6
    %v1051 = vrot.slane %v1022, 7
    %v1052 = vrot.slane %v1023, 1
    %v1053 = vrot.slane %v1023, 2
    %v1054 = vrot.slane %v1023, 3
    %v1055 = vrot.slane %v1023, 4
    %1057 = vst [vmem:[#allocation1] ss:$9 sm:$0xff] %v1006
    %s1059 = scalar_lea.vmem [#allocation1], 1
    %1060 = vst [vmem:[%s1059] ss:$9 sm:$0xff] %v1034
    %s1062 = scalar_lea.vmem [#allocation1], 2
    %1063 = vst [vmem:[%s1062] ss:$9 sm:$0xff] %v1035
    %s1065 = scalar_lea.vmem [#allocation1], 3
    %1066 = vst [vmem:[%s1065] ss:$9 sm:$0xff] %v1036
    %s1068 = scalar_lea.vmem [#allocation1], 4
    %1069 = vst [vmem:[%s1068] ss:$9 sm:$0xff] %v1037
    %s1071 = scalar_lea.vmem [#allocation1], 5
    %1072 = vst [vmem:[%s1071] ss:$9 sm:$0xff] %v1038
    %s1074 = scalar_lea.vmem [#allocation1], 6
    %1075 = vst [vmem:[%s1074] ss:$9 sm:$0xff] %v1039
    %s1077 = scalar_lea.vmem [#allocation1], 7
    %1078 = vst [vmem:[%s1077] ss:$9 sm:$0xff] %v1040
    %v1079 = vld [vmem:[#allocation1] sm:$0xff]
    %1081 = vst [vmem:[#allocation1] ss:$9 sm:$0xff] %v1007
    %1083 = vst [vmem:[%s1059] ss:$9 sm:$0xff] %v1041
    %1085 = vst [vmem:[%s1062] ss:$9 sm:$0xff] %v1042
    %1087 = vst [vmem:[%s1065] ss:$9 sm:$0xff] %v1043
    %1089 = vst [vmem:[%s1068] ss:$9 sm:$0xff] %v1044
    %1091 = vst [vmem:[%s1071] ss:$9 sm:$0xff] %v1022
    %1093 = vst [vmem:[%s1074] ss:$9 sm:$0xff] %v1045
    %1095 = vst [vmem:[%s1077] ss:$9 sm:$0xff] %v1046
    %v1096 = vld [vmem:[#allocation1] sm:$0xff]
    %1098 = vst [vmem:[#allocation1] ss:$9 sm:$0xff] %v1047
    %1100 = vst [vmem:[%s1059] ss:$9 sm:$0xff] %v1048
    %1102 = vst [vmem:[%s1062] ss:$9 sm:$0xff] %v1049
    %1104 = vst [vmem:[%s1065] ss:$9 sm:$0xff] %v1050
    %1106 = vst [vmem:[%s1068] ss:$9 sm:$0xff] %v1051
    %1108 = vst [vmem:[%s1071] ss:$9 sm:$0xff] %v1023
    %1110 = vst [vmem:[%s1074] ss:$9 sm:$0xff] %v1052
    %1112 = vst [vmem:[%s1077] ss:$9 sm:$0xff] %v1053
    %v1113 = vld [vmem:[#allocation1] sm:$0xff]
    %1115 = vst [vmem:[#allocation1] ss:$9 sm:$0xff] %v1054
    %1117 = vst [vmem:[%s1059] ss:$9 sm:$0xff] %v1055
    %v1118 = vld [vmem:[#allocation1] sm:$0xff]
    %v1119 = vsel %vm266, %v1079, 0
    %v1121 = vsel %vm266, %v1096, 0
    %v1123 = vsel %vm266, %v1113, 0
    %v1125 = vsel %vm266, %v1118, 0
    %v1128 = vsel %vm275, %v991, 0
    %1130 = vmatpush.bf16.msra.mxu0 0
    %1131 = vmatpush.bf16.msra.mxu0 0
    %1132 = vmatpush.bf16.msra.mxu0 0
    %1133 = vmatpush.bf16.msra.mxu0 0
    %1134 = vmatpush.bf16.msra.mxu0 0
    %1135 = vmatpush.bf16.msra.mxu0 0
    %1136 = vmatpush.bf16.msra.mxu0 0
    %1137 = vmatpush.bf16.msra.mxu0 %v1128
    %1138 = vmatmul.bf16.gmra.mxu0 %v1119
    %v1139 = vpop.f32.mrf.mxu0
    %v1140 = vadd.f32 0.0, %v1139
    %v1141 = vpop.f32.mrf.mxu0
    %v1142 = vadd.f32 0.0, %v1141
    %1143 = vmatmul.bf16.gmra.mxu0 %v1121
    %v1144 = vpop.f32.mrf.mxu0
    %v1145 = vadd.f32 0.0, %v1144
    %v1146 = vpop.f32.mrf.mxu0
    %v1147 = vadd.f32 0.0, %v1146
    %1148 = vmatmul.bf16.gmra.mxu0 %v1123
    %v1149 = vpop.f32.mrf.mxu0
    %v1150 = vadd.f32 0.0, %v1149
    %v1151 = vpop.f32.mrf.mxu0
    %v1152 = vadd.f32 0.0, %v1151
    %1153 = vmatmul.bf16.gmra.mxu0 %v1125
    %v1154 = vpop.f32.mrf.mxu0
    %v1155 = vadd.f32 0.0, %v1154
    %v1156 = vpop.f32.mrf.mxu0
    %1157 = vdwg.mxu0
    %v1165 = vrot.slane %v1140, 2
    %v1166 = vrot.slane %v1140, 4
    %v1167 = vrot.slane %v1140, 6
    %v1168 = vrot.slane %v1142, 2
    %v1169 = vrot.slane %v1142, 4
    %v1170 = vrot.slane %v1142, 6
    %v1171 = vrot.slane %v1145, 2
    %v1172 = vrot.slane %v1145, 4
    %v1173 = vrot.slane %v1145, 6
    %v1174 = vrot.slane %v1147, 2
    %v1175 = vrot.slane %v1147, 4
    %v1176 = vrot.slane %v1147, 6
    %v1177 = vrot.slane %v1150, 2
    %v1178 = vrot.slane %v1150, 4
    %v1179 = vrot.slane %v1150, 6
    %v1180 = vrot.slane %v1152, 2
    %v1181 = vrot.slane %v1152, 4
    %v1182 = vrot.slane %v1152, 6
    %v1183 = vrot.slane %v1155, 2
    %v1203 = vadd.f32 %v964, %v1140
    %v1204 = vadd.f32 %v965, %v1165
    %v1205 = vadd.f32 %v966, %v1166
    %v1206 = vadd.f32 %v967, %v1167
    %v1207 = vadd.f32 %v968, %v1142
    %v1208 = vadd.f32 %v969, %v1168
    %v1209 = vadd.f32 %v970, %v1169
    %v1210 = vadd.f32 %v971, %v1170
    %v1211 = vadd.f32 %v972, %v1145
    %v1212 = vadd.f32 %v973, %v1171
    %v1213 = vadd.f32 %v974, %v1172
    %v1214 = vadd.f32 %v975, %v1173
    %v1215 = vadd.f32 %v976, %v1147
    %v1216 = vadd.f32 %v977, %v1174
    %v1217 = vadd.f32 %v978, %v1175
    %v1218 = vadd.f32 %v979, %v1176
    %v1219 = vadd.f32 %v980, %v1150
    %v1220 = vadd.f32 %v981, %v1177
    %v1221 = vadd.f32 %v982, %v1178
    %v1222 = vadd.f32 %v983, %v1179
    %v1223 = vadd.f32 %v984, %v1152
    %v1224 = vadd.f32 %v985, %v1180
    %v1225 = vadd.f32 %v986, %v1181
    %v1226 = vadd.f32 %v987, %v1182
    %v1227 = vadd.f32 %v988, %v1155
    %v1228 = vadd.f32 %v989, %v1183
    %s1229 = scalar_lea.vmem [#allocation5], 20
    %v1230 = vld [vmem:[%s1229] sm:$0xf]
    %1231 = vrot.lane.b32.xlu0 %v137, 123
    %v1232 = vpop.permute.xlu0 %1231
    %1233 = vrot.lane.b32.xlu0 %v138, 123
    %v1234 = vpop.permute.xlu0 %1233
    %1237 = vxpose.xlu0.c.b16.start [1/8] %v1232, 128
    %1238 = vxpose.xlu0.c.b16.cont [2/8] 0, 128
    %1239 = vxpose.xlu0.c.b16.cont [3/8] 0, 128
    %1240 = vxpose.xlu0.c.b16.cont [4/8] 0, 128
    %1241 = vxpose.xlu0.c.b16.cont [5/8] 0, 128
    %1242 = vxpose.xlu0.c.b16.cont [6/8] 0, 128
    %1243 = vxpose.xlu0.c.b16.cont [7/8] 0, 128
    %1244 = vxpose.xlu0.c.b16.end [8/8] 0, 128
    %v1245 = vpop.trf.xlu0
    %v1246 = vpop.trf.xlu0
    %v1247 = vpop.trf.xlu0
    %v1248 = vpop.trf.xlu0
    %v1249 = vpop.trf.xlu0
    %v1250 = vpop.trf.xlu0
    %v1251 = vpop.trf.xlu0
    %v1252 = vpop.trf.xlu0
    %1253 = vxpose.xlu0.c.b16.start [1/8] %v1234, 128
    %1254 = vxpose.xlu0.c.b16.cont [2/8] 0, 128
    %1255 = vxpose.xlu0.c.b16.cont [3/8] 0, 128
    %1256 = vxpose.xlu0.c.b16.cont [4/8] 0, 128
    %1257 = vxpose.xlu0.c.b16.cont [5/8] 0, 128
    %1258 = vxpose.xlu0.c.b16.cont [6/8] 0, 128
    %1259 = vxpose.xlu0.c.b16.cont [7/8] 0, 128
    %1260 = vxpose.xlu0.c.b16.end [8/8] 0, 128
    %v1261 = vpop.trf.xlu0
    %v1262 = vpop.trf.xlu0
    %v1263 = vpop.trf.xlu0
    %v1264 = vpop.trf.xlu0
    %v1265 = vpop.trf.xlu0
    %v1266 = vpop.trf.xlu0
    %v1267 = vpop.trf.xlu0
    %v1268 = vpop.trf.xlu0
    %v1273 = vrot.slane %v1245, 1
    %v1274 = vrot.slane %v1245, 2
    %v1275 = vrot.slane %v1245, 3
    %v1276 = vrot.slane %v1245, 4
    %v1277 = vrot.slane %v1245, 5
    %v1278 = vrot.slane %v1245, 6
    %v1279 = vrot.slane %v1245, 7
    %v1280 = vrot.slane %v1246, 1
    %v1281 = vrot.slane %v1246, 2
    %v1282 = vrot.slane %v1246, 3
    %v1283 = vrot.slane %v1246, 4
    %v1284 = vrot.slane %v1261, 1
    %v1285 = vrot.slane %v1261, 2
    %v1286 = vrot.slane %v1261, 3
    %v1287 = vrot.slane %v1261, 4
    %v1288 = vrot.slane %v1261, 5
    %v1289 = vrot.slane %v1261, 6
    %v1290 = vrot.slane %v1261, 7
    %v1291 = vrot.slane %v1262, 1
    %v1292 = vrot.slane %v1262, 2
    %v1293 = vrot.slane %v1262, 3
    %v1294 = vrot.slane %v1262, 4
    %1296 = vst [vmem:[#allocation1] ss:$9 sm:$0xff] %v1245
    %s1298 = scalar_lea.vmem [#allocation1], 1
    %1299 = vst [vmem:[%s1298] ss:$9 sm:$0xff] %v1273
    %s1301 = scalar_lea.vmem [#allocation1], 2
    %1302 = vst [vmem:[%s1301] ss:$9 sm:$0xff] %v1274
    %s1304 = scalar_lea.vmem [#allocation1], 3
    %1305 = vst [vmem:[%s1304] ss:$9 sm:$0xff] %v1275
    %s1307 = scalar_lea.vmem [#allocation1], 4
    %1308 = vst [vmem:[%s1307] ss:$9 sm:$0xff] %v1276
    %s1310 = scalar_lea.vmem [#allocation1], 5
    %1311 = vst [vmem:[%s1310] ss:$9 sm:$0xff] %v1277
    %s1313 = scalar_lea.vmem [#allocation1], 6
    %1314 = vst [vmem:[%s1313] ss:$9 sm:$0xff] %v1278
    %s1316 = scalar_lea.vmem [#allocation1], 7
    %1317 = vst [vmem:[%s1316] ss:$9 sm:$0xff] %v1279
    %v1318 = vld [vmem:[#allocation1] sm:$0xff]
    %1320 = vst [vmem:[#allocation1] ss:$9 sm:$0xff] %v1246
    %1322 = vst [vmem:[%s1298] ss:$9 sm:$0xff] %v1280
    %1324 = vst [vmem:[%s1301] ss:$9 sm:$0xff] %v1281
    %1326 = vst [vmem:[%s1304] ss:$9 sm:$0xff] %v1282
    %1328 = vst [vmem:[%s1307] ss:$9 sm:$0xff] %v1283
    %1330 = vst [vmem:[%s1310] ss:$9 sm:$0xff] %v1261
    %1332 = vst [vmem:[%s1313] ss:$9 sm:$0xff] %v1284
    %1334 = vst [vmem:[%s1316] ss:$9 sm:$0xff] %v1285
    %v1335 = vld [vmem:[#allocation1] sm:$0xff]
    %1337 = vst [vmem:[#allocation1] ss:$9 sm:$0xff] %v1286
    %1339 = vst [vmem:[%s1298] ss:$9 sm:$0xff] %v1287
    %1341 = vst [vmem:[%s1301] ss:$9 sm:$0xff] %v1288
    %1343 = vst [vmem:[%s1304] ss:$9 sm:$0xff] %v1289
    %1345 = vst [vmem:[%s1307] ss:$9 sm:$0xff] %v1290
    %1347 = vst [vmem:[%s1310] ss:$9 sm:$0xff] %v1262
    %1349 = vst [vmem:[%s1313] ss:$9 sm:$0xff] %v1291
    %1351 = vst [vmem:[%s1316] ss:$9 sm:$0xff] %v1292
    %v1352 = vld [vmem:[#allocation1] sm:$0xff]
    %1354 = vst [vmem:[#allocation1] ss:$9 sm:$0xff] %v1293
    %1356 = vst [vmem:[%s1298] ss:$9 sm:$0xff] %v1294
    %v1357 = vld [vmem:[#allocation1] sm:$0xff]
    %v1358 = vsel %vm266, %v1318, 0
    %v1360 = vsel %vm266, %v1335, 0
    %v1362 = vsel %vm266, %v1352, 0
    %v1364 = vsel %vm266, %v1357, 0
    %v1367 = vsel %vm275, %v1230, 0
    %1369 = vmatpush.bf16.msra.mxu0 0
    %1370 = vmatpush.bf16.msra.mxu0 0
    %1371 = vmatpush.bf16.msra.mxu0 0
    %1372 = vmatpush.bf16.msra.mxu0 0
    %1373 = vmatpush.bf16.msra.mxu0 0
    %1374 = vmatpush.bf16.msra.mxu0 0
    %1375 = vmatpush.bf16.msra.mxu0 0
    %1376 = vmatpush.bf16.msra.mxu0 %v1367
    %1377 = vmatmul.bf16.gmra.mxu0 %v1358
    %v1378 = vpop.f32.mrf.mxu0
    %v1379 = vadd.f32 0.0, %v1378
    %v1380 = vpop.f32.mrf.mxu0
    %v1381 = vadd.f32 0.0, %v1380
    %1382 = vmatmul.bf16.gmra.mxu0 %v1360
    %v1383 = vpop.f32.mrf.mxu0
    %v1384 = vadd.f32 0.0, %v1383
    %v1385 = vpop.f32.mrf.mxu0
    %v1386 = vadd.f32 0.0, %v1385
    %1387 = vmatmul.bf16.gmra.mxu0 %v1362
    %v1388 = vpop.f32.mrf.mxu0
    %v1389 = vadd.f32 0.0, %v1388
    %v1390 = vpop.f32.mrf.mxu0
    %v1391 = vadd.f32 0.0, %v1390
    %1392 = vmatmul.bf16.gmra.mxu0 %v1364
    %v1393 = vpop.f32.mrf.mxu0
    %v1394 = vadd.f32 0.0, %v1393
    %v1395 = vpop.f32.mrf.mxu0
    %1396 = vdwg.mxu0
    %v1404 = vrot.slane %v1379, 2
    %v1405 = vrot.slane %v1379, 4
    %v1406 = vrot.slane %v1379, 6
    %v1407 = vrot.slane %v1381, 2
    %v1408 = vrot.slane %v1381, 4
    %v1409 = vrot.slane %v1381, 6
    %v1410 = vrot.slane %v1384, 2
    %v1411 = vrot.slane %v1384, 4
    %v1412 = vrot.slane %v1384, 6
    %v1413 = vrot.slane %v1386, 2
    %v1414 = vrot.slane %v1386, 4
    %v1415 = vrot.slane %v1386, 6
    %v1416 = vrot.slane %v1389, 2
    %v1417 = vrot.slane %v1389, 4
    %v1418 = vrot.slane %v1389, 6
    %v1419 = vrot.slane %v1391, 2
    %v1420 = vrot.slane %v1391, 4
    %v1421 = vrot.slane %v1391, 6
    %v1422 = vrot.slane %v1394, 2
    %v1442 = vadd.f32 %v1203, %v1379
    %v1443 = vadd.f32 %v1204, %v1404
    %v1444 = vadd.f32 %v1205, %v1405
    %v1445 = vadd.f32 %v1206, %v1406
    %v1446 = vadd.f32 %v1207, %v1381
    %v1447 = vadd.f32 %v1208, %v1407
    %v1448 = vadd.f32 %v1209, %v1408
    %v1449 = vadd.f32 %v1210, %v1409
    %v1450 = vadd.f32 %v1211, %v1384
    %v1451 = vadd.f32 %v1212, %v1410
    %v1452 = vadd.f32 %v1213, %v1411
    %v1453 = vadd.f32 %v1214, %v1412
    %v1454 = vadd.f32 %v1215, %v1386
    %v1455 = vadd.f32 %v1216, %v1413
    %v1456 = vadd.f32 %v1217, %v1414
    %v1457 = vadd.f32 %v1218, %v1415
    %v1458 = vadd.f32 %v1219, %v1389
    %v1459 = vadd.f32 %v1220, %v1416
    %v1460 = vadd.f32 %v1221, %v1417
    %v1461 = vadd.f32 %v1222, %v1418
    %v1462 = vadd.f32 %v1223, %v1391
    %v1463 = vadd.f32 %v1224, %v1419
    %v1464 = vadd.f32 %v1225, %v1420
    %v1465 = vadd.f32 %v1226, %v1421
    %v1466 = vadd.f32 %v1227, %v1394
    %v1467 = vadd.f32 %v1228, %v1422
    %s1468 = scalar_lea.vmem [#allocation5], 24
    %v1469 = vld [vmem:[%s1468] sm:$0xf]
    %1470 = vrot.lane.b32.xlu0 %v137, 122
    %v1471 = vpop.permute.xlu0 %1470
    %1472 = vrot.lane.b32.xlu0 %v138, 122
    %v1473 = vpop.permute.xlu0 %1472
    %1476 = vxpose.xlu0.c.b16.start [1/8] %v1471, 128
    %1477 = vxpose.xlu0.c.b16.cont [2/8] 0, 128
    %1478 = vxpose.xlu0.c.b16.cont [3/8] 0, 128
    %1479 = vxpose.xlu0.c.b16.cont [4/8] 0, 128
    %1480 = vxpose.xlu0.c.b16.cont [5/8] 0, 128
    %1481 = vxpose.xlu0.c.b16.cont [6/8] 0, 128
    %1482 = vxpose.xlu0.c.b16.cont [7/8] 0, 128
    %1483 = vxpose.xlu0.c.b16.end [8/8] 0, 128
    %v1484 = vpop.trf.xlu0
    %v1485 = vpop.trf.xlu0
    %v1486 = vpop.trf.xlu0
    %v1487 = vpop.trf.xlu0
    %v1488 = vpop.trf.xlu0
    %v1489 = vpop.trf.xlu0
    %v1490 = vpop.trf.xlu0
    %v1491 = vpop.trf.xlu0
    %1492 = vxpose.xlu0.c.b16.start [1/8] %v1473, 128
    %1493 = vxpose.xlu0.c.b16.cont [2/8] 0, 128
    %1494 = vxpose.xlu0.c.b16.cont [3/8] 0, 128
    %1495 = vxpose.xlu0.c.b16.cont [4/8] 0, 128
    %1496 = vxpose.xlu0.c.b16.cont [5/8] 0, 128
    %1497 = vxpose.xlu0.c.b16.cont [6/8] 0, 128
    %1498 = vxpose.xlu0.c.b16.cont [7/8] 0, 128
    %1499 = vxpose.xlu0.c.b16.end [8/8] 0, 128
    %v1500 = vpop.trf.xlu0
    %v1501 = vpop.trf.xlu0
    %v1502 = vpop.trf.xlu0
    %v1503 = vpop.trf.xlu0
    %v1504 = vpop.trf.xlu0
    %v1505 = vpop.trf.xlu0
    %v1506 = vpop.trf.xlu0
    %v1507 = vpop.trf.xlu0
    %v1512 = vrot.slane %v1484, 1
    %v1513 = vrot.slane %v1484, 2
    %v1514 = vrot.slane %v1484, 3
    %v1515 = vrot.slane %v1484, 4
    %v1516 = vrot.slane %v1484, 5
    %v1517 = vrot.slane %v1484, 6
    %v1518 = vrot.slane %v1484, 7
    %v1519 = vrot.slane %v1485, 1
    %v1520 = vrot.slane %v1485, 2
    %v1521 = vrot.slane %v1485, 3
    %v1522 = vrot.slane %v1485, 4
    %v1523 = vrot.slane %v1500, 1
    %v1524 = vrot.slane %v1500, 2
    %v1525 = vrot.slane %v1500, 3
    %v1526 = vrot.slane %v1500, 4
    %v1527 = vrot.slane %v1500, 5
    %v1528 = vrot.slane %v1500, 6
    %v1529 = vrot.slane %v1500, 7
    %v1530 = vrot.slane %v1501, 1
    %v1531 = vrot.slane %v1501, 2
    %v1532 = vrot.slane %v1501, 3
    %v1533 = vrot.slane %v1501, 4
    %1535 = vst [vmem:[#allocation1] ss:$9 sm:$0xff] %v1484
    %s1537 = scalar_lea.vmem [#allocation1], 1
    %1538 = vst [vmem:[%s1537] ss:$9 sm:$0xff] %v1512
    %s1540 = scalar_lea.vmem [#allocation1], 2
    %1541 = vst [vmem:[%s1540] ss:$9 sm:$0xff] %v1513
    %s1543 = scalar_lea.vmem [#allocation1], 3
    %1544 = vst [vmem:[%s1543] ss:$9 sm:$0xff] %v1514
    %s1546 = scalar_lea.vmem [#allocation1], 4
    %1547 = vst [vmem:[%s1546] ss:$9 sm:$0xff] %v1515
    %s1549 = scalar_lea.vmem [#allocation1], 5
    %1550 = vst [vmem:[%s1549] ss:$9 sm:$0xff] %v1516
    %s1552 = scalar_lea.vmem [#allocation1], 6
    %1553 = vst [vmem:[%s1552] ss:$9 sm:$0xff] %v1517
    %s1555 = scalar_lea.vmem [#allocation1], 7
    %1556 = vst [vmem:[%s1555] ss:$9 sm:$0xff] %v1518
    %v1557 = vld [vmem:[#allocation1] sm:$0xff]
    %1559 = vst [vmem:[#allocation1] ss:$9 sm:$0xff] %v1485
    %1561 = vst [vmem:[%s1537] ss:$9 sm:$0xff] %v1519
    %1563 = vst [vmem:[%s1540] ss:$9 sm:$0xff] %v1520
    %1565 = vst [vmem:[%s1543] ss:$9 sm:$0xff] %v1521
    %1567 = vst [vmem:[%s1546] ss:$9 sm:$0xff] %v1522
    %1569 = vst [vmem:[%s1549] ss:$9 sm:$0xff] %v1500
    %1571 = vst [vmem:[%s1552] ss:$9 sm:$0xff] %v1523
    %1573 = vst [vmem:[%s1555] ss:$9 sm:$0xff] %v1524
    %v1574 = vld [vmem:[#allocation1] sm:$0xff]
    %1576 = vst [vmem:[#allocation1] ss:$9 sm:$0xff] %v1525
    %1578 = vst [vmem:[%s1537] ss:$9 sm:$0xff] %v1526
    %1580 = vst [vmem:[%s1540] ss:$9 sm:$0xff] %v1527
    %1582 = vst [vmem:[%s1543] ss:$9 sm:$0xff] %v1528
    %1584 = vst [vmem:[%s1546] ss:$9 sm:$0xff] %v1529
    %1586 = vst [vmem:[%s1549] ss:$9 sm:$0xff] %v1501
    %1588 = vst [vmem:[%s1552] ss:$9 sm:$0xff] %v1530
    %1590 = vst [vmem:[%s1555] ss:$9 sm:$0xff] %v1531
    %v1591 = vld [vmem:[#allocation1] sm:$0xff]
    %1593 = vst [vmem:[#allocation1] ss:$9 sm:$0xff] %v1532
    %1595 = vst [vmem:[%s1537] ss:$9 sm:$0xff] %v1533
    %v1596 = vld [vmem:[#allocation1] sm:$0xff]
    %v1597 = vsel %vm266, %v1557, 0
    %v1599 = vsel %vm266, %v1574, 0
    %v1601 = vsel %vm266, %v1591, 0
    %v1603 = vsel %vm266, %v1596, 0
    %v1606 = vsel %vm275, %v1469, 0
    %1608 = vmatpush.bf16.msra.mxu0 0
    %1609 = vmatpush.bf16.msra.mxu0 0
    %1610 = vmatpush.bf16.msra.mxu0 0
    %1611 = vmatpush.bf16.msra.mxu0 0
    %1612 = vmatpush.bf16.msra.mxu0 0
    %1613 = vmatpush.bf16.msra.mxu0 0
    %1614 = vmatpush.bf16.msra.mxu0 0
    %1615 = vmatpush.bf16.msra.mxu0 %v1606
    %1616 = vmatmul.bf16.gmra.mxu0 %v1597
    %v1617 = vpop.f32.mrf.mxu0
    %v1618 = vadd.f32 0.0, %v1617
    %v1619 = vpop.f32.mrf.mxu0
    %v1620 = vadd.f32 0.0, %v1619
    %1621 = vmatmul.bf16.gmra.mxu0 %v1599
    %v1622 = vpop.f32.mrf.mxu0
    %v1623 = vadd.f32 0.0, %v1622
    %v1624 = vpop.f32.mrf.mxu0
    %v1625 = vadd.f32 0.0, %v1624
    %1626 = vmatmul.bf16.gmra.mxu0 %v1601
    %v1627 = vpop.f32.mrf.mxu0
    %v1628 = vadd.f32 0.0, %v1627
    %v1629 = vpop.f32.mrf.mxu0
    %v1630 = vadd.f32 0.0, %v1629
    %1631 = vmatmul.bf16.gmra.mxu0 %v1603
    %v1632 = vpop.f32.mrf.mxu0
    %v1633 = vadd.f32 0.0, %v1632
    %v1634 = vpop.f32.mrf.mxu0
    %1635 = vdwg.mxu0
    %v1643 = vrot.slane %v1618, 2
    %v1644 = vrot.slane %v1618, 4
    %v1645 = vrot.slane %v1618, 6
    %v1646 = vrot.slane %v1620, 2
    %v1647 = vrot.slane %v1620, 4
    %v1648 = vrot.slane %v1620, 6
    %v1649 = vrot.slane %v1623, 2
    %v1650 = vrot.slane %v1623, 4
    %v1651 = vrot.slane %v1623, 6
    %v1652 = vrot.slane %v1625, 2
    %v1653 = vrot.slane %v1625, 4
    %v1654 = vrot.slane %v1625, 6
    %v1655 = vrot.slane %v1628, 2
    %v1656 = vrot.slane %v1628, 4
    %v1657 = vrot.slane %v1628, 6
    %v1658 = vrot.slane %v1630, 2
    %v1659 = vrot.slane %v1630, 4
    %v1660 = vrot.slane %v1630, 6
    %v1661 = vrot.slane %v1633, 2
    %v1681 = vadd.f32 %v1442, %v1618
    %v1682 = vadd.f32 %v1443, %v1643
    %v1683 = vadd.f32 %v1444, %v1644
    %v1684 = vadd.f32 %v1445, %v1645
    %v1685 = vadd.f32 %v1446, %v1620
    %v1686 = vadd.f32 %v1447, %v1646
    %v1687 = vadd.f32 %v1448, %v1647
    %v1688 = vadd.f32 %v1449, %v1648
    %v1689 = vadd.f32 %v1450, %v1623
    %v1690 = vadd.f32 %v1451, %v1649
    %v1691 = vadd.f32 %v1452, %v1650
    %v1692 = vadd.f32 %v1453, %v1651
    %v1693 = vadd.f32 %v1454, %v1625
    %v1694 = vadd.f32 %v1455, %v1652
    %v1695 = vadd.f32 %v1456, %v1653
    %v1696 = vadd.f32 %v1457, %v1654
    %v1697 = vadd.f32 %v1458, %v1628
    %v1698 = vadd.f32 %v1459, %v1655
    %v1699 = vadd.f32 %v1460, %v1656
    %v1700 = vadd.f32 %v1461, %v1657
    %v1701 = vadd.f32 %v1462, %v1630
    %v1702 = vadd.f32 %v1463, %v1658
    %v1703 = vadd.f32 %v1464, %v1659
    %v1704 = vadd.f32 %v1465, %v1660
    %v1705 = vadd.f32 %v1466, %v1633
    %v1706 = vadd.f32 %v1467, %v1661
    %v1707 = vld [vmem:[%s2] sm:$0x1]
    %v1709 = vperm.slane %v1707, 0
    %v1711 = vrot.slane %v1709, 2
    %v1712 = vrot.slane %v1709, 4
    %v1713 = vrot.slane %v1709, 6
    %v1717 = vadd.f32 %v1681, %v1709
    %v1718 = vadd.f32 %v1682, %v1711
    %v1719 = vadd.f32 %v1683, %v1712
    %v1720 = vadd.f32 %v1684, %v1713
    %v1721 = vadd.f32 %v1685, %v1709
    %v1722 = vadd.f32 %v1686, %v1711
    %v1723 = vadd.f32 %v1687, %v1712
    %v1724 = vadd.f32 %v1688, %v1713
    %v1725 = vadd.f32 %v1689, %v1709
    %v1726 = vadd.f32 %v1690, %v1711
    %v1727 = vadd.f32 %v1691, %v1712
    %v1728 = vadd.f32 %v1692, %v1713
    %v1729 = vadd.f32 %v1693, %v1709
    %v1730 = vadd.f32 %v1694, %v1709
    %v1731 = vadd.f32 %v1695, %v1711
    %v1732 = vadd.f32 %v1696, %v1712
    %v1733 = vadd.f32 %v1697, %v1713
    %v1734 = vadd.f32 %v1698, %v1709
    %v1735 = vadd.f32 %v1699, %v1711
    %v1736 = vadd.f32 %v1700, %v1712
    %v1737 = vadd.f32 %v1701, %v1713
    %v1738 = vadd.f32 %v1702, %v1709
    %v1739 = vadd.f32 %v1703, %v1711
    %v1740 = vadd.f32 %v1704, %v1712
    %v1741 = vadd.f32 %v1705, %v1713
    %v1742 = vadd.f32 %v1706, %v1709
    %v1743 = vmax.f32 %v1717, 0.0
    %v1744 = vmax.f32 %v1718, 0.0
    %v1745 = vmax.f32 %v1719, 0.0
    %v1746 = vmax.f32 %v1720, 0.0
    %v1747 = vmax.f32 %v1721, 0.0
    %v1748 = vmax.f32 %v1722, 0.0
    %v1749 = vmax.f32 %v1723, 0.0
    %v1750 = vmax.f32 %v1724, 0.0
    %v1751 = vmax.f32 %v1725, 0.0
    %v1752 = vmax.f32 %v1726, 0.0
    %v1753 = vmax.f32 %v1727, 0.0
    %v1754 = vmax.f32 %v1728, 0.0
    %v1755 = vmax.f32 %v1729, 0.0
    %v1756 = vmax.f32 %v1730, 0.0
    %v1757 = vmax.f32 %v1731, 0.0
    %v1758 = vmax.f32 %v1732, 0.0
    %v1759 = vmax.f32 %v1733, 0.0
    %v1760 = vmax.f32 %v1734, 0.0
    %v1761 = vmax.f32 %v1735, 0.0
    %v1762 = vmax.f32 %v1736, 0.0
    %v1763 = vmax.f32 %v1737, 0.0
    %v1764 = vmax.f32 %v1738, 0.0
    %v1765 = vmax.f32 %v1739, 0.0
    %v1766 = vmax.f32 %v1740, 0.0
    %v1767 = vmax.f32 %v1741, 0.0
    %v1768 = vmax.f32 %v1742, 0.0
    %1795 = vst [vmem:[#allocation1] ss:$4 sm:$0xff] %v1743
    %s1796 = scalar_lea.vmem [#allocation1], 1
    %1797 = vst [vmem:[%s1796] ss:$4 sm:$0xff] %v1744
    %s1798 = scalar_lea.vmem [#allocation1], 2
    %1799 = vst [vmem:[%s1798] ss:$4 sm:$0xff] %v1745
    %s1800 = scalar_lea.vmem [#allocation1], 3
    %1801 = vst [vmem:[%s1800] ss:$4 sm:$0xff] %v1746
    %s1802 = scalar_lea.vmem [#allocation1], 32
    %1803 = vst [vmem:[%s1802] ss:$4 sm:$0xff] %v1747
    %s1804 = scalar_lea.vmem [#allocation1], 33
    %1805 = vst [vmem:[%s1804] ss:$4 sm:$0xff] %v1748
    %s1806 = scalar_lea.vmem [#allocation1], 34
    %1807 = vst [vmem:[%s1806] ss:$4 sm:$0xff] %v1749
    %s1808 = scalar_lea.vmem [#allocation1], 35
    %1809 = vst [vmem:[%s1808] ss:$4 sm:$0xff] %v1750
    %v1810 = vld.sshfl [vmem:[#allocation1] sm:$0xff pattern:$0x73625140]
    %v1811 = vld.sshfl [vmem:[#allocation1 + $0x20] sm:$0xff pattern:$0x73625140]
    %1812 = vst [vmem:[#allocation1] ss:$4 sm:$0xff] %v1751
    %1813 = vst [vmem:[%s1796] ss:$4 sm:$0xff] %v1752
    %1814 = vst [vmem:[%s1798] ss:$4 sm:$0xff] %v1753
    %1815 = vst [vmem:[%s1800] ss:$4 sm:$0xff] %v1754
    %1816 = vst [vmem:[%s1802] ss:$4 sm:$0xff] %v1755
    %v1817 = vld.sshfl [vmem:[#allocation1] sm:$0xff pattern:$0x73625140]
    %v1818 = vld.sshfl [vmem:[#allocation1 + $0x20] sm:$0xff pattern:$0x73625140]
    %1819 = vst [vmem:[#allocation1] ss:$4 sm:$0xff] %v1756
    %1820 = vst [vmem:[%s1796] ss:$4 sm:$0xff] %v1757
    %1821 = vst [vmem:[%s1798] ss:$4 sm:$0xff] %v1758
    %1822 = vst [vmem:[%s1800] ss:$4 sm:$0xff] %v1759
    %1823 = vst [vmem:[%s1802] ss:$4 sm:$0xff] %v1760
    %1824 = vst [vmem:[%s1804] ss:$4 sm:$0xff] %v1761
    %1825 = vst [vmem:[%s1806] ss:$4 sm:$0xff] %v1762
    %1826 = vst [vmem:[%s1808] ss:$4 sm:$0xff] %v1763
    %v1827 = vld.sshfl [vmem:[#allocation1] sm:$0xff pattern:$0x73625140]
    %v1828 = vld.sshfl [vmem:[#allocation1 + $0x20] sm:$0xff pattern:$0x73625140]
    %1829 = vst [vmem:[#allocation1] ss:$4 sm:$0xff] %v1764
    %1830 = vst [vmem:[%s1796] ss:$4 sm:$0xff] %v1765
    %1831 = vst [vmem:[%s1798] ss:$4 sm:$0xff] %v1766
    %1832 = vst [vmem:[%s1800] ss:$4 sm:$0xff] %v1767
    %1833 = vst [vmem:[%s1802] ss:$4 sm:$0xff] %v1768
    %v1834 = vld.sshfl [vmem:[#allocation1] sm:$0xff pattern:$0x73625140]
    %v1835 = vld.sshfl [vmem:[#allocation1 + $0x20] sm:$0xff pattern:$0x73625140]
    %v1844 = vpack.c.bf16 %v1810, %v1810
    %v1845 = vpack.c.bf16 %v1811, %v1811
    %v1846 = vpack.c.bf16 %v1817, %v1817
    %v1847 = vpack.c.bf16 %v1818, %v1818
    %v1848 = vpack.c.bf16 %v1827, %v1827
    %v1849 = vpack.c.bf16 %v1828, %v1828
    %v1850 = vpack.c.bf16 %v1834, %v1834
    %v1851 = vpack.c.bf16 %v1835, %v1835
    %v1852 = vld [vmem:[#allocation7] sm:$0xf]
    %v1853 = vld [vmem:[#allocation7 + $0x4] sm:$0xf]
    %v1854 = vld [vmem:[#allocation7 + $0x8] sm:$0xf]
    %v1855 = vld [vmem:[#allocation7 + $0xc] sm:$0xf]
    %v1856 = vld [vmem:[#allocation7 + $0x10] sm:$0xf]
    %v1857 = vld [vmem:[#allocation7 + $0x14] sm:$0xf]
    %v1858 = vld [vmem:[#allocation7 + $0x18] sm:$0xf]
    %v1859 = vld [vmem:[#allocation7 + $0x1c] sm:$0xf]
    %s1860 = scalar_lea.vmem [#allocation7], 32
    %v1861 = vld [vmem:[%s1860] sm:$0xf]
    %v1862 = vld [vmem:[%s1860 + $0x4] sm:$0xf]
    %v1863 = vld [vmem:[%s1860 + $0x8] sm:$0xf]
    %v1864 = vld [vmem:[%s1860 + $0xc] sm:$0xf]
    %v1865 = vld [vmem:[%s1860 + $0x10] sm:$0xf]
    %v1866 = vld [vmem:[%s1860 + $0x14] sm:$0xf]
    %v1867 = vld [vmem:[%s1860 + $0x18] sm:$0xf]
    %v1868 = vld [vmem:[%s1860 + $0x1c] sm:$0xf]
    %v1875 = vrot.slane %v1844, 3
    %v1876 = vrot.slane %v1845, 3
    %v1877 = vrot.slane %v1846, 3
    %v1878 = vrot.slane %v1848, 3
    %v1879 = vrot.slane %v1849, 3
    %v1880 = vrot.slane %v1850, 3
    %vm1881 = vcmask 1040384
    %v1884 = vsel %vm1881, %v1844, %v1875
    %vm1885 = vcmask 1041409
    %v1886 = vsel %vm1885, %v1844, %v1875
    %v1888 = vrot.slane %v1886, 1
    %vm1889 = vcmask 1042434
    %v1890 = vsel %vm1889, %v1844, %v1875
    %v1892 = vrot.slane %v1890, 2
    %vm1893 = vcmask 1043459
    %v1894 = vsel %vm1893, %v1844, %v1875
    %v1896 = vrot.slane %v1894, 3
    %v1899 = vsel %vm1881, %v1845, %v1876
    %v1900 = vsel %vm1885, %v1845, %v1876
    %v1902 = vrot.slane %v1900, 1
    %v1903 = vsel %vm1889, %v1845, %v1876
    %v1905 = vrot.slane %v1903, 2
    %v1906 = vsel %vm1893, %v1845, %v1876
    %v1908 = vrot.slane %v1906, 3
    %v1911 = vsel %vm1881, %v1846, %v1877
    %v1912 = vsel %vm1885, %v1846, %v1877
    %v1914 = vrot.slane %v1912, 1
    %v1915 = vsel %vm1889, %v1846, %v1877
    %v1917 = vrot.slane %v1915, 2
    %v1918 = vsel %vm1893, %v1846, %v1877
    %v1920 = vrot.slane %v1918, 3
    %v1923 = vsel %vm1881, %v1848, %v1878
    %v1924 = vsel %vm1885, %v1848, %v1878
    %v1926 = vrot.slane %v1924, 1
    %v1927 = vsel %vm1889, %v1848, %v1878
    %v1929 = vrot.slane %v1927, 2
    %v1930 = vsel %vm1893, %v1848, %v1878
    %v1932 = vrot.slane %v1930, 3
    %v1935 = vsel %vm1881, %v1849, %v1879
    %v1936 = vsel %vm1885, %v1849, %v1879
    %v1938 = vrot.slane %v1936, 1
    %v1939 = vsel %vm1889, %v1849, %v1879
    %v1941 = vrot.slane %v1939, 2
    %v1942 = vsel %vm1893, %v1849, %v1879
    %v1944 = vrot.slane %v1942, 3
    %v1947 = vsel %vm1881, %v1850, %v1880
    %v1948 = vsel %vm1885, %v1850, %v1880
    %v1950 = vrot.slane %v1948, 1
    %v1951 = vsel %vm1889, %v1850, %v1880
    %v1953 = vrot.slane %v1951, 2
    %v1954 = vsel %vm1893, %v1850, %v1880
    %v1956 = vrot.slane %v1954, 3
    %vm1957 = vsmask.f32 256
    %vm1958 = vsmask.f32 1284
    %vm1959 = vmor %vm1957, %vm1958
    %vm1960 = vsmask.f32 2312
    %vm1961 = vmor %vm1959, %vm1960
    %vm1962 = vsmask.f32 3340
    %vm1963 = vmor %vm1961, %vm1962
    %vm1964 = vsmask.f32 4368
    %vm1965 = vmor %vm1963, %vm1964
    %vm1966 = vsmask.f32 5396
    %vm1967 = vmor %vm1965, %vm1966
    %vm1968 = vsmask.f32 6424
    %vm1969 = vmor %vm1967, %vm1968
    %vm1970 = vsmask.f32 7452
    %vm1971 = vmor %vm1969, %vm1970
    %v1972 = vshrl.u32 %v1884, 16
    %v1974 = vrot.slane %v1972, 7
    %v1975 = vrot.slane %v1974, 1
    %v1977 = vshll.u32 %v1888, 16
    %v1979 = vsel %vm1971, %v1975, %v1977
    %v1980 = vshrl.u32 %v1888, 16
    %v1982 = vrot.slane %v1980, 7
    %v1983 = vrot.slane %v1982, 1
    %v1985 = vshll.u32 %v1892, 16
    %v1987 = vsel %vm1971, %v1983, %v1985
    %v1988 = vshrl.u32 %v1892, 16
    %v1990 = vrot.slane %v1988, 7
    %v1991 = vrot.slane %v1990, 1
    %v1993 = vshll.u32 %v1896, 16
    %v1995 = vsel %vm1971, %v1991, %v1993
    %v1996 = vshrl.u32 %v1896, 16
    %v1998 = vrot.slane %v1996, 7
    %v1999 = vrot.slane %v1998, 1
    %v2000 = vshll.u32 %v1899, 16
    %v2002 = vsel %vm1971, %v1999, %v2000
    %v2003 = vshrl.u32 %v1899, 16
    %v2005 = vrot.slane %v2003, 7
    %v2006 = vrot.slane %v2005, 1
    %v2008 = vshll.u32 %v1902, 16
    %v2010 = vsel %vm1971, %v2006, %v2008
    %v2011 = vshrl.u32 %v1902, 16
    %v2013 = vrot.slane %v2011, 7
    %v2014 = vrot.slane %v2013, 1
    %v2016 = vshll.u32 %v1905, 16
    %v2018 = vsel %vm1971, %v2014, %v2016
    %v2019 = vshrl.u32 %v1905, 16
    %v2021 = vrot.slane %v2019, 7
    %v2022 = vrot.slane %v2021, 1
    %v2024 = vshll.u32 %v1908, 16
    %v2026 = vsel %vm1971, %v2022, %v2024
    %v2027 = vshrl.u32 %v1908, 16
    %v2029 = vrot.slane %v2027, 7
    %v2030 = vrot.slane %v2029, 1
    %v2031 = vshll.u32 %v1911, 16
    %v2033 = vsel %vm1971, %v2030, %v2031
    %v2034 = vshrl.u32 %v1911, 16
    %v2036 = vrot.slane %v2034, 7
    %v2037 = vrot.slane %v2036, 1
    %v2039 = vshll.u32 %v1914, 16
    %v2041 = vsel %vm1971, %v2037, %v2039
    %v2042 = vshrl.u32 %v1914, 16
    %v2044 = vrot.slane %v2042, 7
    %v2045 = vrot.slane %v2044, 1
    %v2047 = vshll.u32 %v1917, 16
    %v2049 = vsel %vm1971, %v2045, %v2047
    %v2050 = vshrl.u32 %v1917, 16
    %v2052 = vrot.slane %v2050, 7
    %v2053 = vrot.slane %v2052, 1
    %v2055 = vshll.u32 %v1920, 16
    %v2057 = vsel %vm1971, %v2053, %v2055
    %v2058 = vshrl.u32 %v1923, 16
    %v2060 = vrot.slane %v2058, 7
    %v2061 = vrot.slane %v2060, 1
    %v2063 = vshll.u32 %v1926, 16
    %v2065 = vsel %vm1971, %v2061, %v2063
    %v2066 = vshrl.u32 %v1926, 16
    %v2068 = vrot.slane %v2066, 7
    %v2069 = vrot.slane %v2068, 1
    %v2071 = vshll.u32 %v1929, 16
    %v2073 = vsel %vm1971, %v2069, %v2071
    %v2074 = vshrl.u32 %v1929, 16
    %v2076 = vrot.slane %v2074, 7
    %v2077 = vrot.slane %v2076, 1
    %v2079 = vshll.u32 %v1932, 16
    %v2081 = vsel %vm1971, %v2077, %v2079
    %v2082 = vshrl.u32 %v1932, 16
    %v2084 = vrot.slane %v2082, 7
    %v2085 = vrot.slane %v2084, 1
    %v2086 = vshll.u32 %v1935, 16
    %v2088 = vsel %vm1971, %v2085, %v2086
    %v2089 = vshrl.u32 %v1935, 16
    %v2091 = vrot.slane %v2089, 7
    %v2092 = vrot.slane %v2091, 1
    %v2094 = vshll.u32 %v1938, 16
    %v2096 = vsel %vm1971, %v2092, %v2094
    %v2097 = vshrl.u32 %v1938, 16
    %v2099 = vrot.slane %v2097, 7
    %v2100 = vrot.slane %v2099, 1
    %v2102 = vshll.u32 %v1941, 16
    %v2104 = vsel %vm1971, %v2100, %v2102
    %v2105 = vshrl.u32 %v1941, 16
    %v2107 = vrot.slane %v2105, 7
    %v2108 = vrot.slane %v2107, 1
    %v2110 = vshll.u32 %v1944, 16
    %v2112 = vsel %vm1971, %v2108, %v2110
    %v2113 = vshrl.u32 %v1944, 16
    %v2115 = vrot.slane %v2113, 7
    %v2116 = vrot.slane %v2115, 1
    %v2117 = vshll.u32 %v1947, 16
    %v2119 = vsel %vm1971, %v2116, %v2117
    %v2120 = vshrl.u32 %v1947, 16
    %v2122 = vrot.slane %v2120, 7
    %v2123 = vrot.slane %v2122, 1
    %v2125 = vshll.u32 %v1950, 16
    %v2127 = vsel %vm1971, %v2123, %v2125
    %v2128 = vshrl.u32 %v1950, 16
    %v2130 = vrot.slane %v2128, 7
    %v2131 = vrot.slane %v2130, 1
    %v2133 = vshll.u32 %v1953, 16
    %v2135 = vsel %vm1971, %v2131, %v2133
    %v2136 = vshrl.u32 %v1953, 16
    %v2138 = vrot.slane %v2136, 7
    %v2139 = vrot.slane %v2138, 1
    %v2141 = vshll.u32 %v1956, 16
    %v2143 = vsel %vm1971, %v2139, %v2141
    %2145 = vst [vmem:[#allocation1] ss:$9 sm:$0xff] %v1979
    %s2147 = scalar_lea.vmem [#allocation1], 1
    %2148 = vst [vmem:[%s2147] ss:$9 sm:$0xff] %v1987
    %s2150 = scalar_lea.vmem [#allocation1], 2
    %2151 = vst [vmem:[%s2150] ss:$9 sm:$0xff] %v1995
    %s2153 = scalar_lea.vmem [#allocation1], 3
    %2154 = vst [vmem:[%s2153] ss:$9 sm:$0xff] %v2002
    %s2156 = scalar_lea.vmem [#allocation1], 4
    %2157 = vst [vmem:[%s2156] ss:$9 sm:$0xff] %v2010
    %s2159 = scalar_lea.vmem [#allocation1], 5
    %2160 = vst [vmem:[%s2159] ss:$9 sm:$0xff] %v2018
    %s2162 = scalar_lea.vmem [#allocation1], 6
    %2163 = vst [vmem:[%s2162] ss:$9 sm:$0xff] %v2026
    %s2165 = scalar_lea.vmem [#allocation1], 7
    %2166 = vst [vmem:[%s2165] ss:$9 sm:$0xff] %v2033
    %v2167 = vld [vmem:[#allocation1] sm:$0xff]
    %2169 = vst [vmem:[#allocation1] ss:$9 sm:$0xff] %v2041
    %2171 = vst [vmem:[%s2147] ss:$9 sm:$0xff] %v2049
    %2173 = vst [vmem:[%s2150] ss:$9 sm:$0xff] %v2057
    %2175 = vst [vmem:[%s2153] ss:$9 sm:$0xff] %v2065
    %2177 = vst [vmem:[%s2156] ss:$9 sm:$0xff] %v2073
    %2179 = vst [vmem:[%s2159] ss:$9 sm:$0xff] %v2081
    %2181 = vst [vmem:[%s2162] ss:$9 sm:$0xff] %v2088
    %2183 = vst [vmem:[%s2165] ss:$9 sm:$0xff] %v2096
    %v2184 = vld [vmem:[#allocation1] sm:$0xff]
    %2186 = vst [vmem:[#allocation1] ss:$9 sm:$0xff] %v2104
    %2188 = vst [vmem:[%s2147] ss:$9 sm:$0xff] %v2112
    %2190 = vst [vmem:[%s2150] ss:$9 sm:$0xff] %v2119
    %2192 = vst [vmem:[%s2153] ss:$9 sm:$0xff] %v2127
    %2194 = vst [vmem:[%s2156] ss:$9 sm:$0xff] %v2135
    %2196 = vst [vmem:[%s2159] ss:$9 sm:$0xff] %v2143
    %v2197 = vld [vmem:[#allocation1] sm:$0xff]
    %v2206 = vunpack.c.l.b16 %v1861
    %v2207 = vunpack.c.l.b16 %v1862
    %v2208 = vunpack.c.l.b16 %v1863
    %v2209 = vunpack.c.l.b16 %v1864
    %v2210 = vunpack.c.l.b16 %v1865
    %v2211 = vunpack.c.l.b16 %v1866
    %v2212 = vunpack.c.l.b16 %v1867
    %v2213 = vunpack.c.l.b16 %v1868
    %v2214 = vpack.c.b16 %v2207, %v2206
    %v2215 = vpack.c.b16 %v2209, %v2208
    %v2216 = vpack.c.b16 %v2211, %v2210
    %v2217 = vpack.c.b16 %v2213, %v2212
    %vm2222 = vcmask 523264
    %v2223 = vsel %vm2222, %v2167, 0
    %v2225 = vsel %vm2222, %v2184, 0
    %v2227 = vsel %vm2222, %v2197, 0
    %2229 = vmatpush.bf16.msra.mxu0 0
    %2230 = vmatpush.bf16.msra.mxu0 0
    %2231 = vmatpush.bf16.msra.mxu0 0
    %2232 = vmatpush.bf16.msra.mxu0 0
    %2233 = vmatpush.bf16.msra.mxu0 %v2217
    %2234 = vmatpush.bf16.msra.mxu0 %v2216
    %2235 = vmatpush.bf16.msra.mxu0 %v2215
    %2236 = vmatpush.bf16.msra.mxu0 %v2214
    %2237 = vmatmul.bf16.gmra.mxu0 %v2223
    %v2238 = vpop.f32.mrf.mxu0
    %v2239 = vadd.f32 0.0, %v2238
    %v2240 = vpop.f32.mrf.mxu0
    %v2241 = vadd.f32 0.0, %v2240
    %2242 = vmatmul.bf16.gmra.mxu0 %v2225
    %v2243 = vpop.f32.mrf.mxu0
    %v2244 = vadd.f32 0.0, %v2243
    %v2245 = vpop.f32.mrf.mxu0
    %v2246 = vadd.f32 0.0, %v2245
    %2247 = vmatmul.bf16.gmra.mxu0 %v2227
    %v2248 = vpop.f32.mrf.mxu0
    %v2249 = vadd.f32 0.0, %v2248
    %v2250 = vpop.f32.mrf.mxu0
    %v2251 = vadd.f32 0.0, %v2250
    %2252 = vdwg.mxu0
    %2253 = vst [vmem:[#allocation1] ss:$9 sm:$0xff] %v1884
    %s2254 = scalar_lea.vmem [#allocation1], 1
    %2255 = vst [vmem:[%s2254] ss:$9 sm:$0xff] %v1888
    %s2256 = scalar_lea.vmem [#allocation1], 2
    %2257 = vst [vmem:[%s2256] ss:$9 sm:$0xff] %v1892
    %s2258 = scalar_lea.vmem [#allocation1], 3
    %2259 = vst [vmem:[%s2258] ss:$9 sm:$0xff] %v1896
    %s2260 = scalar_lea.vmem [#allocation1], 4
    %2261 = vst [vmem:[%s2260] ss:$9 sm:$0xff] %v1899
    %s2262 = scalar_lea.vmem [#allocation1], 5
    %2263 = vst [vmem:[%s2262] ss:$9 sm:$0xff] %v1902
    %s2264 = scalar_lea.vmem [#allocation1], 6
    %2265 = vst [vmem:[%s2264] ss:$9 sm:$0xff] %v1905
    %s2266 = scalar_lea.vmem [#allocation1], 7
    %2267 = vst [vmem:[%s2266] ss:$9 sm:$0xff] %v1908
    %v2268 = vld [vmem:[#allocation1] sm:$0xff]
    %2269 = vst [vmem:[#allocation1] ss:$9 sm:$0xff] %v1911
    %2270 = vst [vmem:[%s2254] ss:$9 sm:$0xff] %v1914
    %2271 = vst [vmem:[%s2256] ss:$9 sm:$0xff] %v1917
    %2272 = vst [vmem:[%s2258] ss:$9 sm:$0xff] %v1923
    %2273 = vst [vmem:[%s2260] ss:$9 sm:$0xff] %v1926
    %2274 = vst [vmem:[%s2262] ss:$9 sm:$0xff] %v1929
    %2275 = vst [vmem:[%s2264] ss:$9 sm:$0xff] %v1932
    %2276 = vst [vmem:[%s2266] ss:$9 sm:$0xff] %v1935
    %v2277 = vld [vmem:[#allocation1] sm:$0xff]
    %2278 = vst [vmem:[#allocation1] ss:$9 sm:$0xff] %v1938
    %2279 = vst [vmem:[%s2254] ss:$9 sm:$0xff] %v1941
    %2280 = vst [vmem:[%s2256] ss:$9 sm:$0xff] %v1944
    %2281 = vst [vmem:[%s2258] ss:$9 sm:$0xff] %v1947
    %2282 = vst [vmem:[%s2260] ss:$9 sm:$0xff] %v1950
    %2283 = vst [vmem:[%s2262] ss:$9 sm:$0xff] %v1953
    %v2284 = vld [vmem:[#allocation1] sm:$0xff]
    %v2293 = vunpack.c.l.b16 %v1852
    %v2294 = vunpack.c.l.b16 %v1853
    %v2295 = vunpack.c.l.b16 %v1854
    %v2296 = vunpack.c.l.b16 %v1855
    %v2297 = vunpack.c.l.b16 %v1856
    %v2298 = vunpack.c.l.b16 %v1857
    %v2299 = vunpack.c.l.b16 %v1858
    %v2300 = vunpack.c.l.b16 %v1859
    %v2301 = vpack.c.b16 %v2294, %v2293
    %v2302 = vpack.c.b16 %v2296, %v2295
    %v2303 = vpack.c.b16 %v2298, %v2297
    %v2304 = vpack.c.b16 %v2300, %v2299
    %v2309 = vsel %vm2222, %v2268, 0
    %v2311 = vsel %vm2222, %v2277, 0
    %v2313 = vsel %vm2222, %v2284, 0
    %2315 = vmatpush.bf16.msra.mxu0 0
    %2316 = vmatpush.bf16.msra.mxu0 0
    %2317 = vmatpush.bf16.msra.mxu0 0
    %2318 = vmatpush.bf16.msra.mxu0 0
    %2319 = vmatpush.bf16.msra.mxu0 %v2304
    %2320 = vmatpush.bf16.msra.mxu0 %v2303
    %2321 = vmatpush.bf16.msra.mxu0 %v2302
    %2322 = vmatpush.bf16.msra.mxu0 %v2301
    %2323 = vmatmul.bf16.gmra.mxu0 %v2309
    %v2324 = vpop.f32.mrf.mxu0
    %v2325 = vadd.f32 %v2239, %v2324
    %v2326 = vpop.f32.mrf.mxu0
    %v2327 = vadd.f32 %v2241, %v2326
    %2328 = vmatmul.bf16.gmra.mxu0 %v2311
    %v2329 = vpop.f32.mrf.mxu0
    %v2330 = vadd.f32 %v2244, %v2329
    %v2331 = vpop.f32.mrf.mxu0
    %v2332 = vadd.f32 %v2246, %v2331
    %2333 = vmatmul.bf16.gmra.mxu0 %v2313
    %v2334 = vpop.f32.mrf.mxu0
    %v2335 = vadd.f32 %v2249, %v2334
    %v2336 = vpop.f32.mrf.mxu0
    %v2337 = vadd.f32 %v2251, %v2336
    %2338 = vdwg.mxu0
    %v2345 = vrot.slane %v2325, 2
    %v2346 = vrot.slane %v2325, 4
    %v2347 = vrot.slane %v2325, 6
    %v2348 = vrot.slane %v2327, 2
    %v2349 = vrot.slane %v2327, 4
    %v2350 = vrot.slane %v2327, 6
    %v2351 = vrot.slane %v2330, 2
    %v2352 = vrot.slane %v2330, 4
    %v2353 = vrot.slane %v2330, 6
    %v2354 = vrot.slane %v2332, 2
    %v2355 = vrot.slane %v2332, 4
    %v2356 = vrot.slane %v2332, 6
    %v2357 = vrot.slane %v2335, 2
    %v2358 = vrot.slane %v2335, 4
    %v2359 = vrot.slane %v2335, 6
    %v2360 = vrot.slane %v2337, 2
    %s2377 = scalar_lea.vmem [#allocation7], 64
    %v2378 = vld [vmem:[%s2377] sm:$0xf]
    %v2379 = vld [vmem:[%s2377 + $0x4] sm:$0xf]
    %v2380 = vld [vmem:[%s2377 + $0x8] sm:$0xf]
    %v2381 = vld [vmem:[%s2377 + $0xc] sm:$0xf]
    %v2382 = vld [vmem:[%s2377 + $0x10] sm:$0xf]
    %v2383 = vld [vmem:[%s2377 + $0x14] sm:$0xf]
    %v2384 = vld [vmem:[%s2377 + $0x18] sm:$0xf]
    %v2385 = vld [vmem:[%s2377 + $0x1c] sm:$0xf]
    %2386 = vst [vmem:[#allocation1] sm:$0xff] %v1844
    %2387 = vst [vmem:[#allocation1 + $0x20] sm:$0xff] %v1845
    %s2388 = scalar_lea.vmem [#allocation1], 1
    %v2389 = vld [vmem:[%s2388] ss:$4 sm:$0xff]
    %s2390 = scalar_lea.vmem [#allocation1], 2
    %v2391 = vld [vmem:[%s2390] ss:$4 sm:$0xff]
    %s2392 = scalar_lea.vmem [#allocation1], 3
    %v2393 = vld [vmem:[%s2392] ss:$4 sm:$0xff]
    %s2394 = scalar_lea.vmem [#allocation1], 32
    %v2395 = vld [vmem:[%s2394] ss:$4 sm:$0xff]
    %s2396 = scalar_lea.vmem [#allocation1], 33
    %v2397 = vld [vmem:[%s2396] ss:$4 sm:$0xff]
    %s2398 = scalar_lea.vmem [#allocation1], 34
    %v2399 = vld [vmem:[%s2398] ss:$4 sm:$0xff]
    %s2400 = scalar_lea.vmem [#allocation1], 35
    %v2401 = vld [vmem:[%s2400] ss:$4 sm:$0xff]
    %2402 = vst [vmem:[#allocation1] sm:$0xff] %v1846
    %v2403 = vld [vmem:[#allocation1] ss:$4 sm:$0xff]
    %v2404 = vld [vmem:[%s2388] ss:$4 sm:$0xff]
    %v2405 = vld [vmem:[%s2390] ss:$4 sm:$0xff]
    %v2406 = vld [vmem:[%s2392] ss:$4 sm:$0xff]
    %2407 = vst [vmem:[#allocation1 + $0x20] sm:$0xff] %v1848
    %v2408 = vld [vmem:[%s2396] ss:$4 sm:$0xff]
    %v2409 = vld [vmem:[%s2398] ss:$4 sm:$0xff]
    %v2410 = vld [vmem:[%s2400] ss:$4 sm:$0xff]
    %2411 = vst [vmem:[#allocation1] sm:$0xff] %v1849
    %2412 = vst [vmem:[#allocation1 + $0x20] sm:$0xff] %v1850
    %v2413 = vld [vmem:[#allocation1] ss:$4 sm:$0xff]
    %v2414 = vld [vmem:[%s2388] ss:$4 sm:$0xff]
    %v2415 = vld [vmem:[%s2390] ss:$4 sm:$0xff]
    %v2416 = vld [vmem:[%s2392] ss:$4 sm:$0xff]
    %v2417 = vld [vmem:[%s2394] ss:$4 sm:$0xff]
    %v2418 = vld [vmem:[%s2396] ss:$4 sm:$0xff]
    %v2419 = vld [vmem:[%s2398] ss:$4 sm:$0xff]
    %v2420 = vld [vmem:[%s2400] ss:$4 sm:$0xff]
    %2421 = vst [vmem:[#allocation1] ss:$9 sm:$0xff] %v2389
    %s2422 = scalar_lea.vmem [#allocation1], 1
    %2423 = vst [vmem:[%s2422] ss:$9 sm:$0xff] %v2391
    %s2424 = scalar_lea.vmem [#allocation1], 2
    %2425 = vst [vmem:[%s2424] ss:$9 sm:$0xff] %v2393
    %s2426 = scalar_lea.vmem [#allocation1], 3
    %2427 = vst [vmem:[%s2426] ss:$9 sm:$0xff] %v2395
    %s2428 = scalar_lea.vmem [#allocation1], 4
    %2429 = vst [vmem:[%s2428] ss:$9 sm:$0xff] %v2397
    %s2430 = scalar_lea.vmem [#allocation1], 5
    %2431 = vst [vmem:[%s2430] ss:$9 sm:$0xff] %v2399
    %s2432 = scalar_lea.vmem [#allocation1], 6
    %2433 = vst [vmem:[%s2432] ss:$9 sm:$0xff] %v2401
    %s2434 = scalar_lea.vmem [#allocation1], 7
    %2435 = vst [vmem:[%s2434] ss:$9 sm:$0xff] %v2403
    %v2436 = vld [vmem:[#allocation1] sm:$0xff]
    %2437 = vst [vmem:[#allocation1] ss:$9 sm:$0xff] %v2404
    %2438 = vst [vmem:[%s2422] ss:$9 sm:$0xff] %v2405
    %2439 = vst [vmem:[%s2424] ss:$9 sm:$0xff] %v2406
    %2440 = vst [vmem:[%s2426] ss:$9 sm:$0xff] %v2408
    %2441 = vst [vmem:[%s2428] ss:$9 sm:$0xff] %v2409
    %2442 = vst [vmem:[%s2430] ss:$9 sm:$0xff] %v2410
    %2443 = vst [vmem:[%s2432] ss:$9 sm:$0xff] %v2413
    %2444 = vst [vmem:[%s2434] ss:$9 sm:$0xff] %v2414
    %v2445 = vld [vmem:[#allocation1] sm:$0xff]
    %2446 = vst [vmem:[#allocation1] ss:$9 sm:$0xff] %v2415
    %2447 = vst [vmem:[%s2422] ss:$9 sm:$0xff] %v2416
    %2448 = vst [vmem:[%s2424] ss:$9 sm:$0xff] %v2417
    %2449 = vst [vmem:[%s2426] ss:$9 sm:$0xff] %v2418
    %2450 = vst [vmem:[%s2428] ss:$9 sm:$0xff] %v2419
    %2451 = vst [vmem:[%s2430] ss:$9 sm:$0xff] %v2420
    %v2452 = vld [vmem:[#allocation1] sm:$0xff]
    %v2461 = vunpack.c.l.b16 %v2378
    %v2462 = vunpack.c.l.b16 %v2379
    %v2463 = vunpack.c.l.b16 %v2380
    %v2464 = vunpack.c.l.b16 %v2381
    %v2465 = vunpack.c.l.b16 %v2382
    %v2466 = vunpack.c.l.b16 %v2383
    %v2467 = vunpack.c.l.b16 %v2384
    %v2468 = vunpack.c.l.b16 %v2385
    %v2469 = vpack.c.b16 %v2462, %v2461
    %v2470 = vpack.c.b16 %v2464, %v2463
    %v2471 = vpack.c.b16 %v2466, %v2465
    %v2472 = vpack.c.b16 %v2468, %v2467
    %v2477 = vsel %vm2222, %v2436, 0
    %v2479 = vsel %vm2222, %v2445, 0
    %v2481 = vsel %vm2222, %v2452, 0
    %2483 = vmatpush.bf16.msra.mxu0 0
    %2484 = vmatpush.bf16.msra.mxu0 0
    %2485 = vmatpush.bf16.msra.mxu0 0
    %2486 = vmatpush.bf16.msra.mxu0 0
    %2487 = vmatpush.bf16.msra.mxu0 %v2472
    %2488 = vmatpush.bf16.msra.mxu0 %v2471
    %2489 = vmatpush.bf16.msra.mxu0 %v2470
    %2490 = vmatpush.bf16.msra.mxu0 %v2469
    %2491 = vmatmul.bf16.gmra.mxu0 %v2477
    %v2492 = vpop.f32.mrf.mxu0
    %v2493 = vadd.f32 0.0, %v2492
    %v2494 = vpop.f32.mrf.mxu0
    %v2495 = vadd.f32 0.0, %v2494
    %2496 = vmatmul.bf16.gmra.mxu0 %v2479
    %v2497 = vpop.f32.mrf.mxu0
    %v2498 = vadd.f32 0.0, %v2497
    %v2499 = vpop.f32.mrf.mxu0
    %v2500 = vadd.f32 0.0, %v2499
    %2501 = vmatmul.bf16.gmra.mxu0 %v2481
    %v2502 = vpop.f32.mrf.mxu0
    %v2503 = vadd.f32 0.0, %v2502
    %v2504 = vpop.f32.mrf.mxu0
    %v2505 = vadd.f32 0.0, %v2504
    %2506 = vdwg.mxu0
    %v2513 = vrot.slane %v2493, 2
    %v2514 = vrot.slane %v2493, 4
    %v2515 = vrot.slane %v2493, 6
    %v2516 = vrot.slane %v2495, 2
    %v2517 = vrot.slane %v2495, 4
    %v2518 = vrot.slane %v2495, 6
    %v2519 = vrot.slane %v2498, 2
    %v2520 = vrot.slane %v2498, 4
    %v2521 = vrot.slane %v2498, 6
    %v2522 = vrot.slane %v2500, 2
    %v2523 = vrot.slane %v2500, 4
    %v2524 = vrot.slane %v2500, 6
    %v2525 = vrot.slane %v2503, 2
    %v2526 = vrot.slane %v2503, 4
    %v2527 = vrot.slane %v2503, 6
    %v2528 = vrot.slane %v2505, 2
    %v2545 = vadd.f32 %v2325, %v2493
    %v2546 = vadd.f32 %v2345, %v2513
    %v2547 = vadd.f32 %v2346, %v2514
    %v2548 = vadd.f32 %v2347, %v2515
    %v2549 = vadd.f32 %v2327, %v2495
    %v2550 = vadd.f32 %v2348, %v2516
    %v2551 = vadd.f32 %v2349, %v2517
    %v2552 = vadd.f32 %v2350, %v2518
    %v2553 = vadd.f32 %v2330, %v2498
    %v2554 = vadd.f32 %v2351, %v2519
    %v2555 = vadd.f32 %v2352, %v2520
    %v2556 = vadd.f32 %v2353, %v2521
    %v2557 = vadd.f32 %v2332, %v2500
    %v2558 = vadd.f32 %v2354, %v2522
    %v2559 = vadd.f32 %v2355, %v2523
    %v2560 = vadd.f32 %v2356, %v2524
    %v2561 = vadd.f32 %v2335, %v2503
    %v2562 = vadd.f32 %v2357, %v2525
    %v2563 = vadd.f32 %v2358, %v2526
    %v2564 = vadd.f32 %v2359, %v2527
    %v2565 = vadd.f32 %v2337, %v2505
    %v2566 = vadd.f32 %v2360, %v2528
    %s2567 = scalar_lea.vmem [#allocation7], 96
    %v2568 = vld [vmem:[%s2567] sm:$0xf]
    %v2569 = vld [vmem:[%s2567 + $0x4] sm:$0xf]
    %v2570 = vld [vmem:[%s2567 + $0x8] sm:$0xf]
    %v2571 = vld [vmem:[%s2567 + $0xc] sm:$0xf]
    %v2572 = vld [vmem:[%s2567 + $0x10] sm:$0xf]
    %v2573 = vld [vmem:[%s2567 + $0x14] sm:$0xf]
    %v2574 = vld [vmem:[%s2567 + $0x18] sm:$0xf]
    %v2575 = vld [vmem:[%s2567 + $0x1c] sm:$0xf]
    %2576 = vst [vmem:[#allocation1] sm:$0xff] %v1844
    %2577 = vst [vmem:[#allocation1 + $0x20] sm:$0xff] %v1845
    %s2578 = scalar_lea.vmem [#allocation1], 1
    %v2579 = vld [vmem:[%s2578] ss:$4 sm:$0xff]
    %s2580 = scalar_lea.vmem [#allocation1], 2
    %v2581 = vld [vmem:[%s2580] ss:$4 sm:$0xff]
    %s2582 = scalar_lea.vmem [#allocation1], 3
    %v2583 = vld [vmem:[%s2582] ss:$4 sm:$0xff]
    %s2584 = scalar_lea.vmem [#allocation1], 32
    %v2585 = vld [vmem:[%s2584] ss:$4 sm:$0xff]
    %s2586 = scalar_lea.vmem [#allocation1], 33
    %v2587 = vld [vmem:[%s2586] ss:$4 sm:$0xff]
    %s2588 = scalar_lea.vmem [#allocation1], 34
    %v2589 = vld [vmem:[%s2588] ss:$4 sm:$0xff]
    %s2590 = scalar_lea.vmem [#allocation1], 35
    %v2591 = vld [vmem:[%s2590] ss:$4 sm:$0xff]
    %2592 = vst [vmem:[#allocation1] sm:$0xff] %v1846
    %2594 = vst [vmem:[#allocation1 + $0x20] sm:$0xff] %v1847
    %v2595 = vld [vmem:[#allocation1] ss:$4 sm:$0xff]
    %v2596 = vld [vmem:[%s2578] ss:$4 sm:$0xff]
    %v2597 = vld [vmem:[%s2580] ss:$4 sm:$0xff]
    %v2598 = vld [vmem:[%s2582] ss:$4 sm:$0xff]
    %v2599 = vld [vmem:[%s2584] ss:$4 sm:$0xff]
    %2600 = vst [vmem:[#allocation1] sm:$0xff] %v1848
    %2601 = vst [vmem:[#allocation1 + $0x20] sm:$0xff] %v1849
    %v2602 = vld [vmem:[%s2578] ss:$4 sm:$0xff]
    %v2603 = vld [vmem:[%s2580] ss:$4 sm:$0xff]
    %v2604 = vld [vmem:[%s2582] ss:$4 sm:$0xff]
    %v2605 = vld [vmem:[%s2584] ss:$4 sm:$0xff]
    %v2606 = vld [vmem:[%s2586] ss:$4 sm:$0xff]
    %v2607 = vld [vmem:[%s2588] ss:$4 sm:$0xff]
    %v2608 = vld [vmem:[%s2590] ss:$4 sm:$0xff]
    %2609 = vst [vmem:[#allocation1] sm:$0xff] %v1850
    %2611 = vst [vmem:[#allocation1 + $0x20] sm:$0xff] %v1851
    %v2612 = vld [vmem:[#allocation1] ss:$4 sm:$0xff]
    %v2613 = vld [vmem:[%s2578] ss:$4 sm:$0xff]
    %v2614 = vld [vmem:[%s2580] ss:$4 sm:$0xff]
    %v2615 = vld [vmem:[%s2582] ss:$4 sm:$0xff]
    %v2616 = vld [vmem:[%s2584] ss:$4 sm:$0xff]
    %v2617 = vshrl.u32 %v2579, 16
    %v2619 = vrot.slane %v2617, 7
    %v2620 = vrot.slane %v2619, 1
    %v2621 = vshll.u32 %v2581, 16
    %v2623 = vsel %vm1971, %v2620, %v2621
    %v2624 = vshrl.u32 %v2581, 16
    %v2626 = vrot.slane %v2624, 7
    %v2627 = vrot.slane %v2626, 1
    %v2628 = vshll.u32 %v2583, 16
    %v2630 = vsel %vm1971, %v2627, %v2628
    %v2631 = vshrl.u32 %v2583, 16
    %v2633 = vrot.slane %v2631, 7
    %v2634 = vrot.slane %v2633, 1
    %v2635 = vshll.u32 %v2585, 16
    %v2637 = vsel %vm1971, %v2634, %v2635
    %v2638 = vshrl.u32 %v2585, 16
    %v2640 = vrot.slane %v2638, 7
    %v2641 = vrot.slane %v2640, 1
    %v2642 = vshll.u32 %v2587, 16
    %v2644 = vsel %vm1971, %v2641, %v2642
    %v2645 = vshrl.u32 %v2587, 16
    %v2647 = vrot.slane %v2645, 7
    %v2648 = vrot.slane %v2647, 1
    %v2649 = vshll.u32 %v2589, 16
    %v2651 = vsel %vm1971, %v2648, %v2649
    %v2652 = vshrl.u32 %v2589, 16
    %v2654 = vrot.slane %v2652, 7
    %v2655 = vrot.slane %v2654, 1
    %v2656 = vshll.u32 %v2591, 16
    %v2658 = vsel %vm1971, %v2655, %v2656
    %v2659 = vshrl.u32 %v2591, 16
    %v2661 = vrot.slane %v2659, 7
    %v2662 = vrot.slane %v2661, 1
    %v2663 = vshll.u32 %v2595, 16
    %v2665 = vsel %vm1971, %v2662, %v2663
    %v2666 = vshrl.u32 %v2595, 16
    %v2668 = vrot.slane %v2666, 7
    %v2669 = vrot.slane %v2668, 1
    %v2670 = vshll.u32 %v2596, 16
    %v2672 = vsel %vm1971, %v2669, %v2670
    %v2673 = vshrl.u32 %v2596, 16
    %v2675 = vrot.slane %v2673, 7
    %v2676 = vrot.slane %v2675, 1
    %v2677 = vshll.u32 %v2597, 16
    %v2679 = vsel %vm1971, %v2676, %v2677
    %v2680 = vshrl.u32 %v2597, 16
    %v2682 = vrot.slane %v2680, 7
    %v2683 = vrot.slane %v2682, 1
    %v2684 = vshll.u32 %v2598, 16
    %v2686 = vsel %vm1971, %v2683, %v2684
    %v2687 = vshrl.u32 %v2598, 16
    %v2689 = vrot.slane %v2687, 7
    %v2690 = vrot.slane %v2689, 1
    %v2691 = vshll.u32 %v2599, 16
    %v2693 = vsel %vm1971, %v2690, %v2691
    %v2694 = vshrl.u32 %v2602, 16
    %v2696 = vrot.slane %v2694, 7
    %v2697 = vrot.slane %v2696, 1
    %v2698 = vshll.u32 %v2603, 16
    %v2700 = vsel %vm1971, %v2697, %v2698
    %v2701 = vshrl.u32 %v2603, 16
    %v2703 = vrot.slane %v2701, 7
    %v2704 = vrot.slane %v2703, 1
    %v2705 = vshll.u32 %v2604, 16
    %v2707 = vsel %vm1971, %v2704, %v2705
    %v2708 = vshrl.u32 %v2604, 16
    %v2710 = vrot.slane %v2708, 7
    %v2711 = vrot.slane %v2710, 1
    %v2712 = vshll.u32 %v2605, 16
    %v2714 = vsel %vm1971, %v2711, %v2712
    %v2715 = vshrl.u32 %v2605, 16
    %v2717 = vrot.slane %v2715, 7
    %v2718 = vrot.slane %v2717, 1
    %v2719 = vshll.u32 %v2606, 16
    %v2721 = vsel %vm1971, %v2718, %v2719
    %v2722 = vshrl.u32 %v2606, 16
    %v2724 = vrot.slane %v2722, 7
    %v2725 = vrot.slane %v2724, 1
    %v2726 = vshll.u32 %v2607, 16
    %v2728 = vsel %vm1971, %v2725, %v2726
    %v2729 = vshrl.u32 %v2607, 16
    %v2731 = vrot.slane %v2729, 7
    %v2732 = vrot.slane %v2731, 1
    %v2733 = vshll.u32 %v2608, 16
    %v2735 = vsel %vm1971, %v2732, %v2733
    %v2736 = vshrl.u32 %v2608, 16
    %v2738 = vrot.slane %v2736, 7
    %v2739 = vrot.slane %v2738, 1
    %v2740 = vshll.u32 %v2612, 16
    %v2742 = vsel %vm1971, %v2739, %v2740
    %v2743 = vshrl.u32 %v2612, 16
    %v2745 = vrot.slane %v2743, 7
    %v2746 = vrot.slane %v2745, 1
    %v2747 = vshll.u32 %v2613, 16
    %v2749 = vsel %vm1971, %v2746, %v2747
    %v2750 = vshrl.u32 %v2613, 16
    %v2752 = vrot.slane %v2750, 7
    %v2753 = vrot.slane %v2752, 1
    %v2754 = vshll.u32 %v2614, 16
    %v2756 = vsel %vm1971, %v2753, %v2754
    %v2757 = vshrl.u32 %v2614, 16
    %v2759 = vrot.slane %v2757, 7
    %v2760 = vrot.slane %v2759, 1
    %v2761 = vshll.u32 %v2615, 16
    %v2763 = vsel %vm1971, %v2760, %v2761
    %v2764 = vshrl.u32 %v2615, 16
    %v2766 = vrot.slane %v2764, 7
    %v2767 = vrot.slane %v2766, 1
    %v2768 = vshll.u32 %v2616, 16
    %v2770 = vsel %vm1971, %v2767, %v2768
    %2772 = vst [vmem:[#allocation1] ss:$9 sm:$0xff] %v2623
    %s2774 = scalar_lea.vmem [#allocation1], 1
    %2775 = vst [vmem:[%s2774] ss:$9 sm:$0xff] %v2630
    %s2777 = scalar_lea.vmem [#allocation1], 2
    %2778 = vst [vmem:[%s2777] ss:$9 sm:$0xff] %v2637
    %s2780 = scalar_lea.vmem [#allocation1], 3
    %2781 = vst [vmem:[%s2780] ss:$9 sm:$0xff] %v2644
    %s2783 = scalar_lea.vmem [#allocation1], 4
    %2784 = vst [vmem:[%s2783] ss:$9 sm:$0xff] %v2651
    %s2786 = scalar_lea.vmem [#allocation1], 5
    %2787 = vst [vmem:[%s2786] ss:$9 sm:$0xff] %v2658
    %s2789 = scalar_lea.vmem [#allocation1], 6
    %2790 = vst [vmem:[%s2789] ss:$9 sm:$0xff] %v2665
    %s2792 = scalar_lea.vmem [#allocation1], 7
    %2793 = vst [vmem:[%s2792] ss:$9 sm:$0xff] %v2672
    %v2794 = vld [vmem:[#allocation1] sm:$0xff]
    %2796 = vst [vmem:[#allocation1] ss:$9 sm:$0xff] %v2679
    %2798 = vst [vmem:[%s2774] ss:$9 sm:$0xff] %v2686
    %2800 = vst [vmem:[%s2777] ss:$9 sm:$0xff] %v2693
    %2802 = vst [vmem:[%s2780] ss:$9 sm:$0xff] %v2700
    %2804 = vst [vmem:[%s2783] ss:$9 sm:$0xff] %v2707
    %2806 = vst [vmem:[%s2786] ss:$9 sm:$0xff] %v2714
    %2808 = vst [vmem:[%s2789] ss:$9 sm:$0xff] %v2721
    %2810 = vst [vmem:[%s2792] ss:$9 sm:$0xff] %v2728
    %v2811 = vld [vmem:[#allocation1] sm:$0xff]
    %2813 = vst [vmem:[#allocation1] ss:$9 sm:$0xff] %v2735
    %2815 = vst [vmem:[%s2774] ss:$9 sm:$0xff] %v2742
    %2817 = vst [vmem:[%s2777] ss:$9 sm:$0xff] %v2749
    %2819 = vst [vmem:[%s2780] ss:$9 sm:$0xff] %v2756
    %2821 = vst [vmem:[%s2783] ss:$9 sm:$0xff] %v2763
    %2823 = vst [vmem:[%s2786] ss:$9 sm:$0xff] %v2770
    %v2824 = vld [vmem:[#allocation1] sm:$0xff]
    %v2833 = vunpack.c.l.b16 %v2568
    %v2834 = vunpack.c.l.b16 %v2569
    %v2835 = vunpack.c.l.b16 %v2570
    %v2836 = vunpack.c.l.b16 %v2571
    %v2837 = vunpack.c.l.b16 %v2572
    %v2838 = vunpack.c.l.b16 %v2573
    %v2839 = vunpack.c.l.b16 %v2574
    %v2840 = vunpack.c.l.b16 %v2575
    %v2841 = vpack.c.b16 %v2834, %v2833
    %v2842 = vpack.c.b16 %v2836, %v2835
    %v2843 = vpack.c.b16 %v2838, %v2837
    %v2844 = vpack.c.b16 %v2840, %v2839
    %v2849 = vsel %vm2222, %v2794, 0
    %v2851 = vsel %vm2222, %v2811, 0
    %v2853 = vsel %vm2222, %v2824, 0
    %2855 = vmatpush.bf16.msra.mxu0 0
    %2856 = vmatpush.bf16.msra.mxu0 0
    %2857 = vmatpush.bf16.msra.mxu0 0
    %2858 = vmatpush.bf16.msra.mxu0 0
    %2859 = vmatpush.bf16.msra.mxu0 %v2844
    %2860 = vmatpush.bf16.msra.mxu0 %v2843
    %2861 = vmatpush.bf16.msra.mxu0 %v2842
    %2862 = vmatpush.bf16.msra.mxu0 %v2841
    %2863 = vmatmul.bf16.gmra.mxu0 %v2849
    %v2864 = vpop.f32.mrf.mxu0
    %v2865 = vadd.f32 0.0, %v2864
    %v2866 = vpop.f32.mrf.mxu0
    %v2867 = vadd.f32 0.0, %v2866
    %2868 = vmatmul.bf16.gmra.mxu0 %v2851
    %v2869 = vpop.f32.mrf.mxu0
    %v2870 = vadd.f32 0.0, %v2869
    %v2871 = vpop.f32.mrf.mxu0
    %v2872 = vadd.f32 0.0, %v2871
    %2873 = vmatmul.bf16.gmra.mxu0 %v2853
    %v2874 = vpop.f32.mrf.mxu0
    %v2875 = vadd.f32 0.0, %v2874
    %v2876 = vpop.f32.mrf.mxu0
    %v2877 = vadd.f32 0.0, %v2876
    %2878 = vdwg.mxu0
    %v2885 = vrot.slane %v2865, 2
    %v2886 = vrot.slane %v2865, 4
    %v2887 = vrot.slane %v2865, 6
    %v2888 = vrot.slane %v2867, 2
    %v2889 = vrot.slane %v2867, 4
    %v2890 = vrot.slane %v2867, 6
    %v2891 = vrot.slane %v2870, 2
    %v2892 = vrot.slane %v2870, 4
    %v2893 = vrot.slane %v2870, 6
    %v2894 = vrot.slane %v2872, 2
    %v2895 = vrot.slane %v2872, 4
    %v2896 = vrot.slane %v2872, 6
    %v2897 = vrot.slane %v2875, 2
    %v2898 = vrot.slane %v2875, 4
    %v2899 = vrot.slane %v2875, 6
    %v2900 = vrot.slane %v2877, 2
    %v2917 = vadd.f32 %v2545, %v2865
    %v2918 = vadd.f32 %v2546, %v2885
    %v2919 = vadd.f32 %v2547, %v2886
    %v2920 = vadd.f32 %v2548, %v2887
    %v2921 = vadd.f32 %v2549, %v2867
    %v2922 = vadd.f32 %v2550, %v2888
    %v2923 = vadd.f32 %v2551, %v2889
    %v2924 = vadd.f32 %v2552, %v2890
    %v2925 = vadd.f32 %v2553, %v2870
    %v2926 = vadd.f32 %v2554, %v2891
    %v2927 = vadd.f32 %v2555, %v2892
    %v2928 = vadd.f32 %v2556, %v2893
    %v2929 = vadd.f32 %v2557, %v2872
    %v2930 = vadd.f32 %v2558, %v2894
    %v2931 = vadd.f32 %v2559, %v2895
    %v2932 = vadd.f32 %v2560, %v2896
    %v2933 = vadd.f32 %v2561, %v2875
    %v2934 = vadd.f32 %v2562, %v2897
    %v2935 = vadd.f32 %v2563, %v2898
    %v2936 = vadd.f32 %v2564, %v2899
    %v2937 = vadd.f32 %v2565, %v2877
    %v2938 = vadd.f32 %v2566, %v2900
    %s2939 = scalar_lea.vmem [#allocation7], 128
    %v2940 = vld [vmem:[%s2939] sm:$0xf]
    %v2941 = vld [vmem:[%s2939 + $0x4] sm:$0xf]
    %v2942 = vld [vmem:[%s2939 + $0x8] sm:$0xf]
    %v2943 = vld [vmem:[%s2939 + $0xc] sm:$0xf]
    %v2944 = vld [vmem:[%s2939 + $0x10] sm:$0xf]
    %v2945 = vld [vmem:[%s2939 + $0x14] sm:$0xf]
    %v2946 = vld [vmem:[%s2939 + $0x18] sm:$0xf]
    %v2947 = vld [vmem:[%s2939 + $0x1c] sm:$0xf]
    %2948 = vst [vmem:[#allocation1] sm:$0xff] %v1844
    %2949 = vst [vmem:[#allocation1 + $0x20] sm:$0xff] %v1845
    %s2950 = scalar_lea.vmem [#allocation1], 2
    %v2951 = vld [vmem:[%s2950] ss:$4 sm:$0xff]
    %s2952 = scalar_lea.vmem [#allocation1], 3
    %v2953 = vld [vmem:[%s2952] ss:$4 sm:$0xff]
    %s2954 = scalar_lea.vmem [#allocation1], 32
    %v2955 = vld [vmem:[%s2954] ss:$4 sm:$0xff]
    %s2956 = scalar_lea.vmem [#allocation1], 33
    %v2957 = vld [vmem:[%s2956] ss:$4 sm:$0xff]
    %s2958 = scalar_lea.vmem [#allocation1], 34
    %v2959 = vld [vmem:[%s2958] ss:$4 sm:$0xff]
    %s2960 = scalar_lea.vmem [#allocation1], 35
    %v2961 = vld [vmem:[%s2960] ss:$4 sm:$0xff]
    %2962 = vst [vmem:[#allocation1] sm:$0xff] %v1846
    %2963 = vst [vmem:[#allocation1 + $0x20] sm:$0xff] %v1847
    %v2964 = vld [vmem:[#allocation1] ss:$4 sm:$0xff]
    %s2965 = scalar_lea.vmem [#allocation1], 1
    %v2966 = vld [vmem:[%s2965] ss:$4 sm:$0xff]
    %v2967 = vld [vmem:[%s2950] ss:$4 sm:$0xff]
    %v2968 = vld [vmem:[%s2952] ss:$4 sm:$0xff]
    %v2969 = vld [vmem:[%s2954] ss:$4 sm:$0xff]
    %2970 = vst [vmem:[#allocation1] sm:$0xff] %v1848
    %2971 = vst [vmem:[#allocation1 + $0x20] sm:$0xff] %v1849
    %v2972 = vld [vmem:[%s2950] ss:$4 sm:$0xff]
    %v2973 = vld [vmem:[%s2952] ss:$4 sm:$0xff]
    %v2974 = vld [vmem:[%s2954] ss:$4 sm:$0xff]
    %v2975 = vld [vmem:[%s2956] ss:$4 sm:$0xff]
    %v2976 = vld [vmem:[%s2958] ss:$4 sm:$0xff]
    %v2977 = vld [vmem:[%s2960] ss:$4 sm:$0xff]
    %2978 = vst [vmem:[#allocation1] sm:$0xff] %v1850
    %2979 = vst [vmem:[#allocation1 + $0x20] sm:$0xff] %v1851
    %v2980 = vld [vmem:[#allocation1] ss:$4 sm:$0xff]
    %v2981 = vld [vmem:[%s2965] ss:$4 sm:$0xff]
    %v2982 = vld [vmem:[%s2950] ss:$4 sm:$0xff]
    %v2983 = vld [vmem:[%s2952] ss:$4 sm:$0xff]
    %v2984 = vld [vmem:[%s2954] ss:$4 sm:$0xff]
    %2985 = vst [vmem:[#allocation1] ss:$9 sm:$0xff] %v2951
    %s2986 = scalar_lea.vmem [#allocation1], 1
    %2987 = vst [vmem:[%s2986] ss:$9 sm:$0xff] %v2953
    %s2988 = scalar_lea.vmem [#allocation1], 2
    %2989 = vst [vmem:[%s2988] ss:$9 sm:$0xff] %v2955
    %s2990 = scalar_lea.vmem [#allocation1], 3
    %2991 = vst [vmem:[%s2990] ss:$9 sm:$0xff] %v2957
    %s2992 = scalar_lea.vmem [#allocation1], 4
    %2993 = vst [vmem:[%s2992] ss:$9 sm:$0xff] %v2959
    %s2994 = scalar_lea.vmem [#allocation1], 5
    %2995 = vst [vmem:[%s2994] ss:$9 sm:$0xff] %v2961
    %s2996 = scalar_lea.vmem [#allocation1], 6
    %2997 = vst [vmem:[%s2996] ss:$9 sm:$0xff] %v2964
    %s2998 = scalar_lea.vmem [#allocation1], 7
    %2999 = vst [vmem:[%s2998] ss:$9 sm:$0xff] %v2966
    %v3000 = vld [vmem:[#allocation1] sm:$0xff]
    %3001 = vst [vmem:[#allocation1] ss:$9 sm:$0xff] %v2967
    %3002 = vst [vmem:[%s2986] ss:$9 sm:$0xff] %v2968
    %3003 = vst [vmem:[%s2988] ss:$9 sm:$0xff] %v2969
    %3004 = vst [vmem:[%s2990] ss:$9 sm:$0xff] %v2972
    %3005 = vst [vmem:[%s2992] ss:$9 sm:$0xff] %v2973
    %3006 = vst [vmem:[%s2994] ss:$9 sm:$0xff] %v2974
    %3007 = vst [vmem:[%s2996] ss:$9 sm:$0xff] %v2975
    %3008 = vst [vmem:[%s2998] ss:$9 sm:$0xff] %v2976
    %v3009 = vld [vmem:[#allocation1] sm:$0xff]
    %3010 = vst [vmem:[#allocation1] ss:$9 sm:$0xff] %v2977
    %3011 = vst [vmem:[%s2986] ss:$9 sm:$0xff] %v2980
    %3012 = vst [vmem:[%s2988] ss:$9 sm:$0xff] %v2981
    %3013 = vst [vmem:[%s2990] ss:$9 sm:$0xff] %v2982
    %3014 = vst [vmem:[%s2992] ss:$9 sm:$0xff] %v2983
    %3015 = vst [vmem:[%s2994] ss:$9 sm:$0xff] %v2984
    %v3016 = vld [vmem:[#allocation1] sm:$0xff]
    %v3025 = vunpack.c.l.b16 %v2940
    %v3026 = vunpack.c.l.b16 %v2941
    %v3027 = vunpack.c.l.b16 %v2942
    %v3028 = vunpack.c.l.b16 %v2943
    %v3029 = vunpack.c.l.b16 %v2944
    %v3030 = vunpack.c.l.b16 %v2945
    %v3031 = vunpack.c.l.b16 %v2946
    %v3032 = vunpack.c.l.b16 %v2947
    %v3033 = vpack.c.b16 %v3026, %v3025
    %v3034 = vpack.c.b16 %v3028, %v3027
    %v3035 = vpack.c.b16 %v3030, %v3029
    %v3036 = vpack.c.b16 %v3032, %v3031
    %v3041 = vsel %vm2222, %v3000, 0
    %v3043 = vsel %vm2222, %v3009, 0
    %v3045 = vsel %vm2222, %v3016, 0
    %3047 = vmatpush.bf16.msra.mxu0 0
    %3048 = vmatpush.bf16.msra.mxu0 0
    %3049 = vmatpush.bf16.msra.mxu0 0
    %3050 = vmatpush.bf16.msra.mxu0 0
    %3051 = vmatpush.bf16.msra.mxu0 %v3036
    %3052 = vmatpush.bf16.msra.mxu0 %v3035
    %3053 = vmatpush.bf16.msra.mxu0 %v3034
    %3054 = vmatpush.bf16.msra.mxu0 %v3033
    %3055 = vmatmul.bf16.gmra.mxu0 %v3041
    %v3056 = vpop.f32.mrf.mxu0
    %v3057 = vadd.f32 0.0, %v3056
    %v3058 = vpop.f32.mrf.mxu0
    %v3059 = vadd.f32 0.0, %v3058
    %3060 = vmatmul.bf16.gmra.mxu0 %v3043
    %v3061 = vpop.f32.mrf.mxu0
    %v3062 = vadd.f32 0.0, %v3061
    %v3063 = vpop.f32.mrf.mxu0
    %v3064 = vadd.f32 0.0, %v3063
    %3065 = vmatmul.bf16.gmra.mxu0 %v3045
    %v3066 = vpop.f32.mrf.mxu0
    %v3067 = vadd.f32 0.0, %v3066
    %v3068 = vpop.f32.mrf.mxu0
    %v3069 = vadd.f32 0.0, %v3068
    %3070 = vdwg.mxu0
    %v3077 = vrot.slane %v3057, 2
    %v3078 = vrot.slane %v3057, 4
    %v3079 = vrot.slane %v3057, 6
    %v3080 = vrot.slane %v3059, 2
    %v3081 = vrot.slane %v3059, 4
    %v3082 = vrot.slane %v3059, 6
    %v3083 = vrot.slane %v3062, 2
    %v3084 = vrot.slane %v3062, 4
    %v3085 = vrot.slane %v3062, 6
    %v3086 = vrot.slane %v3064, 2
    %v3087 = vrot.slane %v3064, 4
    %v3088 = vrot.slane %v3064, 6
    %v3089 = vrot.slane %v3067, 2
    %v3090 = vrot.slane %v3067, 4
    %v3091 = vrot.slane %v3067, 6
    %v3092 = vrot.slane %v3069, 2
    %v3109 = vadd.f32 %v2917, %v3057
    %v3110 = vadd.f32 %v2918, %v3077
    %v3111 = vadd.f32 %v2919, %v3078
    %v3112 = vadd.f32 %v2920, %v3079
    %v3113 = vadd.f32 %v2921, %v3059
    %v3114 = vadd.f32 %v2922, %v3080
    %v3115 = vadd.f32 %v2923, %v3081
    %v3116 = vadd.f32 %v2924, %v3082
    %v3117 = vadd.f32 %v2925, %v3062
    %v3118 = vadd.f32 %v2926, %v3083
    %v3119 = vadd.f32 %v2927, %v3084
    %v3120 = vadd.f32 %v2928, %v3085
    %v3121 = vadd.f32 %v2929, %v3064
    %v3122 = vadd.f32 %v2930, %v3086
    %v3123 = vadd.f32 %v2931, %v3087
    %v3124 = vadd.f32 %v2932, %v3088
    %v3125 = vadd.f32 %v2933, %v3067
    %v3126 = vadd.f32 %v2934, %v3089
    %v3127 = vadd.f32 %v2935, %v3090
    %v3128 = vadd.f32 %v2936, %v3091
    %v3129 = vadd.f32 %v2937, %v3069
    %v3130 = vadd.f32 %v2938, %v3092
    %v3131 = vld [vmem:[#allocation8] sm:$0x1]
    %v3133 = vperm.slane %v3131, 0
    %v3135 = vrot.slane %v3133, 2
    %v3136 = vrot.slane %v3133, 4
    %v3137 = vrot.slane %v3133, 6
    %v3141 = vadd.f32 %v3109, %v3133
    %v3142 = vadd.f32 %v3110, %v3135
    %v3143 = vadd.f32 %v3111, %v3136
    %v3144 = vadd.f32 %v3112, %v3137
    %v3145 = vadd.f32 %v3113, %v3133
    %v3146 = vadd.f32 %v3114, %v3135
    %v3147 = vadd.f32 %v3115, %v3136
    %v3148 = vadd.f32 %v3116, %v3137
    %v3149 = vadd.f32 %v3117, %v3133
    %v3150 = vadd.f32 %v3118, %v3135
    %v3151 = vadd.f32 %v3119, %v3136
    %v3152 = vadd.f32 %v3120, %v3133
    %v3153 = vadd.f32 %v3121, %v3135
    %v3154 = vadd.f32 %v3122, %v3136
    %v3155 = vadd.f32 %v3123, %v3137
    %v3156 = vadd.f32 %v3124, %v3133
    %v3157 = vadd.f32 %v3125, %v3135
    %v3158 = vadd.f32 %v3126, %v3136
    %v3159 = vadd.f32 %v3127, %v3137
    %v3160 = vadd.f32 %v3128, %v3133
    %v3161 = vadd.f32 %v3129, %v3135
    %v3162 = vadd.f32 %v3130, %v3136
    %v3163 = vmax.f32 %v3141, 0.0
    %v3164 = vmax.f32 %v3142, 0.0
    %v3165 = vmax.f32 %v3143, 0.0
    %v3166 = vmax.f32 %v3144, 0.0
    %v3167 = vmax.f32 %v3145, 0.0
    %v3168 = vmax.f32 %v3146, 0.0
    %v3169 = vmax.f32 %v3147, 0.0
    %v3170 = vmax.f32 %v3148, 0.0
    %v3171 = vmax.f32 %v3149, 0.0
    %v3172 = vmax.f32 %v3150, 0.0
    %v3173 = vmax.f32 %v3151, 0.0
    %v3174 = vmax.f32 %v3152, 0.0
    %v3175 = vmax.f32 %v3153, 0.0
    %v3176 = vmax.f32 %v3154, 0.0
    %v3177 = vmax.f32 %v3155, 0.0
    %v3178 = vmax.f32 %v3156, 0.0
    %v3179 = vmax.f32 %v3157, 0.0
    %v3180 = vmax.f32 %v3158, 0.0
    %v3181 = vmax.f32 %v3159, 0.0
    %v3182 = vmax.f32 %v3160, 0.0
    %v3183 = vmax.f32 %v3161, 0.0
    %v3184 = vmax.f32 %v3162, 0.0
    %3207 = vst [vmem:[#allocation1] ss:$4 sm:$0xff] %v3163
    %s3208 = scalar_lea.vmem [#allocation1], 1
    %3209 = vst [vmem:[%s3208] ss:$4 sm:$0xff] %v3164
    %s3210 = scalar_lea.vmem [#allocation1], 2
    %3211 = vst [vmem:[%s3210] ss:$4 sm:$0xff] %v3165
    %s3212 = scalar_lea.vmem [#allocation1], 3
    %3213 = vst [vmem:[%s3212] ss:$4 sm:$0xff] %v3166
    %s3214 = scalar_lea.vmem [#allocation1], 32
    %3215 = vst [vmem:[%s3214] ss:$4 sm:$0xff] %v3167
    %s3216 = scalar_lea.vmem [#allocation1], 33
    %3217 = vst [vmem:[%s3216] ss:$4 sm:$0xff] %v3168
    %s3218 = scalar_lea.vmem [#allocation1], 34
    %3219 = vst [vmem:[%s3218] ss:$4 sm:$0xff] %v3169
    %s3220 = scalar_lea.vmem [#allocation1], 35
    %3221 = vst [vmem:[%s3220] ss:$4 sm:$0xff] %v3170
    %v3222 = vld.sshfl [vmem:[#allocation1] sm:$0xff pattern:$0x73625140]
    %v3223 = vld.sshfl [vmem:[#allocation1 + $0x20] sm:$0xff pattern:$0x73625140]
    %3224 = vst [vmem:[#allocation1] ss:$4 sm:$0xff] %v3171
    %3225 = vst [vmem:[%s3208] ss:$4 sm:$0xff] %v3172
    %3226 = vst [vmem:[%s3210] ss:$4 sm:$0xff] %v3173
    %v3227 = vld.sshfl [vmem:[#allocation1] sm:$0xff pattern:$0x73625140]
    %3228 = vst [vmem:[%s3214] ss:$4 sm:$0xff] %v3174
    %3229 = vst [vmem:[%s3216] ss:$4 sm:$0xff] %v3175
    %3230 = vst [vmem:[%s3218] ss:$4 sm:$0xff] %v3176
    %3231 = vst [vmem:[%s3220] ss:$4 sm:$0xff] %v3177
    %v3232 = vld.sshfl [vmem:[#allocation1 + $0x20] sm:$0xff pattern:$0x73625140]
    %3233 = vst [vmem:[#allocation1] ss:$4 sm:$0xff] %v3178
    %3234 = vst [vmem:[%s3208] ss:$4 sm:$0xff] %v3179
    %3235 = vst [vmem:[%s3210] ss:$4 sm:$0xff] %v3180
    %3236 = vst [vmem:[%s3212] ss:$4 sm:$0xff] %v3181
    %3237 = vst [vmem:[%s3214] ss:$4 sm:$0xff] %v3182
    %3238 = vst [vmem:[%s3216] ss:$4 sm:$0xff] %v3183
    %3239 = vst [vmem:[%s3218] ss:$4 sm:$0xff] %v3184
    %v3240 = vld.sshfl [vmem:[#allocation1] sm:$0xff pattern:$0x73625140]
    %v3241 = vld.sshfl [vmem:[#allocation1 + $0x20] sm:$0xff pattern:$0x73625140]
    %v3248 = vpack.c.bf16 %v3222, %v3222
    %v3249 = vpack.c.bf16 %v3223, %v3223
    %v3250 = vpack.c.bf16 %v3227, %v3227
    %v3251 = vpack.c.bf16 %v3232, %v3232
    %v3252 = vpack.c.bf16 %v3240, %v3240
    %v3253 = vpack.c.bf16 %v3241, %v3241
    %v3254 = vld [vmem:[#allocation10] sm:$0xff]
    %v3255 = vld [vmem:[#allocation10 + $0x8] sm:$0xff]
    %v3256 = vld [vmem:[#allocation10 + $0x10] sm:$0xff]
    %v3257 = vld [vmem:[#allocation10 + $0x18] sm:$0xff]
    %v3258 = vld [vmem:[#allocation10 + $0x20] sm:$0xff]
    %v3259 = vld [vmem:[#allocation10 + $0x28] sm:$0xff]
    %v3260 = vld [vmem:[#allocation10 + $0x30] sm:$0xff]
    %v3261 = vld [vmem:[#allocation10 + $0x38] sm:$0xff]
    %v3262 = vld [vmem:[#allocation10 + $0x40] sm:$0xff]
    %v3263 = vld [vmem:[#allocation10 + $0x48] sm:$0xff]
    %v3264 = vld [vmem:[#allocation10 + $0x50] sm:$0xff]
    %v3265 = vld [vmem:[#allocation10 + $0x58] sm:$0xff]
    %v3266 = vld [vmem:[#allocation10 + $0x60] sm:$0xff]
    %v3267 = vld [vmem:[#allocation10 + $0x68] sm:$0xff]
    %v3268 = vld [vmem:[#allocation10 + $0x70] sm:$0xff]
    %v3269 = vld [vmem:[#allocation10 + $0x78] sm:$0xff]
    %s3270 = scalar_lea.vmem [#allocation10], 128
    %v3271 = vld [vmem:[%s3270] sm:$0xff]
    %v3272 = vld [vmem:[%s3270 + $0x8] sm:$0xff]
    %v3273 = vld [vmem:[%s3270 + $0x10] sm:$0xff]
    %v3274 = vld [vmem:[%s3270 + $0x18] sm:$0xff]
    %v3275 = vld [vmem:[%s3270 + $0x20] sm:$0xff]
    %v3276 = vld [vmem:[%s3270 + $0x28] sm:$0xff]
    %v3277 = vld [vmem:[%s3270 + $0x30] sm:$0xff]
    %v3278 = vld [vmem:[%s3270 + $0x38] sm:$0xff]
    %v3279 = vld [vmem:[%s3270 + $0x40] sm:$0xff]
    %v3280 = vld [vmem:[%s3270 + $0x48] sm:$0xff]
    %v3281 = vld [vmem:[%s3270 + $0x50] sm:$0xff]
    %v3282 = vld [vmem:[%s3270 + $0x58] sm:$0xff]
    %v3283 = vld [vmem:[%s3270 + $0x60] sm:$0xff]
    %v3284 = vld [vmem:[%s3270 + $0x68] sm:$0xff]
    %v3285 = vld [vmem:[%s3270 + $0x70] sm:$0xff]
    %v3286 = vld [vmem:[%s3270 + $0x78] sm:$0xff]
    %v3293 = vrot.slane %v3248, 2
    %v3294 = vrot.slane %v3249, 2
    %v3295 = vrot.slane %v3250, 2
    %v3296 = vrot.slane %v3251, 2
    %v3297 = vrot.slane %v3252, 2
    %v3298 = vrot.slane %v3253, 2
    %vm3299 = vcmask 1041408
    %v3302 = vsel %vm3299, %v3248, %v3293
    %vm3303 = vcmask 1043458
    %v3304 = vsel %vm3303, %v3248, %v3293
    %v3306 = vrot.slane %v3304, 2
    %v3309 = vsel %vm3299, %v3249, %v3294
    %v3310 = vsel %vm3303, %v3249, %v3294
    %v3312 = vrot.slane %v3310, 2
    %v3315 = vsel %vm3299, %v3250, %v3295
    %v3316 = vsel %vm3303, %v3250, %v3295
    %v3318 = vrot.slane %v3316, 2
    %v3321 = vsel %vm3299, %v3251, %v3296
    %v3322 = vsel %vm3303, %v3251, %v3296
    %v3324 = vrot.slane %v3322, 2
    %v3327 = vsel %vm3299, %v3252, %v3297
    %v3328 = vsel %vm3303, %v3252, %v3297
    %v3330 = vrot.slane %v3328, 2
    %v3333 = vsel %vm3299, %v3253, %v3298
    %v3334 = vsel %vm3303, %v3253, %v3298
    %v3336 = vrot.slane %v3334, 2
    %vm3337 = vsmask.f32 1280
    %vm3338 = vsmask.f32 3336
    %vm3339 = vmor %vm3337, %vm3338
    %vm3340 = vsmask.f32 5392
    %vm3341 = vmor %vm3339, %vm3340
    %vm3342 = vsmask.f32 7448
    %vm3343 = vmor %vm3341, %vm3342
    %v3344 = vshrl.u32 %v3302, 16
    %v3346 = vrot.slane %v3344, 6
    %v3347 = vshll.u32 %v3302, 16
    %v3349 = vrot.slane %v3347, 7
    %v3350 = vor.u32 %v3346, %v3349
    %v3351 = vrot.slane %v3350, 2
    %v3353 = vshll.u32 %v3306, 16
    %v3355 = vrot.slane %v3353, 7
    %v3356 = vsel %vm3343, %v3351, %v3355
    %v3357 = vshrl.u32 %v3306, 16
    %v3359 = vrot.slane %v3357, 6
    %v3360 = vor.u32 %v3359, %v3355
    %v3361 = vrot.slane %v3360, 2
    %v3362 = vshll.u32 %v3309, 16
    %v3364 = vrot.slane %v3362, 7
    %v3365 = vsel %vm3343, %v3361, %v3364
    %v3366 = vshrl.u32 %v3309, 16
    %v3368 = vrot.slane %v3366, 6
    %v3369 = vor.u32 %v3368, %v3364
    %v3370 = vrot.slane %v3369, 2
    %v3372 = vshll.u32 %v3312, 16
    %v3374 = vrot.slane %v3372, 7
    %v3375 = vsel %vm3343, %v3370, %v3374
    %v3376 = vshrl.u32 %v3312, 16
    %v3378 = vrot.slane %v3376, 6
    %v3379 = vor.u32 %v3378, %v3374
    %v3380 = vrot.slane %v3379, 2
    %v3381 = vshll.u32 %v3315, 16
    %v3383 = vrot.slane %v3381, 7
    %v3384 = vsel %vm3343, %v3380, %v3383
    %v3385 = vshrl.u32 %v3315, 16
    %v3387 = vrot.slane %v3385, 6
    %v3388 = vor.u32 %v3387, %v3383
    %v3389 = vrot.slane %v3388, 2
    %v3391 = vshll.u32 %v3318, 16
    %v3393 = vrot.slane %v3391, 7
    %v3394 = vsel %vm3343, %v3389, %v3393
    %v3395 = vshrl.u32 %v3321, 16
    %v3397 = vrot.slane %v3395, 6
    %v3398 = vshll.u32 %v3321, 16
    %v3400 = vrot.slane %v3398, 7
    %v3401 = vor.u32 %v3397, %v3400
    %v3402 = vrot.slane %v3401, 2
    %v3404 = vshll.u32 %v3324, 16
    %v3406 = vrot.slane %v3404, 7
    %v3407 = vsel %vm3343, %v3402, %v3406
    %v3408 = vshrl.u32 %v3324, 16
    %v3410 = vrot.slane %v3408, 6
    %v3411 = vor.u32 %v3410, %v3406
    %v3412 = vrot.slane %v3411, 2
    %v3413 = vshll.u32 %v3327, 16
    %v3415 = vrot.slane %v3413, 7
    %v3416 = vsel %vm3343, %v3412, %v3415
    %v3417 = vshrl.u32 %v3327, 16
    %v3419 = vrot.slane %v3417, 6
    %v3420 = vor.u32 %v3419, %v3415
    %v3421 = vrot.slane %v3420, 2
    %v3423 = vshll.u32 %v3330, 16
    %v3425 = vrot.slane %v3423, 7
    %v3426 = vsel %vm3343, %v3421, %v3425
    %v3427 = vshrl.u32 %v3330, 16
    %v3429 = vrot.slane %v3427, 6
    %v3430 = vor.u32 %v3429, %v3425
    %v3431 = vrot.slane %v3430, 2
    %v3432 = vshll.u32 %v3333, 16
    %v3434 = vrot.slane %v3432, 7
    %v3435 = vsel %vm3343, %v3431, %v3434
    %v3436 = vshrl.u32 %v3333, 16
    %v3438 = vrot.slane %v3436, 6
    %v3439 = vor.u32 %v3438, %v3434
    %v3440 = vrot.slane %v3439, 2
    %v3442 = vshll.u32 %v3336, 16
    %v3444 = vrot.slane %v3442, 7
    %v3445 = vsel %vm3343, %v3440, %v3444
    %3447 = vst [vmem:[#allocation1] ss:$4 sm:$0xff] %v3356
    %s3449 = scalar_lea.vmem [#allocation1], 1
    %3450 = vst [vmem:[%s3449] ss:$4 sm:$0xff] %v3365
    %s3452 = scalar_lea.vmem [#allocation1], 2
    %3453 = vst [vmem:[%s3452] ss:$4 sm:$0xff] %v3375
    %s3455 = scalar_lea.vmem [#allocation1], 3
    %3456 = vst [vmem:[%s3455] ss:$4 sm:$0xff] %v3384
    %s3458 = scalar_lea.vmem [#allocation1], 32
    %3459 = vst [vmem:[%s3458] ss:$4 sm:$0xff] %v3394
    %s3461 = scalar_lea.vmem [#allocation1], 33
    %3462 = vst [vmem:[%s3461] ss:$4 sm:$0xff] %v3407
    %s3464 = scalar_lea.vmem [#allocation1], 34
    %3465 = vst [vmem:[%s3464] ss:$4 sm:$0xff] %v3416
    %s3467 = scalar_lea.vmem [#allocation1], 35
    %3468 = vst [vmem:[%s3467] ss:$4 sm:$0xff] %v3426
    %v3469 = vld.sshfl [vmem:[#allocation1] sm:$0xff pattern:$0x73625140]
    %v3470 = vld.sshfl [vmem:[#allocation1 + $0x20] sm:$0xff pattern:$0x73625140]
    %3472 = vst [vmem:[#allocation1] ss:$4 sm:$0xff] %v3435
    %3474 = vst [vmem:[%s3449] ss:$4 sm:$0xff] %v3445
    %v3475 = vld.sshfl [vmem:[#allocation1] sm:$0xff pattern:$0x73625140]
    %v3495 = vunpack.c.l.b16 %v3271
    %v3496 = vunpack.c.h.b16 %v3271
    %v3497 = vunpack.c.l.b16 %v3272
    %v3498 = vunpack.c.h.b16 %v3272
    %v3499 = vunpack.c.l.b16 %v3273
    %v3500 = vunpack.c.h.b16 %v3273
    %v3501 = vunpack.c.l.b16 %v3274
    %v3502 = vunpack.c.h.b16 %v3274
    %v3503 = vunpack.c.l.b16 %v3275
    %v3504 = vunpack.c.h.b16 %v3275
    %v3505 = vunpack.c.l.b16 %v3276
    %v3506 = vunpack.c.h.b16 %v3276
    %v3507 = vunpack.c.l.b16 %v3277
    %v3508 = vunpack.c.h.b16 %v3277
    %v3509 = vunpack.c.l.b16 %v3278
    %v3510 = vunpack.c.h.b16 %v3278
    %v3511 = vunpack.c.l.b16 %v3279
    %v3512 = vunpack.c.h.b16 %v3279
    %v3513 = vunpack.c.l.b16 %v3280
    %v3514 = vunpack.c.h.b16 %v3280
    %v3515 = vunpack.c.l.b16 %v3281
    %v3516 = vunpack.c.h.b16 %v3281
    %v3517 = vunpack.c.l.b16 %v3282
    %v3518 = vunpack.c.h.b16 %v3282
    %v3519 = vunpack.c.l.b16 %v3283
    %v3520 = vunpack.c.h.b16 %v3283
    %v3521 = vunpack.c.l.b16 %v3284
    %v3522 = vunpack.c.h.b16 %v3284
    %v3523 = vunpack.c.l.b16 %v3285
    %v3524 = vunpack.c.h.b16 %v3285
    %v3525 = vunpack.c.l.b16 %v3286
    %v3526 = vunpack.c.h.b16 %v3286
    %v3527 = vpack.c.b16 %v3497, %v3495
    %v3528 = vpack.c.b16 %v3498, %v3496
    %v3529 = vpack.c.b16 %v3501, %v3499
    %v3530 = vpack.c.b16 %v3502, %v3500
    %v3531 = vpack.c.b16 %v3505, %v3503
    %v3532 = vpack.c.b16 %v3506, %v3504
    %v3533 = vpack.c.b16 %v3509, %v3507
    %v3534 = vpack.c.b16 %v3510, %v3508
    %v3535 = vpack.c.b16 %v3513, %v3511
    %v3536 = vpack.c.b16 %v3514, %v3512
    %v3537 = vpack.c.b16 %v3517, %v3515
    %v3538 = vpack.c.b16 %v3518, %v3516
    %v3539 = vpack.c.b16 %v3521, %v3519
    %v3540 = vpack.c.b16 %v3522, %v3520
    %v3541 = vpack.c.b16 %v3525, %v3523
    %v3542 = vpack.c.b16 %v3526, %v3524
    %3559 = vmatpush.bf16.msra.mxu0 %v3541
    %3560 = vmatpush.bf16.msra.mxu0 %v3539
    %3561 = vmatpush.bf16.msra.mxu0 %v3537
    %3562 = vmatpush.bf16.msra.mxu0 %v3535
    %3563 = vmatpush.bf16.msra.mxu0 %v3533
    %3564 = vmatpush.bf16.msra.mxu0 %v3531
    %3565 = vmatpush.bf16.msra.mxu0 %v3529
    %3566 = vmatpush.bf16.msra.mxu0 %v3527
    %3567 = vmatmul.bf16.gmra.mxu0 %v3469
    %v3568 = vpop.f32.mrf.mxu0
    %v3569 = vadd.f32 0.0, %v3568
    %v3570 = vpop.f32.mrf.mxu0
    %v3571 = vadd.f32 0.0, %v3570
    %3572 = vmatmul.bf16.gmra.mxu0 %v3470
    %v3573 = vpop.f32.mrf.mxu0
    %v3574 = vadd.f32 0.0, %v3573
    %v3575 = vpop.f32.mrf.mxu0
    %v3576 = vadd.f32 0.0, %v3575
    %3577 = vmatmul.bf16.gmra.mxu0 %v3475
    %v3578 = vpop.f32.mrf.mxu0
    %v3579 = vadd.f32 0.0, %v3578
    %v3580 = vpop.f32.mrf.mxu0
    %3581 = vdwg.mxu0
    %3582 = vmatpush.bf16.msra.mxu0 %v3542
    %3583 = vmatpush.bf16.msra.mxu0 %v3540
    %3584 = vmatpush.bf16.msra.mxu0 %v3538
    %3585 = vmatpush.bf16.msra.mxu0 %v3536
    %3586 = vmatpush.bf16.msra.mxu0 %v3534
    %3587 = vmatpush.bf16.msra.mxu0 %v3532
    %3588 = vmatpush.bf16.msra.mxu0 %v3530
    %3589 = vmatpush.bf16.msra.mxu0 %v3528
    %3590 = vmatmul.bf16.gmra.mxu0 %v3469
    %v3591 = vpop.f32.mrf.mxu0
    %v3592 = vadd.f32 0.0, %v3591
    %v3593 = vpop.f32.mrf.mxu0
    %v3594 = vadd.f32 0.0, %v3593
    %3595 = vmatmul.bf16.gmra.mxu0 %v3470
    %v3596 = vpop.f32.mrf.mxu0
    %v3597 = vadd.f32 0.0, %v3596
    %v3598 = vpop.f32.mrf.mxu0
    %v3599 = vadd.f32 0.0, %v3598
    %3600 = vmatmul.bf16.gmra.mxu0 %v3475
    %v3601 = vpop.f32.mrf.mxu0
    %v3602 = vadd.f32 0.0, %v3601
    %v3603 = vpop.f32.mrf.mxu0
    %3604 = vdwg.mxu0
    %3605 = vst [vmem:[#allocation1] ss:$4 sm:$0xff] %v3302
    %s3606 = scalar_lea.vmem [#allocation1], 1
    %3607 = vst [vmem:[%s3606] ss:$4 sm:$0xff] %v3306
    %s3608 = scalar_lea.vmem [#allocation1], 2
    %3609 = vst [vmem:[%s3608] ss:$4 sm:$0xff] %v3309
    %s3610 = scalar_lea.vmem [#allocation1], 3
    %3611 = vst [vmem:[%s3610] ss:$4 sm:$0xff] %v3312
    %s3612 = scalar_lea.vmem [#allocation1], 32
    %3613 = vst [vmem:[%s3612] ss:$4 sm:$0xff] %v3315
    %s3614 = scalar_lea.vmem [#allocation1], 33
    %3615 = vst [vmem:[%s3614] ss:$4 sm:$0xff] %v3321
    %s3616 = scalar_lea.vmem [#allocation1], 34
    %3617 = vst [vmem:[%s3616] ss:$4 sm:$0xff] %v3324
    %s3618 = scalar_lea.vmem [#allocation1], 35
    %3619 = vst [vmem:[%s3618] ss:$4 sm:$0xff] %v3327
    %v3620 = vld.sshfl [vmem:[#allocation1] sm:$0xff pattern:$0x73625140]
    %v3621 = vld.sshfl [vmem:[#allocation1 + $0x20] sm:$0xff pattern:$0x73625140]
    %3622 = vst [vmem:[#allocation1] ss:$4 sm:$0xff] %v3330
    %3623 = vst [vmem:[%s3606] ss:$4 sm:$0xff] %v3333
    %v3624 = vld.sshfl [vmem:[#allocation1] sm:$0xff pattern:$0x73625140]
    %v3644 = vunpack.c.l.b16 %v3254
    %v3645 = vunpack.c.h.b16 %v3254
    %v3646 = vunpack.c.l.b16 %v3255
    %v3647 = vunpack.c.h.b16 %v3255
    %v3648 = vunpack.c.l.b16 %v3256
    %v3649 = vunpack.c.h.b16 %v3256
    %v3650 = vunpack.c.l.b16 %v3257
    %v3651 = vunpack.c.h.b16 %v3257
    %v3652 = vunpack.c.l.b16 %v3258
    %v3653 = vunpack.c.h.b16 %v3258
    %v3654 = vunpack.c.l.b16 %v3259
    %v3655 = vunpack.c.h.b16 %v3259
    %v3656 = vunpack.c.l.b16 %v3260
    %v3657 = vunpack.c.h.b16 %v3260
    %v3658 = vunpack.c.l.b16 %v3261
    %v3659 = vunpack.c.h.b16 %v3261
    %v3660 = vunpack.c.l.b16 %v3262
    %v3661 = vunpack.c.h.b16 %v3262
    %v3662 = vunpack.c.l.b16 %v3263
    %v3663 = vunpack.c.h.b16 %v3263
    %v3664 = vunpack.c.l.b16 %v3264
    %v3665 = vunpack.c.h.b16 %v3264
    %v3666 = vunpack.c.l.b16 %v3265
    %v3667 = vunpack.c.h.b16 %v3265
    %v3668 = vunpack.c.l.b16 %v3266
    %v3669 = vunpack.c.h.b16 %v3266
    %v3670 = vunpack.c.l.b16 %v3267
    %v3671 = vunpack.c.h.b16 %v3267
    %v3672 = vunpack.c.l.b16 %v3268
    %v3673 = vunpack.c.h.b16 %v3268
    %v3674 = vunpack.c.l.b16 %v3269
    %v3675 = vunpack.c.h.b16 %v3269
    %v3676 = vpack.c.b16 %v3646, %v3644
    %v3677 = vpack.c.b16 %v3647, %v3645
    %v3678 = vpack.c.b16 %v3650, %v3648
    %v3679 = vpack.c.b16 %v3651, %v3649
    %v3680 = vpack.c.b16 %v3654, %v3652
    %v3681 = vpack.c.b16 %v3655, %v3653
    %v3682 = vpack.c.b16 %v3658, %v3656
    %v3683 = vpack.c.b16 %v3659, %v3657
    %v3684 = vpack.c.b16 %v3662, %v3660
    %v3685 = vpack.c.b16 %v3663, %v3661
    %v3686 = vpack.c.b16 %v3666, %v3664
    %v3687 = vpack.c.b16 %v3667, %v3665
    %v3688 = vpack.c.b16 %v3670, %v3668
    %v3689 = vpack.c.b16 %v3671, %v3669
    %v3690 = vpack.c.b16 %v3674, %v3672
    %v3691 = vpack.c.b16 %v3675, %v3673
    %3708 = vmatpush.bf16.msra.mxu0 %v3690
    %3709 = vmatpush.bf16.msra.mxu0 %v3688
    %3710 = vmatpush.bf16.msra.mxu0 %v3686
    %3711 = vmatpush.bf16.msra.mxu0 %v3684
    %3712 = vmatpush.bf16.msra.mxu0 %v3682
    %3713 = vmatpush.bf16.msra.mxu0 %v3680
    %3714 = vmatpush.bf16.msra.mxu0 %v3678
    %3715 = vmatpush.bf16.msra.mxu0 %v3676
    %3716 = vmatmul.bf16.gmra.mxu0 %v3620
    %v3717 = vpop.f32.mrf.mxu0
    %v3718 = vadd.f32 %v3569, %v3717
    %v3719 = vpop.f32.mrf.mxu0
    %v3720 = vadd.f32 %v3571, %v3719
    %3721 = vmatmul.bf16.gmra.mxu0 %v3621
    %v3722 = vpop.f32.mrf.mxu0
    %v3723 = vadd.f32 %v3574, %v3722
    %v3724 = vpop.f32.mrf.mxu0
    %v3725 = vadd.f32 %v3576, %v3724
    %3726 = vmatmul.bf16.gmra.mxu0 %v3624
    %v3727 = vpop.f32.mrf.mxu0
    %v3728 = vadd.f32 %v3579, %v3727
    %v3729 = vpop.f32.mrf.mxu0
    %3730 = vdwg.mxu0
    %3731 = vmatpush.bf16.msra.mxu0 %v3691
    %3732 = vmatpush.bf16.msra.mxu0 %v3689
    %3733 = vmatpush.bf16.msra.mxu0 %v3687
    %3734 = vmatpush.bf16.msra.mxu0 %v3685
    %3735 = vmatpush.bf16.msra.mxu0 %v3683
    %3736 = vmatpush.bf16.msra.mxu0 %v3681
    %3737 = vmatpush.bf16.msra.mxu0 %v3679
    %3738 = vmatpush.bf16.msra.mxu0 %v3677
    %3739 = vmatmul.bf16.gmra.mxu0 %v3620
    %v3740 = vpop.f32.mrf.mxu0
    %v3741 = vadd.f32 %v3592, %v3740
    %v3742 = vpop.f32.mrf.mxu0
    %v3743 = vadd.f32 %v3594, %v3742
    %3744 = vmatmul.bf16.gmra.mxu0 %v3621
    %v3745 = vpop.f32.mrf.mxu0
    %v3746 = vadd.f32 %v3597, %v3745
    %v3747 = vpop.f32.mrf.mxu0
    %v3748 = vadd.f32 %v3599, %v3747
    %3749 = vmatmul.bf16.gmra.mxu0 %v3624
    %v3750 = vpop.f32.mrf.mxu0
    %v3751 = vadd.f32 %v3602, %v3750
    %v3752 = vpop.f32.mrf.mxu0
    %3753 = vdwg.mxu0
    %v3764 = vrot.slane %v3741, 4
    %v3765 = vrot.slane %v3743, 4
    %v3766 = vrot.slane %v3746, 4
    %v3767 = vrot.slane %v3748, 4
    %v3768 = vrot.slane %v3751, 4
    %v3769 = vsel %vm275, %v3718, %v3764
    %v3770 = vsel %vm275, %v3764, %v3718
    %v3771 = vrot.slane %v3770, 4
    %v3772 = vsel %vm275, %v3720, %v3765
    %v3773 = vsel %vm275, %v3765, %v3720
    %v3774 = vrot.slane %v3773, 4
    %v3775 = vsel %vm275, %v3723, %v3766
    %v3776 = vsel %vm275, %v3766, %v3723
    %v3777 = vrot.slane %v3776, 4
    %v3778 = vsel %vm275, %v3725, %v3767
    %v3779 = vsel %vm275, %v3767, %v3725
    %v3780 = vrot.slane %v3779, 4
    %v3781 = vsel %vm275, %v3728, %v3768
    %v3782 = vsel %vm275, %v3768, %v3728
    %v3783 = vrot.slane %v3782, 4
    %s3794 = scalar_lea.vmem [#allocation10], 256
    %v3795 = vld [vmem:[%s3794] sm:$0xff]
    %v3796 = vld [vmem:[%s3794 + $0x8] sm:$0xff]
    %v3797 = vld [vmem:[%s3794 + $0x10] sm:$0xff]
    %v3798 = vld [vmem:[%s3794 + $0x18] sm:$0xff]
    %v3799 = vld [vmem:[%s3794 + $0x20] sm:$0xff]
    %v3800 = vld [vmem:[%s3794 + $0x28] sm:$0xff]
    %v3801 = vld [vmem:[%s3794 + $0x30] sm:$0xff]
    %v3802 = vld [vmem:[%s3794 + $0x38] sm:$0xff]
    %v3803 = vld [vmem:[%s3794 + $0x40] sm:$0xff]
    %v3804 = vld [vmem:[%s3794 + $0x48] sm:$0xff]
    %v3805 = vld [vmem:[%s3794 + $0x50] sm:$0xff]
    %v3806 = vld [vmem:[%s3794 + $0x58] sm:$0xff]
    %v3807 = vld [vmem:[%s3794 + $0x60] sm:$0xff]
    %v3808 = vld [vmem:[%s3794 + $0x68] sm:$0xff]
    %v3809 = vld [vmem:[%s3794 + $0x70] sm:$0xff]
    %v3810 = vld [vmem:[%s3794 + $0x78] sm:$0xff]
    %vm3817 = vcmask 1040384
    %vm3818 = vcmask 1042434
    %vm3819 = vmor %vm3817, %vm3818
    %vm3820 = vcmask 1044484
    %vm3821 = vmor %vm3819, %vm3820
    %vm3822 = vcmask 1046534
    %vm3823 = vmor %vm3821, %vm3822
    %v3824 = vrot.slane %v3302, 7
    %v3825 = vrot.slane %v3824, 2
    %v3826 = vrot.slane %v3306, 7
    %v3827 = vsel %vm3823, %v3825, %v3826
    %v3828 = vrot.slane %v3826, 2
    %v3829 = vrot.slane %v3309, 7
    %v3830 = vsel %vm3823, %v3828, %v3829
    %v3831 = vrot.slane %v3829, 2
    %v3832 = vrot.slane %v3312, 7
    %v3833 = vsel %vm3823, %v3831, %v3832
    %v3834 = vrot.slane %v3832, 2
    %v3835 = vrot.slane %v3315, 7
    %v3836 = vsel %vm3823, %v3834, %v3835
    %v3837 = vrot.slane %v3835, 2
    %v3838 = vrot.slane %v3318, 7
    %v3839 = vsel %vm3823, %v3837, %v3838
    %v3840 = vrot.slane %v3321, 7
    %v3841 = vrot.slane %v3840, 2
    %v3842 = vrot.slane %v3324, 7
    %v3843 = vsel %vm3823, %v3841, %v3842
    %v3844 = vrot.slane %v3842, 2
    %v3845 = vrot.slane %v3327, 7
    %v3846 = vsel %vm3823, %v3844, %v3845
    %v3847 = vrot.slane %v3845, 2
    %v3848 = vrot.slane %v3330, 7
    %v3849 = vsel %vm3823, %v3847, %v3848
    %v3850 = vrot.slane %v3848, 2
    %v3851 = vrot.slane %v3333, 7
    %v3852 = vsel %vm3823, %v3850, %v3851
    %v3853 = vrot.slane %v3851, 2
    %v3854 = vrot.slane %v3336, 7
    %v3855 = vsel %vm3823, %v3853, %v3854
    %3857 = vst [vmem:[#allocation1] ss:$4 sm:$0xff] %v3827
    %s3859 = scalar_lea.vmem [#allocation1], 1
    %3860 = vst [vmem:[%s3859] ss:$4 sm:$0xff] %v3830
    %s3862 = scalar_lea.vmem [#allocation1], 2
    %3863 = vst [vmem:[%s3862] ss:$4 sm:$0xff] %v3833
    %s3865 = scalar_lea.vmem [#allocation1], 3
    %3866 = vst [vmem:[%s3865] ss:$4 sm:$0xff] %v3836
    %s3868 = scalar_lea.vmem [#allocation1], 32
    %3869 = vst [vmem:[%s3868] ss:$4 sm:$0xff] %v3839
    %s3871 = scalar_lea.vmem [#allocation1], 33
    %3872 = vst [vmem:[%s3871] ss:$4 sm:$0xff] %v3843
    %s3874 = scalar_lea.vmem [#allocation1], 34
    %3875 = vst [vmem:[%s3874] ss:$4 sm:$0xff] %v3846
    %s3877 = scalar_lea.vmem [#allocation1], 35
    %3878 = vst [vmem:[%s3877] ss:$4 sm:$0xff] %v3849
    %v3879 = vld.sshfl [vmem:[#allocation1] sm:$0xff pattern:$0x73625140]
    %v3880 = vld.sshfl [vmem:[#allocation1 + $0x20] sm:$0xff pattern:$0x73625140]
    %3882 = vst [vmem:[#allocation1] ss:$4 sm:$0xff] %v3852
    %3884 = vst [vmem:[%s3859] ss:$4 sm:$0xff] %v3855
    %v3885 = vld.sshfl [vmem:[#allocation1] sm:$0xff pattern:$0x73625140]
    %v3905 = vunpack.c.l.b16 %v3795
    %v3906 = vunpack.c.h.b16 %v3795
    %v3907 = vunpack.c.l.b16 %v3796
    %v3908 = vunpack.c.h.b16 %v3796
    %v3909 = vunpack.c.l.b16 %v3797
    %v3910 = vunpack.c.h.b16 %v3797
    %v3911 = vunpack.c.l.b16 %v3798
    %v3912 = vunpack.c.h.b16 %v3798
    %v3913 = vunpack.c.l.b16 %v3799
    %v3914 = vunpack.c.h.b16 %v3799
    %v3915 = vunpack.c.l.b16 %v3800
    %v3916 = vunpack.c.h.b16 %v3800
    %v3917 = vunpack.c.l.b16 %v3801
    %v3918 = vunpack.c.h.b16 %v3801
    %v3919 = vunpack.c.l.b16 %v3802
    %v3920 = vunpack.c.h.b16 %v3802
    %v3921 = vunpack.c.l.b16 %v3803
    %v3922 = vunpack.c.h.b16 %v3803
    %v3923 = vunpack.c.l.b16 %v3804
    %v3924 = vunpack.c.h.b16 %v3804
    %v3925 = vunpack.c.l.b16 %v3805
    %v3926 = vunpack.c.h.b16 %v3805
    %v3927 = vunpack.c.l.b16 %v3806
    %v3928 = vunpack.c.h.b16 %v3806
    %v3929 = vunpack.c.l.b16 %v3807
    %v3930 = vunpack.c.h.b16 %v3807
    %v3931 = vunpack.c.l.b16 %v3808
    %v3932 = vunpack.c.h.b16 %v3808
    %v3933 = vunpack.c.l.b16 %v3809
    %v3934 = vunpack.c.h.b16 %v3809
    %v3935 = vunpack.c.l.b16 %v3810
    %v3936 = vunpack.c.h.b16 %v3810
    %v3937 = vpack.c.b16 %v3907, %v3905
    %v3938 = vpack.c.b16 %v3908, %v3906
    %v3939 = vpack.c.b16 %v3911, %v3909
    %v3940 = vpack.c.b16 %v3912, %v3910
    %v3941 = vpack.c.b16 %v3915, %v3913
    %v3942 = vpack.c.b16 %v3916, %v3914
    %v3943 = vpack.c.b16 %v3919, %v3917
    %v3944 = vpack.c.b16 %v3920, %v3918
    %v3945 = vpack.c.b16 %v3923, %v3921
    %v3946 = vpack.c.b16 %v3924, %v3922
    %v3947 = vpack.c.b16 %v3927, %v3925
    %v3948 = vpack.c.b16 %v3928, %v3926
    %v3949 = vpack.c.b16 %v3931, %v3929
    %v3950 = vpack.c.b16 %v3932, %v3930
    %v3951 = vpack.c.b16 %v3935, %v3933
    %v3952 = vpack.c.b16 %v3936, %v3934
    %3969 = vmatpush.bf16.msra.mxu0 %v3951
    %3970 = vmatpush.bf16.msra.mxu0 %v3949
    %3971 = vmatpush.bf16.msra.mxu0 %v3947
    %3972 = vmatpush.bf16.msra.mxu0 %v3945
    %3973 = vmatpush.bf16.msra.mxu0 %v3943
    %3974 = vmatpush.bf16.msra.mxu0 %v3941
    %3975 = vmatpush.bf16.msra.mxu0 %v3939
    %3976 = vmatpush.bf16.msra.mxu0 %v3937
    %3977 = vmatmul.bf16.gmra.mxu0 %v3879
    %v3978 = vpop.f32.mrf.mxu0
    %v3979 = vadd.f32 0.0, %v3978
    %v3980 = vpop.f32.mrf.mxu0
    %v3981 = vadd.f32 0.0, %v3980
    %3982 = vmatmul.bf16.gmra.mxu0 %v3880
    %v3983 = vpop.f32.mrf.mxu0
    %v3984 = vadd.f32 0.0, %v3983
    %v3985 = vpop.f32.mrf.mxu0
    %v3986 = vadd.f32 0.0, %v3985
    %3987 = vmatmul.bf16.gmra.mxu0 %v3885
    %v3988 = vpop.f32.mrf.mxu0
    %v3989 = vadd.f32 0.0, %v3988
    %v3990 = vpop.f32.mrf.mxu0
    %3991 = vdwg.mxu0
    %3992 = vmatpush.bf16.msra.mxu0 %v3952
    %3993 = vmatpush.bf16.msra.mxu0 %v3950
    %3994 = vmatpush.bf16.msra.mxu0 %v3948
    %3995 = vmatpush.bf16.msra.mxu0 %v3946
    %3996 = vmatpush.bf16.msra.mxu0 %v3944
    %3997 = vmatpush.bf16.msra.mxu0 %v3942
    %3998 = vmatpush.bf16.msra.mxu0 %v3940
    %3999 = vmatpush.bf16.msra.mxu0 %v3938
    %4000 = vmatmul.bf16.gmra.mxu0 %v3879
    %v4001 = vpop.f32.mrf.mxu0
    %v4002 = vadd.f32 0.0, %v4001
    %v4003 = vpop.f32.mrf.mxu0
    %v4004 = vadd.f32 0.0, %v4003
    %4005 = vmatmul.bf16.gmra.mxu0 %v3880
    %v4006 = vpop.f32.mrf.mxu0
    %v4007 = vadd.f32 0.0, %v4006
    %v4008 = vpop.f32.mrf.mxu0
    %v4009 = vadd.f32 0.0, %v4008
    %4010 = vmatmul.bf16.gmra.mxu0 %v3885
    %v4011 = vpop.f32.mrf.mxu0
    %v4012 = vadd.f32 0.0, %v4011
    %v4013 = vpop.f32.mrf.mxu0
    %4014 = vdwg.mxu0
    %v4025 = vrot.slane %v4002, 4
    %v4026 = vrot.slane %v4004, 4
    %v4027 = vrot.slane %v4007, 4
    %v4028 = vrot.slane %v4009, 4
    %v4029 = vrot.slane %v4012, 4
    %v4030 = vsel %vm275, %v3979, %v4025
    %v4031 = vsel %vm275, %v4025, %v3979
    %v4032 = vrot.slane %v4031, 4
    %v4033 = vsel %vm275, %v3981, %v4026
    %v4034 = vsel %vm275, %v4026, %v3981
    %v4035 = vrot.slane %v4034, 4
    %v4036 = vsel %vm275, %v3984, %v4027
    %v4037 = vsel %vm275, %v4027, %v3984
    %v4038 = vrot.slane %v4037, 4
    %v4039 = vsel %vm275, %v3986, %v4028
    %v4040 = vsel %vm275, %v4028, %v3986
    %v4041 = vrot.slane %v4040, 4
    %v4042 = vsel %vm275, %v3989, %v4029
    %v4043 = vsel %vm275, %v4029, %v3989
    %v4044 = vrot.slane %v4043, 4
    %v4055 = vadd.f32 %v3769, %v4030
    %v4056 = vadd.f32 %v3771, %v4032
    %v4057 = vadd.f32 %v3772, %v4033
    %v4058 = vadd.f32 %v3774, %v4035
    %v4059 = vadd.f32 %v3775, %v4036
    %v4060 = vadd.f32 %v3777, %v4038
    %v4061 = vadd.f32 %v3778, %v4039
    %v4062 = vadd.f32 %v3780, %v4041
    %v4063 = vadd.f32 %v3781, %v4042
    %v4064 = vadd.f32 %v3783, %v4044
    %v4065 = vld [vmem:[%s6] sm:$0x3]
    %v4067 = vperm.slane %v4065, 0
    %v4068 = vperm.slane %v4065, 1
    %v4069 = vrot.slane %v4068, 4
    %v4070 = vsel %vm275, %v4067, %v4069
    %v4071 = vsel %vm275, %v4069, %v4067
    %v4072 = vrot.slane %v4071, 4
    %v4075 = vadd.f32 %v4055, %v4070
    %v4076 = vadd.f32 %v4056, %v4072
    %v4077 = vadd.f32 %v4057, %v4070
    %v4078 = vadd.f32 %v4058, %v4072
    %v4079 = vadd.f32 %v4059, %v4070
    %v4080 = vadd.f32 %v4060, %v4070
    %v4081 = vadd.f32 %v4061, %v4072
    %v4082 = vadd.f32 %v4062, %v4070
    %v4083 = vadd.f32 %v4063, %v4072
    %v4084 = vadd.f32 %v4064, %v4070
    %v4085 = vmax.f32 %v4075, 0.0
    %v4086 = vmax.f32 %v4076, 0.0
    %v4087 = vmax.f32 %v4077, 0.0
    %v4088 = vmax.f32 %v4078, 0.0
    %v4089 = vmax.f32 %v4079, 0.0
    %v4090 = vmax.f32 %v4080, 0.0
    %v4091 = vmax.f32 %v4081, 0.0
    %v4092 = vmax.f32 %v4082, 0.0
    %v4093 = vmax.f32 %v4083, 0.0
    %v4094 = vmax.f32 %v4084, 0.0
    %4105 = vst [vmem:[#allocation1] ss:$2 sm:$0xff] %v4085
    %s4106 = scalar_lea.vmem [#allocation1], 1
    %4107 = vst [vmem:[%s4106] ss:$2 sm:$0xff] %v4086
    %s4108 = scalar_lea.vmem [#allocation1], 16
    %4109 = vst [vmem:[%s4108] ss:$2 sm:$0xff] %v4087
    %s4110 = scalar_lea.vmem [#allocation1], 17
    %4111 = vst [vmem:[%s4110] ss:$2 sm:$0xff] %v4088
    %s4112 = scalar_lea.vmem [#allocation1], 32
    %4113 = vst [vmem:[%s4112] ss:$2 sm:$0xff] %v4089
    %v4114 = vld.sshfl [vmem:[#allocation1] sm:$0xff pattern:$0x75316420]
    %v4115 = vld.sshfl [vmem:[#allocation1 + $0x8] sm:$0xff pattern:$0x75316420]
    %v4116 = vld.sshfl [vmem:[#allocation1 + $0x10] sm:$0xff pattern:$0x75316420]
    %v4117 = vld.sshfl [vmem:[#allocation1 + $0x18] sm:$0xff pattern:$0x75316420]
    %v4118 = vld.sshfl [vmem:[#allocation1 + $0x20] sm:$0xff pattern:$0x75316420]
    %v4119 = vld.sshfl [vmem:[#allocation1 + $0x28] sm:$0xff pattern:$0x75316420]
    %s4120 = scalar_lea.vmem [#allocation1], 48
    %4121 = vst [vmem:[%s4120] ss:$2 sm:$0xff] %v4090
    %s4122 = scalar_lea.vmem [#allocation1], 49
    %4123 = vst [vmem:[%s4122] ss:$2 sm:$0xff] %v4091
    %v4124 = vld.sshfl [vmem:[#allocation1 + $0x30] sm:$0xff pattern:$0x75316420]
    %v4125 = vld.sshfl [vmem:[#allocation1 + $0x38] sm:$0xff pattern:$0x75316420]
    %4126 = vst [vmem:[#allocation1] ss:$2 sm:$0xff] %v4092
    %4127 = vst [vmem:[%s4106] ss:$2 sm:$0xff] %v4093
    %4128 = vst [vmem:[%s4108] ss:$2 sm:$0xff] %v4094
    %v4129 = vld.sshfl [vmem:[#allocation1] sm:$0xff pattern:$0x75316420]
    %v4130 = vld.sshfl [vmem:[#allocation1 + $0x8] sm:$0xff pattern:$0x75316420]
    %v4131 = vld.sshfl [vmem:[#allocation1 + $0x10] sm:$0xff pattern:$0x75316420]
    %v4132 = vld.sshfl [vmem:[#allocation1 + $0x18] sm:$0xff pattern:$0x75316420]
    %v4145 = vpack.c.bf16 %v4115, %v4114
    %v4146 = vpack.c.bf16 %v4117, %v4116
    %v4147 = vpack.c.bf16 %v4119, %v4118
    %v4148 = vpack.c.bf16 %v4125, %v4124
    %v4149 = vpack.c.bf16 %v4130, %v4129
    %v4150 = vpack.c.bf16 %v4132, %v4131
    %v4151 = vld [vmem:[#allocation11] sm:$0xff]
    %v4152 = vld [vmem:[#allocation11 + $0x8] sm:$0xff]
    %v4153 = vld [vmem:[#allocation11 + $0x10] sm:$0xff]
    %v4154 = vld [vmem:[#allocation11 + $0x18] sm:$0xff]
    %v4155 = vld [vmem:[#allocation11 + $0x20] sm:$0xff]
    %v4156 = vld [vmem:[#allocation11 + $0x28] sm:$0xff]
    %v4157 = vld [vmem:[#allocation11 + $0x30] sm:$0xff]
    %v4158 = vld [vmem:[#allocation11 + $0x38] sm:$0xff]
    %v4159 = vld [vmem:[#allocation11 + $0x40] sm:$0xff]
    %v4160 = vld [vmem:[#allocation11 + $0x48] sm:$0xff]
    %v4161 = vld [vmem:[#allocation11 + $0x50] sm:$0xff]
    %v4162 = vld [vmem:[#allocation11 + $0x58] sm:$0xff]
    %v4163 = vld [vmem:[#allocation11 + $0x60] sm:$0xff]
    %v4164 = vld [vmem:[#allocation11 + $0x68] sm:$0xff]
    %v4165 = vld [vmem:[#allocation11 + $0x70] sm:$0xff]
    %v4166 = vld [vmem:[#allocation11 + $0x78] sm:$0xff]
    %v4167 = vld [vmem:[#allocation11 + $0x80] sm:$0xff]
    %v4168 = vld [vmem:[#allocation11 + $0x88] sm:$0xff]
    %v4169 = vld [vmem:[#allocation11 + $0x90] sm:$0xff]
    %v4170 = vld [vmem:[#allocation11 + $0x98] sm:$0xff]
    %v4171 = vld [vmem:[#allocation11 + $0xa0] sm:$0xff]
    %v4172 = vld [vmem:[#allocation11 + $0xa8] sm:$0xff]
    %v4173 = vld [vmem:[#allocation11 + $0xb0] sm:$0xff]
    %v4174 = vld [vmem:[#allocation11 + $0xb8] sm:$0xff]
    %v4175 = vld [vmem:[#allocation11 + $0xc0] sm:$0xff]
    %v4176 = vld [vmem:[#allocation11 + $0xc8] sm:$0xff]
    %v4177 = vld [vmem:[#allocation11 + $0xd0] sm:$0xff]
    %v4178 = vld [vmem:[#allocation11 + $0xd8] sm:$0xff]
    %v4179 = vld [vmem:[#allocation11 + $0xe0] sm:$0xff]
    %v4180 = vld [vmem:[#allocation11 + $0xe8] sm:$0xff]
    %v4181 = vld [vmem:[#allocation11 + $0xf0] sm:$0xff]
    %v4182 = vld [vmem:[#allocation11 + $0xf8] sm:$0xff]
    %v4183 = vld [vmem:[#allocation11 + $0x100] sm:$0xff]
    %v4184 = vld [vmem:[#allocation11 + $0x108] sm:$0xff]
    %v4185 = vld [vmem:[#allocation11 + $0x110] sm:$0xff]
    %v4186 = vld [vmem:[#allocation11 + $0x118] sm:$0xff]
    %v4187 = vld [vmem:[#allocation11 + $0x120] sm:$0xff]
    %v4188 = vld [vmem:[#allocation11 + $0x128] sm:$0xff]
    %v4189 = vld [vmem:[#allocation11 + $0x130] sm:$0xff]
    %v4190 = vld [vmem:[#allocation11 + $0x138] sm:$0xff]
    %v4191 = vld [vmem:[#allocation11 + $0x140] sm:$0xff]
    %v4192 = vld [vmem:[#allocation11 + $0x148] sm:$0xff]
    %v4193 = vld [vmem:[#allocation11 + $0x150] sm:$0xff]
    %v4194 = vld [vmem:[#allocation11 + $0x158] sm:$0xff]
    %v4195 = vld [vmem:[#allocation11 + $0x160] sm:$0xff]
    %v4196 = vld [vmem:[#allocation11 + $0x168] sm:$0xff]
    %v4197 = vld [vmem:[#allocation11 + $0x170] sm:$0xff]
    %v4198 = vld [vmem:[#allocation11 + $0x178] sm:$0xff]
    %v4199 = vld [vmem:[#allocation11 + $0x180] sm:$0xff]
    %v4200 = vld [vmem:[#allocation11 + $0x188] sm:$0xff]
    %v4201 = vld [vmem:[#allocation11 + $0x190] sm:$0xff]
    %v4202 = vld [vmem:[#allocation11 + $0x198] sm:$0xff]
    %v4203 = vld [vmem:[#allocation11 + $0x1a0] sm:$0xff]
    %v4204 = vld [vmem:[#allocation11 + $0x1a8] sm:$0xff]
    %v4205 = vld [vmem:[#allocation11 + $0x1b0] sm:$0xff]
    %v4206 = vld [vmem:[#allocation11 + $0x1b8] sm:$0xff]
    %v4207 = vld [vmem:[#allocation11 + $0x1c0] sm:$0xff]
    %v4208 = vld [vmem:[#allocation11 + $0x1c8] sm:$0xff]
    %v4209 = vld [vmem:[#allocation11 + $0x1d0] sm:$0xff]
    %v4210 = vld [vmem:[#allocation11 + $0x1d8] sm:$0xff]
    %v4211 = vld [vmem:[#allocation11 + $0x1e0] sm:$0xff]
    %v4212 = vld [vmem:[#allocation11 + $0x1e8] sm:$0xff]
    %v4213 = vld [vmem:[#allocation11 + $0x1f0] sm:$0xff]
    %v4214 = vld [vmem:[#allocation11 + $0x1f8] sm:$0xff]
    %v4215 = vld [vmem:[%s8] sm:$0xf]
    %v4217 = vperm.slane %v4215, 0
    %v4218 = vperm.slane %v4215, 1
    %v4219 = vperm.slane %v4215, 2
    %v4220 = vperm.slane %v4215, 3
    %v4227 = vrot.slane %v4145, 2
    %v4228 = vrot.slane %v4146, 2
    %v4229 = vrot.slane %v4147, 2
    %v4230 = vrot.slane %v4148, 2
    %v4231 = vrot.slane %v4149, 2
    %v4232 = vrot.slane %v4150, 2
    %v4235 = vsel %vm3299, %v4145, %v4227
    %v4236 = vsel %vm3303, %v4145, %v4227
    %v4238 = vrot.slane %v4236, 2
    %v4241 = vsel %vm3299, %v4146, %v4228
    %v4242 = vsel %vm3303, %v4146, %v4228
    %v4244 = vrot.slane %v4242, 2
    %v4247 = vsel %vm3299, %v4147, %v4229
    %v4250 = vsel %vm3299, %v4148, %v4230
    %v4251 = vsel %vm3303, %v4148, %v4230
    %v4253 = vrot.slane %v4251, 2
    %v4256 = vsel %vm3299, %v4149, %v4231
    %v4257 = vsel %vm3303, %v4149, %v4231
    %v4259 = vrot.slane %v4257, 2
    %v4262 = vsel %vm3299, %v4150, %v4232
    %v4263 = vrot.slane %v4218, 4
    %v4264 = vrot.slane %v4220, 4
    %v4265 = vsel %vm275, %v4217, %v4263
    %v4266 = vsel %vm275, %v4219, %v4264
    %v4267 = vsel %vm275, %v4263, %v4217
    %v4268 = vrot.slane %v4267, 4
    %v4269 = vsel %vm275, %v4264, %v4219
    %v4270 = vrot.slane %v4269, 4
    %4271 = vst [vmem:[#allocation1] ss:$4 sm:$0xff] %v4235
    %s4273 = scalar_lea.vmem [#allocation1], 1
    %4274 = vst [vmem:[%s4273] ss:$4 sm:$0xff] %v4238
    %s4275 = scalar_lea.vmem [#allocation1], 2
    %4276 = vst [vmem:[%s4275] ss:$4 sm:$0xff] %v4241
    %s4278 = scalar_lea.vmem [#allocation1], 3
    %4279 = vst [vmem:[%s4278] ss:$4 sm:$0xff] %v4244
    %s4280 = scalar_lea.vmem [#allocation1], 32
    %4281 = vst [vmem:[%s4280] ss:$4 sm:$0xff] %v4247
    %s4282 = scalar_lea.vmem [#allocation1], 33
    %4283 = vst [vmem:[%s4282] ss:$4 sm:$0xff] %v4250
    %s4285 = scalar_lea.vmem [#allocation1], 34
    %4286 = vst [vmem:[%s4285] ss:$4 sm:$0xff] %v4253
    %s4287 = scalar_lea.vmem [#allocation1], 35
    %4288 = vst [vmem:[%s4287] ss:$4 sm:$0xff] %v4256
    %v4289 = vld.sshfl [vmem:[#allocation1] sm:$0xff pattern:$0x73625140]
    %v4290 = vld.sshfl [vmem:[#allocation1 + $0x8] sm:$0xff pattern:$0x73625140]
    %v4291 = vld.sshfl [vmem:[#allocation1 + $0x20] sm:$0xff pattern:$0x73625140]
    %v4292 = vld.sshfl [vmem:[#allocation1 + $0x28] sm:$0xff pattern:$0x73625140]
    %4294 = vst [vmem:[#allocation1] ss:$4 sm:$0xff] %v4259
    %4295 = vst [vmem:[%s4273] ss:$4 sm:$0xff] %v4262
    %v4296 = vld.sshfl [vmem:[#allocation1] sm:$0xff pattern:$0x73625140]
    %v4297 = vld.sshfl [vmem:[#allocation1 + $0x8] sm:$0xff pattern:$0x73625140]
    %v4368 = vunpack.c.l.b16 %v4151
    %v4369 = vunpack.c.h.b16 %v4151
    %v4370 = vunpack.c.l.b16 %v4152
    %v4371 = vunpack.c.h.b16 %v4152
    %v4372 = vunpack.c.l.b16 %v4153
    %v4373 = vunpack.c.h.b16 %v4153
    %v4374 = vunpack.c.l.b16 %v4154
    %v4375 = vunpack.c.h.b16 %v4154
    %v4376 = vunpack.c.l.b16 %v4155
    %v4377 = vunpack.c.h.b16 %v4155
    %v4378 = vunpack.c.l.b16 %v4156
    %v4379 = vunpack.c.h.b16 %v4156
    %v4380 = vunpack.c.l.b16 %v4157
    %v4381 = vunpack.c.h.b16 %v4157
    %v4382 = vunpack.c.l.b16 %v4158
    %v4383 = vunpack.c.h.b16 %v4158
    %v4384 = vunpack.c.l.b16 %v4159
    %v4385 = vunpack.c.h.b16 %v4159
    %v4386 = vunpack.c.l.b16 %v4160
    %v4387 = vunpack.c.h.b16 %v4160
    %v4388 = vunpack.c.l.b16 %v4161
    %v4389 = vunpack.c.h.b16 %v4161
    %v4390 = vunpack.c.l.b16 %v4162
    %v4391 = vunpack.c.h.b16 %v4162
    %v4392 = vunpack.c.l.b16 %v4163
    %v4393 = vunpack.c.h.b16 %v4163
    %v4394 = vunpack.c.l.b16 %v4164
    %v4395 = vunpack.c.h.b16 %v4164
    %v4396 = vunpack.c.l.b16 %v4165
    %v4397 = vunpack.c.h.b16 %v4165
    %v4398 = vunpack.c.l.b16 %v4166
    %v4399 = vunpack.c.h.b16 %v4166
    %v4400 = vunpack.c.l.b16 %v4167
    %v4401 = vunpack.c.h.b16 %v4167
    %v4402 = vunpack.c.l.b16 %v4168
    %v4403 = vunpack.c.h.b16 %v4168
    %v4404 = vunpack.c.l.b16 %v4169
    %v4405 = vunpack.c.h.b16 %v4169
    %v4406 = vunpack.c.l.b16 %v4170
    %v4407 = vunpack.c.h.b16 %v4170
    %v4408 = vunpack.c.l.b16 %v4171
    %v4409 = vunpack.c.h.b16 %v4171
    %v4410 = vunpack.c.l.b16 %v4172
    %v4411 = vunpack.c.h.b16 %v4172
    %v4412 = vunpack.c.l.b16 %v4173
    %v4413 = vunpack.c.h.b16 %v4173
    %v4414 = vunpack.c.l.b16 %v4174
    %v4415 = vunpack.c.h.b16 %v4174
    %v4416 = vunpack.c.l.b16 %v4175
    %v4417 = vunpack.c.h.b16 %v4175
    %v4418 = vunpack.c.l.b16 %v4176
    %v4419 = vunpack.c.h.b16 %v4176
    %v4420 = vunpack.c.l.b16 %v4177
    %v4421 = vunpack.c.h.b16 %v4177
    %v4422 = vunpack.c.l.b16 %v4178
    %v4423 = vunpack.c.h.b16 %v4178
    %v4424 = vunpack.c.l.b16 %v4179
    %v4425 = vunpack.c.h.b16 %v4179
    %v4426 = vunpack.c.l.b16 %v4180
    %v4427 = vunpack.c.h.b16 %v4180
    %v4428 = vunpack.c.l.b16 %v4181
    %v4429 = vunpack.c.h.b16 %v4181
    %v4430 = vunpack.c.l.b16 %v4182
    %v4431 = vunpack.c.h.b16 %v4182
    %v4432 = vunpack.c.l.b16 %v4183
    %v4433 = vunpack.c.h.b16 %v4183
    %v4434 = vunpack.c.l.b16 %v4184
    %v4435 = vunpack.c.h.b16 %v4184
    %v4436 = vunpack.c.l.b16 %v4185
    %v4437 = vunpack.c.h.b16 %v4185
    %v4438 = vunpack.c.l.b16 %v4186
    %v4439 = vunpack.c.h.b16 %v4186
    %v4440 = vunpack.c.l.b16 %v4187
    %v4441 = vunpack.c.h.b16 %v4187
    %v4442 = vunpack.c.l.b16 %v4188
    %v4443 = vunpack.c.h.b16 %v4188
    %v4444 = vunpack.c.l.b16 %v4189
    %v4445 = vunpack.c.h.b16 %v4189
    %v4446 = vunpack.c.l.b16 %v4190
    %v4447 = vunpack.c.h.b16 %v4190
    %v4448 = vunpack.c.l.b16 %v4191
    %v4449 = vunpack.c.h.b16 %v4191
    %v4450 = vunpack.c.l.b16 %v4192
    %v4451 = vunpack.c.h.b16 %v4192
    %v4452 = vunpack.c.l.b16 %v4193
    %v4453 = vunpack.c.h.b16 %v4193
    %v4454 = vunpack.c.l.b16 %v4194
    %v4455 = vunpack.c.h.b16 %v4194
    %v4456 = vunpack.c.l.b16 %v4195
    %v4457 = vunpack.c.h.b16 %v4195
    %v4458 = vunpack.c.l.b16 %v4196
    %v4459 = vunpack.c.h.b16 %v4196
    %v4460 = vunpack.c.l.b16 %v4197
    %v4461 = vunpack.c.h.b16 %v4197
    %v4462 = vunpack.c.l.b16 %v4198
    %v4463 = vunpack.c.h.b16 %v4198
    %v4464 = vunpack.c.l.b16 %v4199
    %v4465 = vunpack.c.h.b16 %v4199
    %v4466 = vunpack.c.l.b16 %v4200
    %v4467 = vunpack.c.h.b16 %v4200
    %v4468 = vunpack.c.l.b16 %v4201
    %v4469 = vunpack.c.h.b16 %v4201
    %v4470 = vunpack.c.l.b16 %v4202
    %v4471 = vunpack.c.h.b16 %v4202
    %v4472 = vunpack.c.l.b16 %v4203
    %v4473 = vunpack.c.h.b16 %v4203
    %v4474 = vunpack.c.l.b16 %v4204
    %v4475 = vunpack.c.h.b16 %v4204
    %v4476 = vunpack.c.l.b16 %v4205
    %v4477 = vunpack.c.h.b16 %v4205
    %v4478 = vunpack.c.l.b16 %v4206
    %v4479 = vunpack.c.h.b16 %v4206
    %v4480 = vunpack.c.l.b16 %v4207
    %v4481 = vunpack.c.h.b16 %v4207
    %v4482 = vunpack.c.l.b16 %v4208
    %v4483 = vunpack.c.h.b16 %v4208
    %v4484 = vunpack.c.l.b16 %v4209
    %v4485 = vunpack.c.h.b16 %v4209
    %v4486 = vunpack.c.l.b16 %v4210
    %v4487 = vunpack.c.h.b16 %v4210
    %v4488 = vunpack.c.l.b16 %v4211
    %v4489 = vunpack.c.h.b16 %v4211
    %v4490 = vunpack.c.l.b16 %v4212
    %v4491 = vunpack.c.h.b16 %v4212
    %v4492 = vunpack.c.l.b16 %v4213
    %v4493 = vunpack.c.h.b16 %v4213
    %v4494 = vunpack.c.l.b16 %v4214
    %v4495 = vunpack.c.h.b16 %v4214
    %v4496 = vpack.c.b16 %v4372, %v4368
    %v4497 = vpack.c.b16 %v4373, %v4369
    %v4498 = vpack.c.b16 %v4374, %v4370
    %v4499 = vpack.c.b16 %v4375, %v4371
    %v4500 = vpack.c.b16 %v4380, %v4376
    %v4501 = vpack.c.b16 %v4381, %v4377
    %v4502 = vpack.c.b16 %v4382, %v4378
    %v4503 = vpack.c.b16 %v4383, %v4379
    %v4504 = vpack.c.b16 %v4388, %v4384
    %v4505 = vpack.c.b16 %v4389, %v4385
    %v4506 = vpack.c.b16 %v4390, %v4386
    %v4507 = vpack.c.b16 %v4391, %v4387
    %v4508 = vpack.c.b16 %v4396, %v4392
    %v4509 = vpack.c.b16 %v4397, %v4393
    %v4510 = vpack.c.b16 %v4398, %v4394
    %v4511 = vpack.c.b16 %v4399, %v4395
    %v4512 = vpack.c.b16 %v4404, %v4400
    %v4513 = vpack.c.b16 %v4405, %v4401
    %v4514 = vpack.c.b16 %v4406, %v4402
    %v4515 = vpack.c.b16 %v4407, %v4403
    %v4516 = vpack.c.b16 %v4412, %v4408
    %v4517 = vpack.c.b16 %v4413, %v4409
    %v4518 = vpack.c.b16 %v4414, %v4410
    %v4519 = vpack.c.b16 %v4415, %v4411
    %v4520 = vpack.c.b16 %v4420, %v4416
    %v4521 = vpack.c.b16 %v4421, %v4417
    %v4522 = vpack.c.b16 %v4422, %v4418
    %v4523 = vpack.c.b16 %v4423, %v4419
    %v4524 = vpack.c.b16 %v4428, %v4424
    %v4525 = vpack.c.b16 %v4429, %v4425
    %v4526 = vpack.c.b16 %v4430, %v4426
    %v4527 = vpack.c.b16 %v4431, %v4427
    %v4528 = vpack.c.b16 %v4436, %v4432
    %v4529 = vpack.c.b16 %v4437, %v4433
    %v4530 = vpack.c.b16 %v4438, %v4434
    %v4531 = vpack.c.b16 %v4439, %v4435
    %v4532 = vpack.c.b16 %v4444, %v4440
    %v4533 = vpack.c.b16 %v4445, %v4441
    %v4534 = vpack.c.b16 %v4446, %v4442
    %v4535 = vpack.c.b16 %v4447, %v4443
    %v4536 = vpack.c.b16 %v4452, %v4448
    %v4537 = vpack.c.b16 %v4453, %v4449
    %v4538 = vpack.c.b16 %v4454, %v4450
    %v4539 = vpack.c.b16 %v4455, %v4451
    %v4540 = vpack.c.b16 %v4460, %v4456
    %v4541 = vpack.c.b16 %v4461, %v4457
    %v4542 = vpack.c.b16 %v4462, %v4458
    %v4543 = vpack.c.b16 %v4463, %v4459
    %v4544 = vpack.c.b16 %v4468, %v4464
    %v4545 = vpack.c.b16 %v4469, %v4465
    %v4546 = vpack.c.b16 %v4470, %v4466
    %v4547 = vpack.c.b16 %v4471, %v4467
    %v4548 = vpack.c.b16 %v4476, %v4472
    %v4549 = vpack.c.b16 %v4477, %v4473
    %v4550 = vpack.c.b16 %v4478, %v4474
    %v4551 = vpack.c.b16 %v4479, %v4475
    %v4552 = vpack.c.b16 %v4484, %v4480
    %v4553 = vpack.c.b16 %v4485, %v4481
    %v4554 = vpack.c.b16 %v4486, %v4482
    %v4555 = vpack.c.b16 %v4487, %v4483
    %v4556 = vpack.c.b16 %v4492, %v4488
    %v4557 = vpack.c.b16 %v4493, %v4489
    %v4558 = vpack.c.b16 %v4494, %v4490
    %v4559 = vpack.c.b16 %v4495, %v4491
    %4624 = vst [vmem:[#allocation1] ss:$2 sm:$0xff] %v4265
    %s4625 = scalar_lea.vmem [#allocation1], 1
    %4626 = vst [vmem:[%s4625] ss:$2 sm:$0xff] %v4268
    %s4627 = scalar_lea.vmem [#allocation1], 16
    %4628 = vst [vmem:[%s4627] ss:$2 sm:$0xff] %v4266
    %s4629 = scalar_lea.vmem [#allocation1], 17
    %4630 = vst [vmem:[%s4629] ss:$2 sm:$0xff] %v4270
    %s4631 = scalar_lea.vmem [#allocation1], 32
    %4632 = vst [vmem:[%s4631] ss:$2 sm:$0xff] %v4265
    %s4633 = scalar_lea.vmem [#allocation1], 33
    %4634 = vst [vmem:[%s4633] ss:$2 sm:$0xff] %v4268
    %s4635 = scalar_lea.vmem [#allocation1], 48
    %4636 = vst [vmem:[%s4635] ss:$2 sm:$0xff] %v4266
    %s4637 = scalar_lea.vmem [#allocation1], 49
    %4638 = vst [vmem:[%s4637] ss:$2 sm:$0xff] %v4270
    %v4639 = vld.sshfl [vmem:[#allocation1] sm:$0xff pattern:$0x75316420]
    %v4640 = vld.sshfl [vmem:[#allocation1 + $0x8] sm:$0xff pattern:$0x75316420]
    %v4641 = vld.sshfl [vmem:[#allocation1 + $0x10] sm:$0xff pattern:$0x75316420]
    %v4642 = vld.sshfl [vmem:[#allocation1 + $0x18] sm:$0xff pattern:$0x75316420]
    %v4643 = vld.sshfl [vmem:[#allocation1 + $0x20] sm:$0xff pattern:$0x75316420]
    %v4644 = vld.sshfl [vmem:[#allocation1 + $0x28] sm:$0xff pattern:$0x75316420]
    %v4645 = vld.sshfl [vmem:[#allocation1 + $0x30] sm:$0xff pattern:$0x75316420]
    %v4646 = vld.sshfl [vmem:[#allocation1 + $0x38] sm:$0xff pattern:$0x75316420]
    %4647 = vst [vmem:[#allocation1] ss:$2 sm:$0xff] %v4265
    %4648 = vst [vmem:[%s4625] ss:$2 sm:$0xff] %v4265
    %4649 = vst [vmem:[%s4627] ss:$2 sm:$0xff] %v4266
    %4650 = vst [vmem:[%s4629] ss:$2 sm:$0xff] %v4266
    %4651 = vst [vmem:[%s4631] ss:$2 sm:$0xff] %v4268
    %4652 = vst [vmem:[%s4633] ss:$2 sm:$0xff] %v4265
    %4653 = vst [vmem:[%s4635] ss:$2 sm:$0xff] %v4270
    %4654 = vst [vmem:[%s4637] ss:$2 sm:$0xff] %v4266
    %v4655 = vld.sshfl [vmem:[#allocation1] sm:$0xff pattern:$0x75316420]
    %v4656 = vld.sshfl [vmem:[#allocation1 + $0x8] sm:$0xff pattern:$0x75316420]
    %v4657 = vld.sshfl [vmem:[#allocation1 + $0x10] sm:$0xff pattern:$0x75316420]
    %v4658 = vld.sshfl [vmem:[#allocation1 + $0x18] sm:$0xff pattern:$0x75316420]
    %v4659 = vld.sshfl [vmem:[#allocation1 + $0x20] sm:$0xff pattern:$0x75316420]
    %v4660 = vld.sshfl [vmem:[#allocation1 + $0x28] sm:$0xff pattern:$0x75316420]
    %v4661 = vld.sshfl [vmem:[#allocation1 + $0x30] sm:$0xff pattern:$0x75316420]
    %v4662 = vld.sshfl [vmem:[#allocation1 + $0x38] sm:$0xff pattern:$0x75316420]
    %4663 = vst [vmem:[#allocation1] ss:$2 sm:$0xff] %v4268
    %4664 = vst [vmem:[%s4625] ss:$2 sm:$0xff] %v4265
    %4665 = vst [vmem:[%s4627] ss:$2 sm:$0xff] %v4270
    %4666 = vst [vmem:[%s4629] ss:$2 sm:$0xff] %v4266
    %v4667 = vld.sshfl [vmem:[#allocation1] sm:$0xff pattern:$0x75316420]
    %v4668 = vld.sshfl [vmem:[#allocation1 + $0x8] sm:$0xff pattern:$0x75316420]
    %v4669 = vld.sshfl [vmem:[#allocation1 + $0x10] sm:$0xff pattern:$0x75316420]
    %v4670 = vld.sshfl [vmem:[#allocation1 + $0x18] sm:$0xff pattern:$0x75316420]
    %4691 = vmatpush.bf16.msra.mxu0 %v4524
    %4692 = vmatpush.bf16.msra.mxu0 %v4520
    %4693 = vmatpush.bf16.msra.mxu0 %v4516
    %4694 = vmatpush.bf16.msra.mxu0 %v4512
    %4695 = vmatpush.bf16.msra.mxu0 %v4508
    %4696 = vmatpush.bf16.msra.mxu0 %v4504
    %4697 = vmatpush.bf16.msra.mxu0 %v4500
    %4698 = vmatpush.bf16.msra.mxu0 %v4496
    %4699 = vmatmul.bf16.gmra.mxu0 %v4289
    %v4700 = vpop.f32.mrf.mxu0
    %v4701 = vadd.f32 %v4639, %v4700
    %v4702 = vpop.f32.mrf.mxu0
    %v4703 = vadd.f32 %v4643, %v4702
    %4704 = vmatmul.bf16.gmra.mxu0 %v4291
    %v4705 = vpop.f32.mrf.mxu0
    %v4706 = vadd.f32 %v4655, %v4705
    %v4707 = vpop.f32.mrf.mxu0
    %v4708 = vadd.f32 %v4659, %v4707
    %4709 = vmatmul.bf16.gmra.mxu0 %v4296
    %v4710 = vpop.f32.mrf.mxu0
    %v4711 = vadd.f32 %v4667, %v4710
    %v4712 = vpop.f32.mrf.mxu0
    %4713 = vdwg.mxu0
    %4714 = vmatpush.bf16.msra.mxu0 %v4556
    %4715 = vmatpush.bf16.msra.mxu0 %v4552
    %4716 = vmatpush.bf16.msra.mxu0 %v4548
    %4717 = vmatpush.bf16.msra.mxu0 %v4544
    %4718 = vmatpush.bf16.msra.mxu0 %v4540
    %4719 = vmatpush.bf16.msra.mxu0 %v4536
    %4720 = vmatpush.bf16.msra.mxu0 %v4532
    %4721 = vmatpush.bf16.msra.mxu0 %v4528
    %4722 = vmatmul.bf16.gmra.mxu0 %v4290
    %v4723 = vpop.f32.mrf.mxu0
    %v4724 = vadd.f32 %v4701, %v4723
    %v4725 = vpop.f32.mrf.mxu0
    %v4726 = vadd.f32 %v4703, %v4725
    %4727 = vmatmul.bf16.gmra.mxu0 %v4292
    %v4728 = vpop.f32.mrf.mxu0
    %v4729 = vadd.f32 %v4706, %v4728
    %v4730 = vpop.f32.mrf.mxu0
    %v4731 = vadd.f32 %v4708, %v4730
    %4732 = vmatmul.bf16.gmra.mxu0 %v4297
    %v4733 = vpop.f32.mrf.mxu0
    %v4734 = vadd.f32 %v4711, %v4733
    %v4735 = vpop.f32.mrf.mxu0
    %4736 = vdwg.mxu0
    %4737 = vmatpush.bf16.msra.mxu0 %v4525
    %4738 = vmatpush.bf16.msra.mxu0 %v4521
    %4739 = vmatpush.bf16.msra.mxu0 %v4517
    %4740 = vmatpush.bf16.msra.mxu0 %v4513
    %4741 = vmatpush.bf16.msra.mxu0 %v4509
    %4742 = vmatpush.bf16.msra.mxu0 %v4505
    %4743 = vmatpush.bf16.msra.mxu0 %v4501
    %4744 = vmatpush.bf16.msra.mxu0 %v4497
    %4745 = vmatmul.bf16.gmra.mxu0 %v4289
    %v4746 = vpop.f32.mrf.mxu0
    %v4747 = vadd.f32 %v4640, %v4746
    %v4748 = vpop.f32.mrf.mxu0
    %v4749 = vadd.f32 %v4644, %v4748
    %4750 = vmatmul.bf16.gmra.mxu0 %v4291
    %v4751 = vpop.f32.mrf.mxu0
    %v4752 = vadd.f32 %v4656, %v4751
    %v4753 = vpop.f32.mrf.mxu0
    %v4754 = vadd.f32 %v4660, %v4753
    %4755 = vmatmul.bf16.gmra.mxu0 %v4296
    %v4756 = vpop.f32.mrf.mxu0
    %v4757 = vadd.f32 %v4668, %v4756
    %v4758 = vpop.f32.mrf.mxu0
    %4759 = vdwg.mxu0
    %4760 = vmatpush.bf16.msra.mxu0 %v4557
    %4761 = vmatpush.bf16.msra.mxu0 %v4553
    %4762 = vmatpush.bf16.msra.mxu0 %v4549
    %4763 = vmatpush.bf16.msra.mxu0 %v4545
    %4764 = vmatpush.bf16.msra.mxu0 %v4541
    %4765 = vmatpush.bf16.msra.mxu0 %v4537
    %4766 = vmatpush.bf16.msra.mxu0 %v4533
    %4767 = vmatpush.bf16.msra.mxu0 %v4529
    %4768 = vmatmul.bf16.gmra.mxu0 %v4290
    %v4769 = vpop.f32.mrf.mxu0
    %v4770 = vadd.f32 %v4747, %v4769
    %v4771 = vpop.f32.mrf.mxu0
    %v4772 = vadd.f32 %v4749, %v4771
    %4773 = vmatmul.bf16.gmra.mxu0 %v4292
    %v4774 = vpop.f32.mrf.mxu0
    %v4775 = vadd.f32 %v4752, %v4774
    %v4776 = vpop.f32.mrf.mxu0
    %v4777 = vadd.f32 %v4754, %v4776
    %4778 = vmatmul.bf16.gmra.mxu0 %v4297
    %v4779 = vpop.f32.mrf.mxu0
    %v4780 = vadd.f32 %v4757, %v4779
    %v4781 = vpop.f32.mrf.mxu0
    %4782 = vdwg.mxu0
    %4783 = vmatpush.bf16.msra.mxu0 %v4526
    %4784 = vmatpush.bf16.msra.mxu0 %v4522
    %4785 = vmatpush.bf16.msra.mxu0 %v4518
    %4786 = vmatpush.bf16.msra.mxu0 %v4514
    %4787 = vmatpush.bf16.msra.mxu0 %v4510
    %4788 = vmatpush.bf16.msra.mxu0 %v4506
    %4789 = vmatpush.bf16.msra.mxu0 %v4502
    %4790 = vmatpush.bf16.msra.mxu0 %v4498
    %4791 = vmatmul.bf16.gmra.mxu0 %v4289
    %v4792 = vpop.f32.mrf.mxu0
    %v4793 = vadd.f32 %v4641, %v4792
    %v4794 = vpop.f32.mrf.mxu0
    %v4795 = vadd.f32 %v4645, %v4794
    %4796 = vmatmul.bf16.gmra.mxu0 %v4291
    %v4797 = vpop.f32.mrf.mxu0
    %v4798 = vadd.f32 %v4657, %v4797
    %v4799 = vpop.f32.mrf.mxu0
    %v4800 = vadd.f32 %v4661, %v4799
    %4801 = vmatmul.bf16.gmra.mxu0 %v4296
    %v4802 = vpop.f32.mrf.mxu0
    %v4803 = vadd.f32 %v4669, %v4802
    %v4804 = vpop.f32.mrf.mxu0
    %4805 = vdwg.mxu0
    %4806 = vmatpush.bf16.msra.mxu0 %v4558
    %4807 = vmatpush.bf16.msra.mxu0 %v4554
    %4808 = vmatpush.bf16.msra.mxu0 %v4550
    %4809 = vmatpush.bf16.msra.mxu0 %v4546
    %4810 = vmatpush.bf16.msra.mxu0 %v4542
    %4811 = vmatpush.bf16.msra.mxu0 %v4538
    %4812 = vmatpush.bf16.msra.mxu0 %v4534
    %4813 = vmatpush.bf16.msra.mxu0 %v4530
    %4814 = vmatmul.bf16.gmra.mxu0 %v4290
    %v4815 = vpop.f32.mrf.mxu0
    %v4816 = vadd.f32 %v4793, %v4815
    %v4817 = vpop.f32.mrf.mxu0
    %v4818 = vadd.f32 %v4795, %v4817
    %4819 = vmatmul.bf16.gmra.mxu0 %v4292
    %v4820 = vpop.f32.mrf.mxu0
    %v4821 = vadd.f32 %v4798, %v4820
    %v4822 = vpop.f32.mrf.mxu0
    %v4823 = vadd.f32 %v4800, %v4822
    %4824 = vmatmul.bf16.gmra.mxu0 %v4297
    %v4825 = vpop.f32.mrf.mxu0
    %v4826 = vadd.f32 %v4803, %v4825
    %v4827 = vpop.f32.mrf.mxu0
    %4828 = vdwg.mxu0
    %4829 = vmatpush.bf16.msra.mxu0 %v4527
    %4830 = vmatpush.bf16.msra.mxu0 %v4523
    %4831 = vmatpush.bf16.msra.mxu0 %v4519
    %4832 = vmatpush.bf16.msra.mxu0 %v4515
    %4833 = vmatpush.bf16.msra.mxu0 %v4511
    %4834 = vmatpush.bf16.msra.mxu0 %v4507
    %4835 = vmatpush.bf16.msra.mxu0 %v4503
    %4836 = vmatpush.bf16.msra.mxu0 %v4499
    %4837 = vmatmul.bf16.gmra.mxu0 %v4289
    %v4838 = vpop.f32.mrf.mxu0
    %v4839 = vadd.f32 %v4642, %v4838
    %v4840 = vpop.f32.mrf.mxu0
    %v4841 = vadd.f32 %v4646, %v4840
    %4842 = vmatmul.bf16.gmra.mxu0 %v4291
    %v4843 = vpop.f32.mrf.mxu0
    %v4844 = vadd.f32 %v4658, %v4843
    %v4845 = vpop.f32.mrf.mxu0
    %v4846 = vadd.f32 %v4662, %v4845
    %4847 = vmatmul.bf16.gmra.mxu0 %v4296
    %v4848 = vpop.f32.mrf.mxu0
    %v4849 = vadd.f32 %v4670, %v4848
    %v4850 = vpop.f32.mrf.mxu0
    %4851 = vdwg.mxu0
    %4852 = vmatpush.bf16.msra.mxu0 %v4559
    %4853 = vmatpush.bf16.msra.mxu0 %v4555
    %4854 = vmatpush.bf16.msra.mxu0 %v4551
    %4855 = vmatpush.bf16.msra.mxu0 %v4547
    %4856 = vmatpush.bf16.msra.mxu0 %v4543
    %4857 = vmatpush.bf16.msra.mxu0 %v4539
    %4858 = vmatpush.bf16.msra.mxu0 %v4535
    %4859 = vmatpush.bf16.msra.mxu0 %v4531
    %4860 = vmatmul.bf16.gmra.mxu0 %v4290
    %v4861 = vpop.f32.mrf.mxu0
    %v4862 = vadd.f32 %v4839, %v4861
    %v4863 = vpop.f32.mrf.mxu0
    %v4864 = vadd.f32 %v4841, %v4863
    %4865 = vmatmul.bf16.gmra.mxu0 %v4292
    %v4866 = vpop.f32.mrf.mxu0
    %v4867 = vadd.f32 %v4844, %v4866
    %v4868 = vpop.f32.mrf.mxu0
    %v4869 = vadd.f32 %v4846, %v4868
    %4870 = vmatmul.bf16.gmra.mxu0 %v4297
    %v4871 = vpop.f32.mrf.mxu0
    %v4872 = vadd.f32 %v4849, %v4871
    %v4873 = vpop.f32.mrf.mxu0
    %4874 = vdwg.mxu0
    %v4895 = vrot.slane %v4770, 4
    %v4896 = vrot.slane %v4862, 4
    %v4897 = vrot.slane %v4772, 4
    %v4898 = vrot.slane %v4864, 4
    %v4899 = vrot.slane %v4775, 4
    %v4900 = vrot.slane %v4867, 4
    %v4901 = vrot.slane %v4777, 4
    %v4902 = vrot.slane %v4869, 4
    %v4903 = vrot.slane %v4780, 4
    %v4904 = vrot.slane %v4872, 4
    %v4905 = vsel %vm275, %v4724, %v4895
    %v4906 = vsel %vm275, %v4816, %v4896
    %v4907 = vsel %vm275, %v4895, %v4724
    %v4908 = vrot.slane %v4907, 4
    %v4909 = vsel %vm275, %v4896, %v4816
    %v4910 = vrot.slane %v4909, 4
    %v4911 = vsel %vm275, %v4726, %v4897
    %v4912 = vsel %vm275, %v4818, %v4898
    %v4913 = vsel %vm275, %v4897, %v4726
    %v4914 = vrot.slane %v4913, 4
    %v4915 = vsel %vm275, %v4898, %v4818
    %v4916 = vrot.slane %v4915, 4
    %v4917 = vsel %vm275, %v4729, %v4899
    %v4918 = vsel %vm275, %v4821, %v4900
    %v4919 = vsel %vm275, %v4899, %v4729
    %v4920 = vrot.slane %v4919, 4
    %v4921 = vsel %vm275, %v4900, %v4821
    %v4922 = vrot.slane %v4921, 4
    %v4923 = vsel %vm275, %v4731, %v4901
    %v4924 = vsel %vm275, %v4823, %v4902
    %v4925 = vsel %vm275, %v4901, %v4731
    %v4926 = vrot.slane %v4925, 4
    %v4927 = vsel %vm275, %v4902, %v4823
    %v4928 = vrot.slane %v4927, 4
    %v4929 = vsel %vm275, %v4734, %v4903
    %v4930 = vsel %vm275, %v4826, %v4904
    %v4931 = vsel %vm275, %v4903, %v4734
    %v4932 = vrot.slane %v4931, 4
    %v4933 = vsel %vm275, %v4904, %v4826
    %v4934 = vrot.slane %v4933, 4
    %v4955 = vmax.f32 %v4905, 0.0
    %v4956 = vmax.f32 %v4906, 0.0
    %v4957 = vmax.f32 %v4908, 0.0
    %v4958 = vmax.f32 %v4910, 0.0
    %v4959 = vmax.f32 %v4911, 0.0
    %v4960 = vmax.f32 %v4912, 0.0
    %v4961 = vmax.f32 %v4914, 0.0
    %v4962 = vmax.f32 %v4916, 0.0
    %v4963 = vmax.f32 %v4917, 0.0
    %v4964 = vmax.f32 %v4918, 0.0
    %v4965 = vmax.f32 %v4920, 0.0
    %v4966 = vmax.f32 %v4922, 0.0
    %v4967 = vmax.f32 %v4923, 0.0
    %v4968 = vmax.f32 %v4924, 0.0
    %v4969 = vmax.f32 %v4926, 0.0
    %v4970 = vmax.f32 %v4928, 0.0
    %v4971 = vmax.f32 %v4929, 0.0
    %v4972 = vmax.f32 %v4930, 0.0
    %v4973 = vmax.f32 %v4932, 0.0
    %v4974 = vmax.f32 %v4934, 0.0
    %4995 = vst [vmem:[#allocation1] ss:$2 sm:$0xff] %v4955
    %s4996 = scalar_lea.vmem [#allocation1], 1
    %4997 = vst [vmem:[%s4996] ss:$2 sm:$0xff] %v4957
    %s4998 = scalar_lea.vmem [#allocation1], 16
    %4999 = vst [vmem:[%s4998] ss:$2 sm:$0xff] %v4956
    %s5000 = scalar_lea.vmem [#allocation1], 17
    %5001 = vst [vmem:[%s5000] ss:$2 sm:$0xff] %v4958
    %s5002 = scalar_lea.vmem [#allocation1], 32
    %5003 = vst [vmem:[%s5002] ss:$2 sm:$0xff] %v4959
    %s5004 = scalar_lea.vmem [#allocation1], 33
    %5005 = vst [vmem:[%s5004] ss:$2 sm:$0xff] %v4961
    %s5006 = scalar_lea.vmem [#allocation1], 48
    %5007 = vst [vmem:[%s5006] ss:$2 sm:$0xff] %v4960
    %s5008 = scalar_lea.vmem [#allocation1], 49
    %5009 = vst [vmem:[%s5008] ss:$2 sm:$0xff] %v4962
    %v5010 = vld.sshfl [vmem:[#allocation1] sm:$0xff pattern:$0x75316420]
    %v5011 = vld.sshfl [vmem:[#allocation1 + $0x8] sm:$0xff pattern:$0x75316420]
    %v5012 = vld.sshfl [vmem:[#allocation1 + $0x10] sm:$0xff pattern:$0x75316420]
    %v5013 = vld.sshfl [vmem:[#allocation1 + $0x18] sm:$0xff pattern:$0x75316420]
    %v5014 = vld.sshfl [vmem:[#allocation1 + $0x20] sm:$0xff pattern:$0x75316420]
    %v5015 = vld.sshfl [vmem:[#allocation1 + $0x28] sm:$0xff pattern:$0x75316420]
    %v5016 = vld.sshfl [vmem:[#allocation1 + $0x30] sm:$0xff pattern:$0x75316420]
    %v5017 = vld.sshfl [vmem:[#allocation1 + $0x38] sm:$0xff pattern:$0x75316420]
    %5018 = vst [vmem:[#allocation1] ss:$2 sm:$0xff] %v4963
    %5019 = vst [vmem:[%s4998] ss:$2 sm:$0xff] %v4964
    %v5020 = vld.sshfl [vmem:[#allocation1] sm:$0xff pattern:$0x75316420]
    %v5021 = vld.sshfl [vmem:[#allocation1 + $0x8] sm:$0xff pattern:$0x75316420]
    %v5022 = vld.sshfl [vmem:[#allocation1 + $0x10] sm:$0xff pattern:$0x75316420]
    %v5023 = vld.sshfl [vmem:[#allocation1 + $0x18] sm:$0xff pattern:$0x75316420]
    %5024 = vst [vmem:[%s5002] ss:$2 sm:$0xff] %v4965
    %5025 = vst [vmem:[%s5004] ss:$2 sm:$0xff] %v4967
    %5026 = vst [vmem:[%s5006] ss:$2 sm:$0xff] %v4966
    %5027 = vst [vmem:[%s5008] ss:$2 sm:$0xff] %v4968
    %v5028 = vld.sshfl [vmem:[#allocation1 + $0x20] sm:$0xff pattern:$0x75316420]
    %v5029 = vld.sshfl [vmem:[#allocation1 + $0x28] sm:$0xff pattern:$0x75316420]
    %v5030 = vld.sshfl [vmem:[#allocation1 + $0x30] sm:$0xff pattern:$0x75316420]
    %v5031 = vld.sshfl [vmem:[#allocation1 + $0x38] sm:$0xff pattern:$0x75316420]
    %5032 = vst [vmem:[#allocation1] ss:$2 sm:$0xff] %v4969
    %5033 = vst [vmem:[%s4996] ss:$2 sm:$0xff] %v4971
    %5034 = vst [vmem:[%s4998] ss:$2 sm:$0xff] %v4970
    %5035 = vst [vmem:[%s5000] ss:$2 sm:$0xff] %v4972
    %5036 = vst [vmem:[%s5002] ss:$2 sm:$0xff] %v4973
    %5037 = vst [vmem:[%s5006] ss:$2 sm:$0xff] %v4974
    %v5038 = vld.sshfl [vmem:[#allocation1] sm:$0xff pattern:$0x75316420]
    %v5039 = vld.sshfl [vmem:[#allocation1 + $0x8] sm:$0xff pattern:$0x75316420]
    %v5040 = vld.sshfl [vmem:[#allocation1 + $0x10] sm:$0xff pattern:$0x75316420]
    %v5041 = vld.sshfl [vmem:[#allocation1 + $0x18] sm:$0xff pattern:$0x75316420]
    %v5042 = vld.sshfl [vmem:[#allocation1 + $0x20] sm:$0xff pattern:$0x75316420]
    %v5043 = vld.sshfl [vmem:[#allocation1 + $0x28] sm:$0xff pattern:$0x75316420]
    %v5044 = vld.sshfl [vmem:[#allocation1 + $0x30] sm:$0xff pattern:$0x75316420]
    %v5045 = vld.sshfl [vmem:[#allocation1 + $0x38] sm:$0xff pattern:$0x75316420]
    %v5070 = vadd.f32 %v5010, %v5014
    %v5071 = vsel %vm275, %v5020, 0.0
    %v5072 = vadd.f32 %v5070, %v5071
    %v5073 = vrot.slane %v5072, 4
    %v5074 = vadd.f32 %v5072, %v5073
    %v5075 = vrot.slane %v5074, 2
    %v5076 = vadd.f32 %v5074, %v5075
    %v5077 = vrot.slane %v5076, 1
    %v5078 = vadd.f32 %v5076, %v5077
    %v5079 = vadd.f32 %v5011, %v5015
    %v5080 = vsel %vm275, %v5021, 0.0
    %v5081 = vadd.f32 %v5079, %v5080
    %v5082 = vrot.slane %v5081, 4
    %v5083 = vadd.f32 %v5081, %v5082
    %v5084 = vrot.slane %v5083, 2
    %v5085 = vadd.f32 %v5083, %v5084
    %v5086 = vrot.slane %v5085, 1
    %v5087 = vadd.f32 %v5085, %v5086
    %v5088 = vadd.f32 %v5012, %v5016
    %v5089 = vsel %vm275, %v5022, 0.0
    %v5090 = vadd.f32 %v5088, %v5089
    %v5091 = vrot.slane %v5090, 4
    %v5092 = vadd.f32 %v5090, %v5091
    %v5093 = vrot.slane %v5092, 2
    %v5094 = vadd.f32 %v5092, %v5093
    %v5095 = vrot.slane %v5094, 1
    %v5096 = vadd.f32 %v5094, %v5095
    %v5097 = vadd.f32 %v5013, %v5017
    %v5098 = vsel %vm275, %v5023, 0.0
    %v5099 = vadd.f32 %v5097, %v5098
    %v5100 = vrot.slane %v5099, 4
    %v5101 = vadd.f32 %v5099, %v5100
    %v5102 = vrot.slane %v5101, 2
    %v5103 = vadd.f32 %v5101, %v5102
    %v5104 = vrot.slane %v5103, 1
    %v5105 = vadd.f32 %v5103, %v5104
    %v5106 = vadd.f32 %v5028, %v5038
    %v5107 = vsel %vm275, %v5042, 0.0
    %v5108 = vadd.f32 %v5106, %v5107
    %v5109 = vrot.slane %v5108, 4
    %v5110 = vadd.f32 %v5108, %v5109
    %v5111 = vrot.slane %v5110, 2
    %v5112 = vadd.f32 %v5110, %v5111
    %v5113 = vrot.slane %v5112, 1
    %v5114 = vadd.f32 %v5112, %v5113
    %v5115 = vadd.f32 %v5029, %v5039
    %v5116 = vsel %vm275, %v5043, 0.0
    %v5117 = vadd.f32 %v5115, %v5116
    %v5118 = vrot.slane %v5117, 4
    %v5119 = vadd.f32 %v5117, %v5118
    %v5120 = vrot.slane %v5119, 2
    %v5121 = vadd.f32 %v5119, %v5120
    %v5122 = vrot.slane %v5121, 1
    %v5123 = vadd.f32 %v5121, %v5122
    %v5124 = vadd.f32 %v5030, %v5040
    %v5125 = vsel %vm275, %v5044, 0.0
    %v5126 = vadd.f32 %v5124, %v5125
    %v5127 = vrot.slane %v5126, 4
    %v5128 = vadd.f32 %v5126, %v5127
    %v5129 = vrot.slane %v5128, 2
    %v5130 = vadd.f32 %v5128, %v5129
    %v5131 = vrot.slane %v5130, 1
    %v5132 = vadd.f32 %v5130, %v5131
    %v5133 = vadd.f32 %v5031, %v5041
    %v5134 = vsel %vm275, %v5045, 0.0
    %v5135 = vadd.f32 %v5133, %v5134
    %v5136 = vrot.slane %v5135, 4
    %v5137 = vadd.f32 %v5135, %v5136
    %v5138 = vrot.slane %v5137, 2
    %v5139 = vadd.f32 %v5137, %v5138
    %v5140 = vrot.slane %v5139, 1
    %v5141 = vadd.f32 %v5139, %v5140
    %v5142 = vrcp.pop 20.0
    %v5143 = vmul.f32 20.0, %v5142
    %v5144 = vsub.f32 1.0, %v5143
    %v5145 = vmul.f32 %v5142, %v5144
    %v5146 = vadd.f32 %v5142, %v5145
    %vm5147 = vweird.f32 %v5142
    %v5148 = vsel %vm5147, %v5142, %v5146
    %v5149 = vmul.f32 %v5078, %v5148
    %v5150 = vmul.f32 %v5087, %v5148
    %v5151 = vmul.f32 %v5096, %v5148
    %v5152 = vmul.f32 %v5105, %v5148
    %v5153 = vmul.f32 %v5114, %v5148
    %v5154 = vmul.f32 %v5123, %v5148
    %v5155 = vmul.f32 %v5132, %v5148
    %v5156 = vmul.f32 %v5141, %v5148
    %v5165 = vrot.slane %v5150, 6
    %v5166 = vrot.slane %v5151, 4
    %v5167 = vrot.slane %v5152, 2
    %v5168 = vrot.slane %v5154, 6
    %v5169 = vrot.slane %v5155, 4
    %v5170 = vrot.slane %v5156, 2
    %v5171 = vsel %vm3299, %v5149, %v5165
    %vm5172 = vcmask 1045508
    %v5173 = vsel %vm5172, %v5166, %v5167
    %v5174 = vsel %vm275, %v5171, %v5173
    %v5175 = vsel %vm3299, %v5153, %v5168
    %v5176 = vsel %vm5172, %v5169, %v5170
    %v5177 = vsel %vm275, %v5175, %v5176
    %vm5178 = vcmask 1044484
    %v5179 = vsel %vm5178, %v5174, %v5174
    %vm5180 = vcmask 1046534
    %v5181 = vsel %vm5180, %v5174, %v5179
    %v5182 = vrot.slane %v5177, 7
    %v5183 = vsel %vm1885, %v5182, %v5181
    %v5184 = vsel %vm1893, %v5182, %v5183
    %vm5185 = vcmask 1045509
    %v5186 = vsel %vm5185, %v5182, %v5184
    %vm5187 = vcmask 1047559
    %v5188 = vsel %vm5187, %v5182, %v5186
    %5190 = vst [vmem:[#allocation13] sm:$0xff] %v5188
    // Predicated region
    $region62: #{tpu_custom_call.1} parent=1 // pred_check
      _
    $region63: #{tpu_custom_call.1} parent=1 // pred_check_branch
      %5192 = sbr.rel (0) target = $region65
    $region64: #{tpu_custom_call.1} parent=1 // pred_region
      %5194 = vsyncadd [#allocation4], 0
      %s5196 = sshll.u32 [#allocation13], 4
      %s5197 = int_to_ptr.vmem [resolvable:$true] %s5196
      %s5198 = sshll.u32 %s9, 4
      %s5199 = int_to_ptr.hbm [resolvable:$true] %s5198
      %5201 = dma.vmem_to_hbm [thread:$0]  %s5197, 128, %s5199, [#allocation4]
    $region65: #{tpu_custom_call.1} parent=1 // pred_fallthru
      _
    // Predicated region
    $region66: #{tpu_custom_call.1} parent=1 // pred_check
      _
    $region67: #{tpu_custom_call.1} parent=1 // pred_check_branch
      %5203 = sbr.rel (0) target = $region69
    $region68: #{tpu_custom_call.1} parent=1 // pred_region
      %5205 = dma.done [#allocation4], 128
    $region69: #{tpu_custom_call.1} parent=1 // pred_fallthru
      _
    %5206 = vsyncpa [#allocation3], 1
    %5207 = vsyncpa [#allocation6], 1
    %5208 = vsyncpa [#allocation9], 1
    %5209 = vsyncpa [#allocation12], 1
    %5210 = vsyncpa [#allocation4], 1

</llo_original>
